<compile_context>
chip_gen: v5e
topology: v5e:2x2
jax: 0.10.0
libtpu: 0.0.40
codegen_flags: <defaults>
</compile_context>

<pallas_src>
import functools

import jax
import jax.numpy as jnp
from jax import lax
from jax.experimental import pallas as pl
from jax.experimental.pallas import tpu as pltpu


def _pointnet_kernel(x_ref,
                     w1_ref, b1_ref, w2_ref, b2_ref,
                     w3_ref, b3_ref, w4_ref, b4_ref,
                     w5_ref,
                     pf_ref, gf_ref,
                     *, n_valid, tn, tiles_per_half, need_mask):
    t_idx = pl.program_id(2)

    # Global-feature partial-max accumulator is resident across the point-tile
    # ("arbitrary", innermost) axis.
    @pl.when(t_idx == 0)
    def _():
        gf_ref[...] = jnp.full(gf_ref.shape, -jnp.inf, dtype=gf_ref.dtype)

    x = x_ref[0]            # (3, tn) float32, lane-dense
    w1 = w1_ref[...]        # (64, 3) float32

    # mlp1 layer 1: conv1d(3,64,1)+BN+ReLU.  K=3 is too small for the MXU ->
    # three VPU broadcast FMAs (outer-product form), kept in f32.
    h = (w1[:, 0:1] * x[0:1, :]
         + w1[:, 1:2] * x[1:2, :]
         + w1[:, 2:3] * x[2:3, :]
         + b1_ref[...])
    h = jnp.maximum(h, 0.0)

    # mlp1 layer 2: conv1d(64,64,1)+BN+ReLU  (bf16 MXU inputs, f32 accumulation)
    h = jnp.maximum(
        jnp.dot(w2_ref[...], h.astype(jnp.bfloat16),
                preferred_element_type=jnp.float32) + b2_ref[...], 0.0)

    # Point features: already channel-major (64, tn) -> direct lane-dense store, no transpose.
    pf_ref[0] = h.astype(pf_ref.dtype)

    # mlp2: 64->64, 64->128 with bias+ReLU in-kernel.
    h = jnp.maximum(
        jnp.dot(w3_ref[...], h.astype(jnp.bfloat16),
                preferred_element_type=jnp.float32) + b3_ref[...], 0.0)
    h = jnp.maximum(
        jnp.dot(w4_ref[...], h.astype(jnp.bfloat16),
                preferred_element_type=jnp.float32) + b4_ref[...], 0.0)

    # mlp2 layer 5 (128->1024): raw matmul only.  Bias add + ReLU are hoisted to the
    # wrapper finalize (they commute with the cross-point max), saving ~2*tn*1024
    # VPU elem-ops per tile.
    h5 = jnp.dot(w5_ref[...], h.astype(jnp.bfloat16),
                 preferred_element_type=jnp.float32)        # (1024, tn) f32

    def fold(v):
        # Fold the tn lanes down to 128 with pure elementwise vreg maxes (VPU);
        # the final within-vreg lane reduce is deferred to the wrapper.
        m = v[:, 0:128]
        for g in range(1, tn // 128):
            m = jnp.maximum(m, v[:, g * 128:(g + 1) * 128])
        return m

    if need_mask:
        tile_start = (pl.program_id(1) * tiles_per_half + t_idx) * tn

        # Interior tile: unmasked fast path (no (1024, tn) select).
        @pl.when(tile_start + tn <= n_valid)
        def _():
            gf_ref[0, 0] = jnp.maximum(gf_ref[0, 0], fold(h5))

        # Boundary / fully-padded tile: mask padded point columns to -inf BEFORE the max
        # (the accumulator was initialised to -inf, so padded tiles never leak).
        @pl.when(tile_start + tn > n_valid)
        def _():
            col = tile_start + lax.broadcasted_iota(jnp.int32, (1, tn), 1)
            masked = jnp.where(col < n_valid, h5, -jnp.inf)
            gf_ref[0, 0] = jnp.maximum(gf_ref[0, 0], fold(masked))
    else:
        gf_ref[0, 0] = jnp.maximum(gf_ref[0, 0], fold(h5))


def _fold_bn(w, b, gamma, beta, mean, var, eps=1e-5):
    """Fold inference-mode BatchNorm1d into a kernel-size-1 conv / linear.

    w: (Cin, Cout) so that out = x @ w + b ; BN params are per Cout.
    """
    inv_std = gamma / jnp.sqrt(var + eps)
    w_eff = w * inv_std[None, :]
    b_eff = (b - mean) * inv_std + beta
    return w_eff.astype(jnp.float32), b_eff.astype(jnp.float32)


def init_params(key):
    """Deterministic synthetic parameters matching the PyTorch module's shapes."""
    dims = [(3, 64), (64, 64), (64, 64), (64, 128), (128, 1024)]
    params = []
    keys = jax.random.split(key, len(dims))
    for k, (cin, cout) in zip(keys, dims):
        kw, kb, kg, kbt, km, kv = jax.random.split(k, 6)
        # conv weight (Cout, Cin, 1) in torch -> stored transposed as (Cin, Cout)
        w = jax.random.normal(kw, (cin, cout), jnp.float32) * 0.1
        b = jax.random.normal(kb, (cout,), jnp.float32) * 0.05
        # BatchNorm1d(cout) parameters (inference form)
        gamma = 1.0 + 0.1 * jax.random.normal(kg, (cout,), jnp.float32)
        beta = 0.1 * jax.random.normal(kbt, (cout,), jnp.float32)
        mean = 0.1 * jax.random.normal(km, (cout,), jnp.float32)
        var = 1.0 + 0.2 * jax.random.uniform(kv, (cout,), jnp.float32)
        params.append(_fold_bn(w, b, gamma, beta, mean, var))
    return params


def _round_up(a, m):
    return (a + m - 1) // m * m


def _plan_tiling(n, tn):
    """Return (tn_eff, nh, tiles_per_half, n_pad).

    tn_eff is always a multiple of 128 (lane-dense stores on both outputs).
    When there are >= 2 tiles the point axis is split into 2 halves so both v7x
    TensorCores are used even at batch=1; an odd tile count is rounded up with one
    extra fully-padded tile (handled by the in-kernel mask) instead of dropping to 1 half.
    """
    n128 = _round_up(n, 128)
    tn_eff = max(128, (tn // 128) * 128)
    if tn_eff >= n128:
        return n128, 1, 1, n128
    num_tiles = -(-n // tn_eff)                 # ceil, >= 2 here
    tiles_per_half = -(-num_tiles // 2)
    nh = 2
    n_pad = nh * tiles_per_half * tn_eff
    return tn_eff, nh, tiles_per_half, n_pad


@functools.partial(jax.jit, static_argnames=("tn",))
def pointnet_feature(x, params, tn=1024):
    """x: (B, N, 3) float32.  Returns dict matching the PyTorch module (default flags)."""
    B, N, C = x.shape
    assert C == 3

    tn_eff, nh, tiles_per_half, n_pad = _plan_tiling(N, tn)
    need_mask = (n_pad != N)

    # Channel-major layout (matches torch's x.transpose(2, 1)); pad points to the tile grid.
    x = x.astype(jnp.float32).transpose(0, 2, 1)          # (B, 3, N)
    if n_pad != N:
        x = jnp.pad(x, ((0, 0), (0, 0), (0, n_pad - N)))

    (w1, b1), (w2, b2), (w3, b3), (w4, b4), (w5, b5) = params

    def colbias(b):
        return b.astype(jnp.float32).reshape(-1, 1)        # (C, 1): lane-broadcast in kernel

    weights = [
        w1.T.astype(jnp.float32),  colbias(b1),   # (64, 3)    VPU FMA layer, kept f32
        w2.T.astype(jnp.bfloat16), colbias(b2),   # (64, 64)
        w3.T.astype(jnp.bfloat16), colbias(b3),   # (64, 64)
        w4.T.astype(jnp.bfloat16), colbias(b4),   # (128, 64)
        w5.T.astype(jnp.bfloat16),                # (1024, 128); b5 applied in the finalize
    ]

    def rep_spec(arr):                              # grid-invariant 2-D weight/bias blocks
        return pl.BlockSpec(arr.shape, lambda b, h, t: (0, 0))

    grid = (B, nh, tiles_per_half)

    kernel = functools.partial(
        _pointnet_kernel,
        n_valid=N, tn=tn_eff, tiles_per_half=tiles_per_half, need_mask=need_mask)

    flops = 2 * B * n_pad * (3 * 64 + 64 * 64 + 64 * 64 + 64 * 128 + 128 * 1024)
    bytes_accessed = (x.size * 4 + B * 64 * n_pad * 4 + B * nh * 1024 * 128 * 4
                      + sum(int(w.size) * w.dtype.itemsize for w in weights))
    cost = pl.CostEstimate(flops=flops, transcendentals=0,
                           bytes_accessed=bytes_accessed)

    cp_kwargs = dict(dimension_semantics=("parallel", "parallel", "arbitrary"))
    if tn_eff > 1024:
        # Bigger tiles need more scoped VMEM than the v5e default (16 MiB).
        cp_kwargs["vmem_limit_bytes"] = 32 * 1024 * 1024

    point_feat, gf_partial = pl.pallas_call(
        kernel,
        out_shape=(
            jax.ShapeDtypeStruct((B, 64, n_pad), jnp.float32),        # (B, 64, N_pad)
            jax.ShapeDtypeStruct((B, nh, 1024, 128), jnp.float32),    # per-half lane partials
        ),
        grid_spec=pltpu.PrefetchScalarGridSpec(
            num_scalar_prefetch=0,
            grid=grid,
            in_specs=[pl.BlockSpec((1, 3, tn_eff),
                                   lambda b, h, t: (b, 0, h * tiles_per_half + t))]
                     + [rep_spec(w) for w in weights],
            out_specs=(
                pl.BlockSpec((1, 64, tn_eff),
                             lambda b, h, t: (b, 0, h * tiles_per_half + t)),
                pl.BlockSpec((1, 1, 1024, 128), lambda b, h, t: (b, h, 0, 0)),
            ),
        ),
        compiler_params=pltpu.CompilerParams(**cp_kwargs),
        cost_estimate=cost,
    )(x, *weights)

    # Finalize (hoisted from the kernel): combine per-half / per-lane partial maxes,
    # then apply the layer-5 bias + ReLU once per (batch, channel).
    gf_raw = jnp.max(gf_partial, axis=(1, 3))                       # (B, 1024)
    global_feat = jnp.maximum(gf_raw + b5.astype(jnp.float32)[None, :], 0.0)

    if n_pad != N:
        point_feat = point_feat[:, :, :N]

    # TODO(synk): SpatialTransformer (T-Net) branches are not instantiated since the
    # module defaults are input_transform=False / feature_transform=False.
    return {
        "point_feature": point_feat,     # (B, 64, N), PyTorch layout
        "global_feature": global_feat,   # (B, 1024)
        "input_transform": None,
        "feature_transform": None,
    }


def _reference(x, params):
    """Pure-JAX f32 reference of the fused forward pass (BN already folded)."""
    h = x.astype(jnp.float32)
    pf = None
    for i, (w, b) in enumerate(params):
        h = jnp.maximum(jnp.einsum("bnc,cd->bnd", h, w) + b, 0.0)
        if i == 1:
            pf = h
    gf = jnp.max(h, axis=1)
    return jnp.transpose(pf, (0, 2, 1)), gf


if __name__ == "__main__":
    key = jax.random.PRNGKey(0)
    pkey, xkey1, xkey2 = jax.random.split(key, 3)

    params = init_params(pkey)

    # Small config consistent with the module: batch=2, num_points=16, 3 coords per point.
    B, N = 2, 16
    x_small = jax.random.normal(xkey1, (B, N, 3), jnp.float32)
    out = pointnet_feature(x_small, params)
    jax.block_until_ready(out["global_feature"])
    jax.block_until_ready(out["point_feature"])

    assert out["point_feature"].shape == (B, 64, N)
    assert out["global_feature"].shape == (B, 1024)
    assert out["input_transform"] is None
    assert out["feature_transform"] is None

    pf_ref, gf_ref = _reference(x_small, params)
    tol = 5e-2 * (1.0 + float(jnp.max(jnp.abs(gf_ref))))
    assert float(jnp.max(jnp.abs(out["point_feature"] - pf_ref))) < tol
    assert float(jnp.max(jnp.abs(out["global_feature"] - gf_ref))) < tol

    # Second config: odd tile count (ceil(600/128)=5 -> 2 halves of 3 tiles, one fully
    # padded), boundary masking, multi-tile pipelining and the 2-way point split.
    B2, N2 = 2, 600
    x_big = jax.random.normal(xkey2, (B2, N2, 3), jnp.float32)
    out2 = pointnet_feature(x_big, params, tn=128)
    jax.block_until_ready(out2["global_feature"])
    jax.block_until_ready(out2["point_feature"])

    pf_ref2, gf_ref2 = _reference(x_big, params)
    tol2 = 5e-2 * (1.0 + float(jnp.max(jnp.abs(gf_ref2))))
    assert out2["point_feature"].shape == (B2, 64, N2)
    assert out2["global_feature"].shape == (B2, 1024)
    assert float(jnp.max(jnp.abs(out2["point_feature"] - pf_ref2))) < tol2
    assert float(jnp.max(jnp.abs(out2["global_feature"] - gf_ref2))) < tol2

    print("KERNEL_OK")
</pallas_src>

<mosaic_0001>
module attributes {stable_mosaic.version = 11 : i64} {
  func.func @_pointnet_kernel(%arg0: i32, %arg1: i32, %arg2: i32, %arg3: memref<1x3x128xf32, #tpu.memory_space<vmem>>, %arg4: memref<64x3xf32, #tpu.memory_space<vmem>>, %arg5: memref<64x1xf32, #tpu.memory_space<vmem>>, %arg6: memref<64x64xbf16, #tpu.memory_space<vmem>>, %arg7: memref<64x1xf32, #tpu.memory_space<vmem>>, %arg8: memref<64x64xbf16, #tpu.memory_space<vmem>>, %arg9: memref<64x1xf32, #tpu.memory_space<vmem>>, %arg10: memref<128x64xbf16, #tpu.memory_space<vmem>>, %arg11: memref<128x1xf32, #tpu.memory_space<vmem>>, %arg12: memref<1024x128xbf16, #tpu.memory_space<vmem>>, %arg13: memref<1x64x128xf32, #tpu.memory_space<vmem>>, %arg14: memref<1x1x1024x128xf32, #tpu.memory_space<vmem>>) attributes {dimension_semantics = [#tpu.dimension_semantics<parallel>, #tpu.dimension_semantics<parallel>, #tpu.dimension_semantics<arbitrary>], iteration_bounds = array<i64: 2, 1, 1>, scalar_prefetch = 0 : i64, scratch_operands = 0 : i64, tpu.core_type = #tpu.core_type<tc>, window_params = [{transform_indices = @transform_0, window_bounds = array<i64: 1, 3, 128>}, {pipeline_mode = #tpu.pipeline_mode<synchronous>, transform_indices = @transform_1, window_bounds = array<i64: 64, 3>}, {pipeline_mode = #tpu.pipeline_mode<synchronous>, transform_indices = @transform_2, window_bounds = array<i64: 64, 1>}, {pipeline_mode = #tpu.pipeline_mode<synchronous>, transform_indices = @transform_3, window_bounds = array<i64: 64, 64>}, {pipeline_mode = #tpu.pipeline_mode<synchronous>, transform_indices = @transform_4, window_bounds = array<i64: 64, 1>}, {pipeline_mode = #tpu.pipeline_mode<synchronous>, transform_indices = @transform_5, window_bounds = array<i64: 64, 64>}, {pipeline_mode = #tpu.pipeline_mode<synchronous>, transform_indices = @transform_6, window_bounds = array<i64: 64, 1>}, {pipeline_mode = #tpu.pipeline_mode<synchronous>, transform_indices = @transform_7, window_bounds = array<i64: 128, 64>}, {pipeline_mode = #tpu.pipeline_mode<synchronous>, transform_indices = @transform_8, window_bounds = array<i64: 128, 1>}, {pipeline_mode = #tpu.pipeline_mode<synchronous>, transform_indices = @transform_9, window_bounds = array<i64: 1024, 128>}, {transform_indices = @transform_10, window_bounds = array<i64: 1, 64, 128>}, {transform_indices = @transform_11, window_bounds = array<i64: 1, 1, 1024, 128>}]} {
    %c0_i32 = arith.constant 0 : i32
    %0 = arith.cmpi eq, %arg2, %c0_i32 : i32
    %1 = arith.extui %0 : i1 to i32
    %c0_i32_0 = arith.constant 0 : i32
    %2 = arith.cmpi ne, %1, %c0_i32_0 : i32
    scf.if %2 {
      %cst_36 = arith.constant 0xFF800000 : f32
      %69 = vector.broadcast %cst_36 : f32 to vector<1x1x1024x128xf32>
      %c0_37 = arith.constant 0 : index
      %c0_38 = arith.constant 0 : index
      %c0_39 = arith.constant 0 : index
      %c0_40 = arith.constant 0 : index
      %70 = vector.load %arg14[%c0_37, %c0_38, %c0_39, %c0_40] : memref<1x1x1024x128xf32, #tpu.memory_space<vmem>>, vector<1x1x1024x128xf32>
      tpu.vector_store %arg14[%c0_37, %c0_38, %c0_39, %c0_40], %69 {strides = array<i32>} : memref<1x1x1024x128xf32, #tpu.memory_space<vmem>>, vector<1x1x1024x128xf32>,
    } else {
    }
    %c0 = arith.constant 0 : index
    %c0_1 = arith.constant 0 : index
    %c0_2 = arith.constant 0 : index
    %3 = vector.load %arg3[%c0, %c0_1, %c0_2] : memref<1x3x128xf32, #tpu.memory_space<vmem>>, vector<1x3x128xf32>
    %4 = vector.shape_cast %3 : vector<1x3x128xf32> to vector<3x128xf32>
    %c0_3 = arith.constant 0 : index
    %c0_4 = arith.constant 0 : index
    %5 = vector.load %arg4[%c0_3, %c0_4] : memref<64x3xf32, #tpu.memory_space<vmem>>, vector<64x3xf32>
    %6 = vector.extract_strided_slice %5 {offsets = [0, 0], sizes = [64, 1], strides = [1, 1]} : vector<64x3xf32> to vector<64x1xf32>
    %7 = vector.extract_strided_slice %4 {offsets = [0, 0], sizes = [1, 128], strides = [1, 1]} : vector<3x128xf32> to vector<1x128xf32>
    %8 = vector.broadcast %6 : vector<64x1xf32> to vector<64x128xf32>
    %9 = vector.broadcast %7 : vector<1x128xf32> to vector<64x128xf32>
    %10 = arith.mulf %8, %9 : vector<64x128xf32>
    %11 = vector.extract_strided_slice %5 {offsets = [0, 1], sizes = [64, 1], strides = [1, 1]} : vector<64x3xf32> to vector<64x1xf32>
    %12 = vector.extract_strided_slice %4 {offsets = [1, 0], sizes = [1, 128], strides = [1, 1]} : vector<3x128xf32> to vector<1x128xf32>
    %13 = vector.broadcast %11 : vector<64x1xf32> to vector<64x128xf32>
    %14 = vector.broadcast %12 : vector<1x128xf32> to vector<64x128xf32>
    %15 = arith.mulf %13, %14 : vector<64x128xf32>
    %16 = arith.addf %10, %15 : vector<64x128xf32>
    %17 = vector.extract_strided_slice %5 {offsets = [0, 2], sizes = [64, 1], strides = [1, 1]} : vector<64x3xf32> to vector<64x1xf32>
    %18 = vector.extract_strided_slice %4 {offsets = [2, 0], sizes = [1, 128], strides = [1, 1]} : vector<3x128xf32> to vector<1x128xf32>
    %19 = vector.broadcast %17 : vector<64x1xf32> to vector<64x128xf32>
    %20 = vector.broadcast %18 : vector<1x128xf32> to vector<64x128xf32>
    %21 = arith.mulf %19, %20 : vector<64x128xf32>
    %22 = arith.addf %16, %21 : vector<64x128xf32>
    %c0_5 = arith.constant 0 : index
    %c0_6 = arith.constant 0 : index
    %23 = vector.load %arg5[%c0_5, %c0_6] : memref<64x1xf32, #tpu.memory_space<vmem>>, vector<64x1xf32>
    %24 = vector.broadcast %23 : vector<64x1xf32> to vector<64x128xf32>
    %25 = arith.addf %22, %24 : vector<64x128xf32>
    %cst = arith.constant 0.000000e+00 : f32
    %26 = vector.broadcast %cst : f32 to vector<64x128xf32>
    %27 = arith.maximumf %25, %26 : vector<64x128xf32>
    %c0_7 = arith.constant 0 : index
    %c0_8 = arith.constant 0 : index
    %28 = vector.load %arg6[%c0_7, %c0_8] : memref<64x64xbf16, #tpu.memory_space<vmem>>, vector<64x64xbf16>
    %29 = arith.truncf %27 : vector<64x128xf32> to vector<64x128xbf16>
    %cst_9 = arith.constant dense<0.000000e+00> : vector<64x128xf32>
    %30 = tpu.matmul %28, %29, %cst_9 {dimension_numbers = #tpu.dot_dimension_numbers<[1], [0], [0], [1], [0, 0, 1, 1], [], []>} : vector<64x64xbf16>, vector<64x128xbf16>, vector<64x128xf32> -> vector<64x128xf32>
    %c0_10 = arith.constant 0 : index
    %c0_11 = arith.constant 0 : index
    %31 = vector.load %arg7[%c0_10, %c0_11] : memref<64x1xf32, #tpu.memory_space<vmem>>, vector<64x1xf32>
    %32 = vector.broadcast %31 : vector<64x1xf32> to vector<64x128xf32>
    %33 = arith.addf %30, %32 : vector<64x128xf32>
    %cst_12 = arith.constant 0.000000e+00 : f32
    %34 = vector.broadcast %cst_12 : f32 to vector<64x128xf32>
    %35 = arith.maximumf %33, %34 : vector<64x128xf32>
    %c0_13 = arith.constant 0 : index
    %c0_14 = arith.constant 0 : index
    %c0_15 = arith.constant 0 : index
    %36 = vector.load %arg13[%c0_13, %c0_14, %c0_15] : memref<1x64x128xf32, #tpu.memory_space<vmem>>, vector<1x64x128xf32>
    %37 = vector.shape_cast %36 : vector<1x64x128xf32> to vector<64x128xf32>
    %38 = vector.shape_cast %35 : vector<64x128xf32> to vector<1x64x128xf32>
    tpu.vector_store %arg13[%c0_13, %c0_14, %c0_15], %38 {strides = array<i32>} : memref<1x64x128xf32, #tpu.memory_space<vmem>>, vector<1x64x128xf32>,
    %c0_16 = arith.constant 0 : index
    %c0_17 = arith.constant 0 : index
    %39 = vector.load %arg8[%c0_16, %c0_17] : memref<64x64xbf16, #tpu.memory_space<vmem>>, vector<64x64xbf16>
    %40 = arith.truncf %35 : vector<64x128xf32> to vector<64x128xbf16>
    %cst_18 = arith.constant dense<0.000000e+00> : vector<64x128xf32>
    %41 = tpu.matmul %39, %40, %cst_18 {dimension_numbers = #tpu.dot_dimension_numbers<[1], [0], [0], [1], [0, 0, 1, 1], [], []>} : vector<64x64xbf16>, vector<64x128xbf16>, vector<64x128xf32> -> vector<64x128xf32>
    %c0_19 = arith.constant 0 : index
    %c0_20 = arith.constant 0 : index
    %42 = vector.load %arg9[%c0_19, %c0_20] : memref<64x1xf32, #tpu.memory_space<vmem>>, vector<64x1xf32>
    %43 = vector.broadcast %42 : vector<64x1xf32> to vector<64x128xf32>
    %44 = arith.addf %41, %43 : vector<64x128xf32>
    %cst_21 = arith.constant 0.000000e+00 : f32
    %45 = vector.broadcast %cst_21 : f32 to vector<64x128xf32>
    %46 = arith.maximumf %44, %45 : vector<64x128xf32>
    %c0_22 = arith.constant 0 : index
    %c0_23 = arith.constant 0 : index
    %47 = vector.load %arg10[%c0_22, %c0_23] : memref<128x64xbf16, #tpu.memory_space<vmem>>, vector<128x64xbf16>
    %48 = arith.truncf %46 : vector<64x128xf32> to vector<64x128xbf16>
    %cst_24 = arith.constant dense<0.000000e+00> : vector<128x128xf32>
    %49 = tpu.matmul %47, %48, %cst_24 {dimension_numbers = #tpu.dot_dimension_numbers<[1], [0], [0], [1], [0, 0, 1, 1], [], []>} : vector<128x64xbf16>, vector<64x128xbf16>, vector<128x128xf32> -> vector<128x128xf32>
    %c0_25 = arith.constant 0 : index
    %c0_26 = arith.constant 0 : index
    %50 = vector.load %arg11[%c0_25, %c0_26] : memref<128x1xf32, #tpu.memory_space<vmem>>, vector<128x1xf32>
    %51 = vector.broadcast %50 : vector<128x1xf32> to vector<128x128xf32>
    %52 = arith.addf %49, %51 : vector<128x128xf32>
    %cst_27 = arith.constant 0.000000e+00 : f32
    %53 = vector.broadcast %cst_27 : f32 to vector<128x128xf32>
    %54 = arith.maximumf %52, %53 : vector<128x128xf32>
    %c0_28 = arith.constant 0 : index
    %c0_29 = arith.constant 0 : index
    %55 = vector.load %arg12[%c0_28, %c0_29] : memref<1024x128xbf16, #tpu.memory_space<vmem>>, vector<1024x128xbf16>
    %56 = arith.truncf %54 : vector<128x128xf32> to vector<128x128xbf16>
    %cst_30 = arith.constant dense<0.000000e+00> : vector<1024x128xf32>
    %57 = tpu.matmul %55, %56, %cst_30 {dimension_numbers = #tpu.dot_dimension_numbers<[1], [0], [0], [1], [0, 0, 1, 1], [], []>} : vector<1024x128xbf16>, vector<128x128xbf16>, vector<1024x128xf32> -> vector<1024x128xf32>
    %c1_i32 = arith.constant 1 : i32
    %58 = arith.muli %arg1, %c1_i32 : i32
    %59 = arith.addi %58, %arg2 : i32
    %c128_i32 = arith.constant 128 : i32
    %60 = arith.muli %59, %c128_i32 : i32
    %c128_i32_31 = arith.constant 128 : i32
    %61 = arith.addi %60, %c128_i32_31 : i32
    %c16_i32 = arith.constant 16 : i32
    %62 = arith.cmpi sle, %61, %c16_i32 : i32
    %63 = arith.extui %62 : i1 to i32
    %c0_i32_32 = arith.constant 0 : i32
    %64 = arith.cmpi ne, %63, %c0_i32_32 : i32
    scf.if %64 {
      %c0_36 = arith.constant 0 : index
      %c0_37 = arith.constant 0 : index
      %c0_38 = arith.constant 0 : index
      %c0_39 = arith.constant 0 : index
      %69 = vector.load %arg14[%c0_36, %c0_37, %c0_38, %c0_39] : memref<1x1x1024x128xf32, #tpu.memory_space<vmem>>, vector<1x1x1024x128xf32>
      %70 = vector.shape_cast %69 : vector<1x1x1024x128xf32> to vector<1024x128xf32>
      %71 = arith.maximumf %70, %57 : vector<1024x128xf32>
      %c0_40 = arith.constant 0 : index
      %c0_41 = arith.constant 0 : index
      %c0_42 = arith.constant 0 : index
      %c0_43 = arith.constant 0 : index
      %72 = vector.load %arg14[%c0_40, %c0_41, %c0_42, %c0_43] : memref<1x1x1024x128xf32, #tpu.memory_space<vmem>>, vector<1x1x1024x128xf32>
      %73 = vector.shape_cast %72 : vector<1x1x1024x128xf32> to vector<1024x128xf32>
      %74 = vector.shape_cast %71 : vector<1024x128xf32> to vector<1x1x1024x128xf32>
      tpu.vector_store %arg14[%c0_40, %c0_41, %c0_42, %c0_43], %74 {strides = array<i32>} : memref<1x1x1024x128xf32, #tpu.memory_space<vmem>>, vector<1x1x1024x128xf32>,
    } else {
    }
    %c128_i32_33 = arith.constant 128 : i32
    %65 = arith.addi %60, %c128_i32_33 : i32
    %c16_i32_34 = arith.constant 16 : i32
    %66 = arith.cmpi sgt, %65, %c16_i32_34 : i32
    %67 = arith.extui %66 : i1 to i32
    %c0_i32_35 = arith.constant 0 : i32
    %68 = arith.cmpi ne, %67, %c0_i32_35 : i32
    scf.if %68 {
      %69 = tpu.iota {dimensions = array<i32: 1>} : vector<1x128xi32>
      %70 = vector.broadcast %60 : i32 to vector<1x128xi32>
      %71 = arith.addi %70, %69 : vector<1x128xi32>
      %c16_i32_36 = arith.constant 16 : i32
      %72 = vector.broadcast %c16_i32_36 : i32 to vector<1x128xi32>
      %73 = arith.cmpi slt, %71, %72 : vector<1x128xi32>
      %cst_37 = arith.constant 0xFF800000 : f32
      %74 = vector.shape_cast %73 : vector<1x128xi1> to vector<1x128xi1>
      %75 = vector.broadcast %74 : vector<1x128xi1> to vector<1024x128xi1>
      %76 = vector.broadcast %cst_37 : f32 to vector<1024x128xf32>
      %77 = arith.select %75, %57, %76 : vector<1024x128xi1>, vector<1024x128xf32>
      %c0_38 = arith.constant 0 : index
      %c0_39 = arith.constant 0 : index
      %c0_40 = arith.constant 0 : index
      %c0_41 = arith.constant 0 : index
      %78 = vector.load %arg14[%c0_38, %c0_39, %c0_40, %c0_41] : memref<1x1x1024x128xf32, #tpu.memory_space<vmem>>, vector<1x1x1024x128xf32>
      %79 = vector.shape_cast %78 : vector<1x1x1024x128xf32> to vector<1024x128xf32>
      %80 = arith.maximumf %79, %77 : vector<1024x128xf32>
      %c0_42 = arith.constant 0 : index
      %c0_43 = arith.constant 0 : index
      %c0_44 = arith.constant 0 : index
      %c0_45 = arith.constant 0 : index
      %81 = vector.load %arg14[%c0_42, %c0_43, %c0_44, %c0_45] : memref<1x1x1024x128xf32, #tpu.memory_space<vmem>>, vector<1x1x1024x128xf32>
      %82 = vector.shape_cast %81 : vector<1x1x1024x128xf32> to vector<1024x128xf32>
      %83 = vector.shape_cast %80 : vector<1024x128xf32> to vector<1x1x1024x128xf32>
      tpu.vector_store %arg14[%c0_42, %c0_43, %c0_44, %c0_45], %83 {strides = array<i32>} : memref<1x1x1024x128xf32, #tpu.memory_space<vmem>>, vector<1x1x1024x128xf32>,
    } else {
    }
    return
  }
  func.func @transform_0(%arg0: i32, %arg1: i32, %arg2: i32) -> (i32, i32, i32) {
    %c1_i32 = arith.constant 1 : i32
    %0 = arith.muli %arg1, %c1_i32 : i32
    %1 = arith.addi %0, %arg2 : i32
    %c0_i32 = arith.constant 0 : i32
    %c0_i32_0 = arith.constant 0 : i32
    return %arg0, %c0_i32, %1 : i32, i32, i32
  }
  func.func @transform_1(%arg0: i32, %arg1: i32, %arg2: i32) -> (i32, i32) {
    %c0_i32 = arith.constant 0 : i32
    %c0_i32_0 = arith.constant 0 : i32
    %c0_i32_1 = arith.constant 0 : i32
    return %c0_i32, %c0_i32_0 : i32, i32
  }
  func.func @transform_2(%arg0: i32, %arg1: i32, %arg2: i32) -> (i32, i32) {
    %c0_i32 = arith.constant 0 : i32
    %c0_i32_0 = arith.constant 0 : i32
    %c0_i32_1 = arith.constant 0 : i32
    return %c0_i32, %c0_i32_0 : i32, i32
  }
  func.func @transform_3(%arg0: i32, %arg1: i32, %arg2: i32) -> (i32, i32) {
    %c0_i32 = arith.constant 0 : i32
    %c0_i32_0 = arith.constant 0 : i32
    %c0_i32_1 = arith.constant 0 : i32
    return %c0_i32, %c0_i32_0 : i32, i32
  }
  func.func @transform_4(%arg0: i32, %arg1: i32, %arg2: i32) -> (i32, i32) {
    %c0_i32 = arith.constant 0 : i32
    %c0_i32_0 = arith.constant 0 : i32
    %c0_i32_1 = arith.constant 0 : i32
    return %c0_i32, %c0_i32_0 : i32, i32
  }
  func.func @transform_5(%arg0: i32, %arg1: i32, %arg2: i32) -> (i32, i32) {
    %c0_i32 = arith.constant 0 : i32
    %c0_i32_0 = arith.constant 0 : i32
    %c0_i32_1 = arith.constant 0 : i32
    return %c0_i32, %c0_i32_0 : i32, i32
  }
  func.func @transform_6(%arg0: i32, %arg1: i32, %arg2: i32) -> (i32, i32) {
    %c0_i32 = arith.constant 0 : i32
    %c0_i32_0 = arith.constant 0 : i32
    %c0_i32_1 = arith.constant 0 : i32
    return %c0_i32, %c0_i32_0 : i32, i32
  }
  func.func @transform_7(%arg0: i32, %arg1: i32, %arg2: i32) -> (i32, i32) {
    %c0_i32 = arith.constant 0 : i32
    %c0_i32_0 = arith.constant 0 : i32
    %c0_i32_1 = arith.constant 0 : i32
    return %c0_i32, %c0_i32_0 : i32, i32
  }
  func.func @transform_8(%arg0: i32, %arg1: i32, %arg2: i32) -> (i32, i32) {
    %c0_i32 = arith.constant 0 : i32
    %c0_i32_0 = arith.constant 0 : i32
    %c0_i32_1 = arith.constant 0 : i32
    return %c0_i32, %c0_i32_0 : i32, i32
  }
  func.func @transform_9(%arg0: i32, %arg1: i32, %arg2: i32) -> (i32, i32) {
    %c0_i32 = arith.constant 0 : i32
    %c0_i32_0 = arith.constant 0 : i32
    %c0_i32_1 = arith.constant 0 : i32
    return %c0_i32, %c0_i32_0 : i32, i32
  }
  func.func @transform_10(%arg0: i32, %arg1: i32, %arg2: i32) -> (i32, i32, i32) {
    %c1_i32 = arith.constant 1 : i32
    %0 = arith.muli %arg1, %c1_i32 : i32
    %1 = arith.addi %0, %arg2 : i32
    %c0_i32 = arith.constant 0 : i32
    %c0_i32_0 = arith.constant 0 : i32
    return %arg0, %c0_i32, %1 : i32, i32, i32
  }
  func.func @transform_11(%arg0: i32, %arg1: i32, %arg2: i32) -> (i32, i32, i32, i32) {
    %c0_i32 = arith.constant 0 : i32
    %c0_i32_0 = arith.constant 0 : i32
    %c0_i32_1 = arith.constant 0 : i32
    return %arg0, %arg1, %c0_i32, %c0_i32_0 : i32, i32, i32, i32
  }
}

</mosaic_0001>

<llo_original>
// kernel: pointnet_feature.1
$region0: #{pointnet_feature.1}
  #allocation0 [shape = 'u32[]', space=smem, size = 0x4, offset = 0x4, fixed_abs, tag = 'smem constant byte address 0x4 - core index']
  #allocation1 [shape = 'u32[72,128]{1,0:T(1,128)}', space=vmem, size = 0x9000, scoped, tag = 'internal scratch']
  %s0 = inlined_call_operand.vmem [shape: f32[2,3,128], index: 0, kind: input, shape index: {}]
  %s1 = inlined_call_operand.vmem [shape: f32[64,3], index: 1, kind: input, shape index: {}]
  %s2 = inlined_call_operand.vmem [shape: f32[64,1], index: 2, kind: input, shape index: {}]
  %s3 = inlined_call_operand.vmem [shape: bf16[64,64], index: 3, kind: input, shape index: {}]
  %s4 = inlined_call_operand.vmem [shape: f32[64,1], index: 4, kind: input, shape index: {}]
  %s5 = inlined_call_operand.vmem [shape: bf16[64,64], index: 5, kind: input, shape index: {}]
  %s6 = inlined_call_operand.vmem [shape: f32[64,1], index: 6, kind: input, shape index: {}]
  %s7 = inlined_call_operand.vmem [shape: bf16[128,64], index: 7, kind: input, shape index: {}]
  %s8 = inlined_call_operand.vmem [shape: f32[128,1], index: 8, kind: input, shape index: {}]
  %s9 = inlined_call_operand.vmem [shape: bf16[1024,128], index: 9, kind: input, shape index: {}]
  %s10 = inlined_call_operand.vmem [shape: f32[2,64,128], index: 10, kind: output, shape index: {0}]
  %s11 = inlined_call_operand.vmem [shape: f32[2,1,1024,128], index: 11, kind: output, shape index: {1}]
  %12 = xla_tuple %s10, %s11
  %s13 = sld [smem:[#allocation0]]
  $region93: #{pointnet_feature.1} parent=0
    _
  %s15 = ssub.s32 1, %s13
  %s16 = scalar_select 0, %s15, %s13
  loop: start=0, step=1, limit=4
  $region2: #{pointnet_feature.1} parent=0 // loop_pre_header
    _
  $region3: #{pointnet_feature.1} parent=0 // loop_header
    %s18 = sphi 0, %s22
    %p19 = scmp.ge.s32.totalorder %s18, 4
    %s25 = sphi 0, %s44
    %s26 = sphi 0, %s40
    %s27 = sphi 0, %s36
    %s28 = sphi 0, %s25
    %s29 = sphi 0, %s26
    %s30 = sphi 0, %s27
    %s31 = sphi 0, %s28
    %s32 = sphi 0, %s29
    %s33 = sphi 0, %s30
    %s51 = sphi 0, %s53
    %s54 = sphi 0, %s51
    %s55 = sphi 0, %s54
    %s71 = sphi 0, %s55
    %s75 = sphi 0, %s75
    %s77 = sphi 0, %s75
    %s78 = sphi 0, %s77
    %s92 = sphi 0, %s78
    %s96 = sphi 0, %s96
    %s98 = sphi 0, %s96
    %s99 = sphi 0, %s98
    %s113 = sphi 0, %s99
    %s117 = sphi 0, %s117
    %s119 = sphi 0, %s117
    %s120 = sphi 0, %s119
    %s134 = sphi 0, %s120
    %s138 = sphi 0, %s138
    %s140 = sphi 0, %s138
    %s141 = sphi 0, %s140
    %s155 = sphi 0, %s141
    %s159 = sphi 0, %s159
    %s161 = sphi 0, %s159
    %s162 = sphi 0, %s161
    %s176 = sphi 0, %s162
    %s180 = sphi 0, %s180
    %s182 = sphi 0, %s180
    %s183 = sphi 0, %s182
    %s197 = sphi 0, %s183
    %s201 = sphi 0, %s201
    %s203 = sphi 0, %s201
    %s204 = sphi 0, %s203
    %s218 = sphi 0, %s204
    %s222 = sphi 0, %s222
    %s224 = sphi 0, %s222
    %s225 = sphi 0, %s224
    %s239 = sphi 0, %s225
    %s243 = sphi 0, %s243
    %s245 = sphi 0, %s243
    %s246 = sphi 0, %s245
    %s260 = sphi 0, %s246
    %s270 = sphi 0, %s272
    %s273 = sphi 0, %s270
    %s274 = sphi 0, %s273
    %s290 = sphi 0, %s274
    %s298 = sphi 0, %s300
    %s301 = sphi 0, %s298
    %s302 = sphi 0, %s301
    %s318 = sphi 0, %s302
  $region4: #{pointnet_feature.1} parent=0 // loop_header_branch
    %21 = sbr.rel (%p19) target = $region8
  $region5: #{pointnet_feature.1} parent=0 // loop_body
    %s23 = ssub.s32 %s18, 1
    %s24 = ssub.s32 %s18, 2
    %s34 = sadd.s32 1, %s27
    %p35 = scmp.ge.s32.totalorder %s34, 1
    %s36 = scalar_select %p35, 0, %s34
    %s37 = sadd.s32 1, %s26
    %s38 = scalar_select %p35, %s37, %s26
    %p39 = scmp.ge.s32.totalorder %s38, 1
    %s40 = scalar_select %p39, 0, %s38
    %s41 = sadd.s32 1, %s25
    %s42 = scalar_select %p39, %s41, %s25
    %p43 = scmp.ge.s32.totalorder %s42, 2
    %s44 = scalar_select %p43, 0, %s42
    %s45 = sadd.s32 %s26, %s27
    %s46 = sadd.s32 %s40, %s36
    %s47 = ssub.s32 %s25, %s44
    %s48 = ssub.s32 %s45, %s46
    %s49 = sor.u32 %s47, %s48
    %p50 = scmp.eq.s32.totalorder %s49, 0
    %s52 = sadd.s32 %s51, 1
    %s53 = scalar_select %p50, %s51, %s52
    %p56 = pneg %p50
    %p57 = scmp.eq.s32.totalorder %s18, 1
    %p58 = por %p56, %p57
    %p59 = scmp.ne.s32.totalorder %s51, %s54
    %p60 = scmp.eq.s32.totalorder %s18, 0
    %p61 = por %p59, %p60
    %p62 = scmp.ne.s32.totalorder %s51, %s54
    %p63 = scmp.eq.s32.totalorder %s23, 1
    %p64 = por %p62, %p63
    %p65 = scmp.ne.s32.totalorder %s54, %s55
    %p66 = scmp.eq.s32.totalorder %s23, 0
    %p67 = por %p65, %p66
    %p68 = scmp.ne.s32.totalorder %s54, %s55
    %p69 = scmp.eq.s32.totalorder %s24, 1
    %p70 = por %p68, %p69
    %p72 = scmp.ne.s32.totalorder %s55, %s71
    %p73 = scmp.eq.s32.totalorder %s24, 0
    %p74 = por %p72, %p73
    %s76 = sadd.s32 %s75, 1
    %p79 = scmp.eq.s32.totalorder %s18, 1
    %p80 = scmp.ne.s32.totalorder %s75, %s77
    %p81 = scmp.eq.s32.totalorder %s18, 0
    %p82 = por %p80, %p81
    %p83 = scmp.ne.s32.totalorder %s75, %s77
    %p84 = scmp.eq.s32.totalorder %s23, 1
    %p85 = por %p83, %p84
    %p86 = scmp.ne.s32.totalorder %s77, %s78
    %p87 = scmp.eq.s32.totalorder %s23, 0
    %p88 = por %p86, %p87
    %p89 = scmp.ne.s32.totalorder %s77, %s78
    %p90 = scmp.eq.s32.totalorder %s24, 1
    %p91 = por %p89, %p90
    %p93 = scmp.ne.s32.totalorder %s78, %s92
    %p94 = scmp.eq.s32.totalorder %s24, 0
    %p95 = por %p93, %p94
    %s97 = sadd.s32 %s96, 1
    %p100 = scmp.eq.s32.totalorder %s18, 1
    %p101 = scmp.ne.s32.totalorder %s96, %s98
    %p102 = scmp.eq.s32.totalorder %s18, 0
    %p103 = por %p101, %p102
    %p104 = scmp.ne.s32.totalorder %s96, %s98
    %p105 = scmp.eq.s32.totalorder %s23, 1
    %p106 = por %p104, %p105
    %p107 = scmp.ne.s32.totalorder %s98, %s99
    %p108 = scmp.eq.s32.totalorder %s23, 0
    %p109 = por %p107, %p108
    %p110 = scmp.ne.s32.totalorder %s98, %s99
    %p111 = scmp.eq.s32.totalorder %s24, 1
    %p112 = por %p110, %p111
    %p114 = scmp.ne.s32.totalorder %s99, %s113
    %p115 = scmp.eq.s32.totalorder %s24, 0
    %p116 = por %p114, %p115
    %s118 = sadd.s32 %s117, 1
    %p121 = scmp.eq.s32.totalorder %s18, 1
    %p122 = scmp.ne.s32.totalorder %s117, %s119
    %p123 = scmp.eq.s32.totalorder %s18, 0
    %p124 = por %p122, %p123
    %p125 = scmp.ne.s32.totalorder %s117, %s119
    %p126 = scmp.eq.s32.totalorder %s23, 1
    %p127 = por %p125, %p126
    %p128 = scmp.ne.s32.totalorder %s119, %s120
    %p129 = scmp.eq.s32.totalorder %s23, 0
    %p130 = por %p128, %p129
    %p131 = scmp.ne.s32.totalorder %s119, %s120
    %p132 = scmp.eq.s32.totalorder %s24, 1
    %p133 = por %p131, %p132
    %p135 = scmp.ne.s32.totalorder %s120, %s134
    %p136 = scmp.eq.s32.totalorder %s24, 0
    %p137 = por %p135, %p136
    %s139 = sadd.s32 %s138, 1
    %p142 = scmp.eq.s32.totalorder %s18, 1
    %p143 = scmp.ne.s32.totalorder %s138, %s140
    %p144 = scmp.eq.s32.totalorder %s18, 0
    %p145 = por %p143, %p144
    %p146 = scmp.ne.s32.totalorder %s138, %s140
    %p147 = scmp.eq.s32.totalorder %s23, 1
    %p148 = por %p146, %p147
    %p149 = scmp.ne.s32.totalorder %s140, %s141
    %p150 = scmp.eq.s32.totalorder %s23, 0
    %p151 = por %p149, %p150
    %p152 = scmp.ne.s32.totalorder %s140, %s141
    %p153 = scmp.eq.s32.totalorder %s24, 1
    %p154 = por %p152, %p153
    %p156 = scmp.ne.s32.totalorder %s141, %s155
    %p157 = scmp.eq.s32.totalorder %s24, 0
    %p158 = por %p156, %p157
    %s160 = sadd.s32 %s159, 1
    %p163 = scmp.eq.s32.totalorder %s18, 1
    %p164 = scmp.ne.s32.totalorder %s159, %s161
    %p165 = scmp.eq.s32.totalorder %s18, 0
    %p166 = por %p164, %p165
    %p167 = scmp.ne.s32.totalorder %s159, %s161
    %p168 = scmp.eq.s32.totalorder %s23, 1
    %p169 = por %p167, %p168
    %p170 = scmp.ne.s32.totalorder %s161, %s162
    %p171 = scmp.eq.s32.totalorder %s23, 0
    %p172 = por %p170, %p171
    %p173 = scmp.ne.s32.totalorder %s161, %s162
    %p174 = scmp.eq.s32.totalorder %s24, 1
    %p175 = por %p173, %p174
    %p177 = scmp.ne.s32.totalorder %s162, %s176
    %p178 = scmp.eq.s32.totalorder %s24, 0
    %p179 = por %p177, %p178
    %s181 = sadd.s32 %s180, 1
    %p184 = scmp.eq.s32.totalorder %s18, 1
    %p185 = scmp.ne.s32.totalorder %s180, %s182
    %p186 = scmp.eq.s32.totalorder %s18, 0
    %p187 = por %p185, %p186
    %p188 = scmp.ne.s32.totalorder %s180, %s182
    %p189 = scmp.eq.s32.totalorder %s23, 1
    %p190 = por %p188, %p189
    %p191 = scmp.ne.s32.totalorder %s182, %s183
    %p192 = scmp.eq.s32.totalorder %s23, 0
    %p193 = por %p191, %p192
    %p194 = scmp.ne.s32.totalorder %s182, %s183
    %p195 = scmp.eq.s32.totalorder %s24, 1
    %p196 = por %p194, %p195
    %p198 = scmp.ne.s32.totalorder %s183, %s197
    %p199 = scmp.eq.s32.totalorder %s24, 0
    %p200 = por %p198, %p199
    %s202 = sadd.s32 %s201, 1
    %p205 = scmp.eq.s32.totalorder %s18, 1
    %p206 = scmp.ne.s32.totalorder %s201, %s203
    %p207 = scmp.eq.s32.totalorder %s18, 0
    %p208 = por %p206, %p207
    %p209 = scmp.ne.s32.totalorder %s201, %s203
    %p210 = scmp.eq.s32.totalorder %s23, 1
    %p211 = por %p209, %p210
    %p212 = scmp.ne.s32.totalorder %s203, %s204
    %p213 = scmp.eq.s32.totalorder %s23, 0
    %p214 = por %p212, %p213
    %p215 = scmp.ne.s32.totalorder %s203, %s204
    %p216 = scmp.eq.s32.totalorder %s24, 1
    %p217 = por %p215, %p216
    %p219 = scmp.ne.s32.totalorder %s204, %s218
    %p220 = scmp.eq.s32.totalorder %s24, 0
    %p221 = por %p219, %p220
    %s223 = sadd.s32 %s222, 1
    %p226 = scmp.eq.s32.totalorder %s18, 1
    %p227 = scmp.ne.s32.totalorder %s222, %s224
    %p228 = scmp.eq.s32.totalorder %s18, 0
    %p229 = por %p227, %p228
    %p230 = scmp.ne.s32.totalorder %s222, %s224
    %p231 = scmp.eq.s32.totalorder %s23, 1
    %p232 = por %p230, %p231
    %p233 = scmp.ne.s32.totalorder %s224, %s225
    %p234 = scmp.eq.s32.totalorder %s23, 0
    %p235 = por %p233, %p234
    %p236 = scmp.ne.s32.totalorder %s224, %s225
    %p237 = scmp.eq.s32.totalorder %s24, 1
    %p238 = por %p236, %p237
    %p240 = scmp.ne.s32.totalorder %s225, %s239
    %p241 = scmp.eq.s32.totalorder %s24, 0
    %p242 = por %p240, %p241
    %s244 = sadd.s32 %s243, 1
    %p247 = scmp.eq.s32.totalorder %s18, 1
    %p248 = scmp.ne.s32.totalorder %s243, %s245
    %p249 = scmp.eq.s32.totalorder %s18, 0
    %p250 = por %p248, %p249
    %p251 = scmp.ne.s32.totalorder %s243, %s245
    %p252 = scmp.eq.s32.totalorder %s23, 1
    %p253 = por %p251, %p252
    %p254 = scmp.ne.s32.totalorder %s245, %s246
    %p255 = scmp.eq.s32.totalorder %s23, 0
    %p256 = por %p254, %p255
    %p257 = scmp.ne.s32.totalorder %s245, %s246
    %p258 = scmp.eq.s32.totalorder %s24, 1
    %p259 = por %p257, %p258
    %p261 = scmp.ne.s32.totalorder %s246, %s260
    %p262 = scmp.eq.s32.totalorder %s24, 0
    %p263 = por %p261, %p262
    %s264 = sadd.s32 %s26, %s27
    %s265 = sadd.s32 %s40, %s36
    %s266 = ssub.s32 %s25, %s44
    %s267 = ssub.s32 %s264, %s265
    %s268 = sor.u32 %s266, %s267
    %p269 = scmp.eq.s32.totalorder %s268, 0
    %s271 = sadd.s32 %s270, 1
    %s272 = scalar_select %p269, %s270, %s271
    %p275 = pneg %p269
    %p276 = scmp.eq.s32.totalorder %s18, 1
    %p277 = por %p275, %p276
    %p278 = scmp.ne.s32.totalorder %s270, %s273
    %p279 = scmp.eq.s32.totalorder %s18, 0
    %p280 = por %p278, %p279
    %p281 = scmp.ne.s32.totalorder %s270, %s273
    %p282 = scmp.eq.s32.totalorder %s23, 1
    %p283 = por %p281, %p282
    %p284 = scmp.ne.s32.totalorder %s273, %s274
    %p285 = scmp.eq.s32.totalorder %s23, 0
    %p286 = por %p284, %p285
    %p287 = scmp.ne.s32.totalorder %s273, %s274
    %p288 = scmp.eq.s32.totalorder %s24, 1
    %p289 = por %p287, %p288
    %p291 = scmp.ne.s32.totalorder %s274, %s290
    %p292 = scmp.eq.s32.totalorder %s24, 0
    %p293 = por %p291, %p292
    %s294 = ssub.s32 %s25, %s44
    %s295 = ssub.s32 %s26, %s40
    %s296 = sor.u32 %s294, %s295
    %p297 = scmp.eq.s32.totalorder %s296, 0
    %s299 = sadd.s32 %s298, 1
    %s300 = scalar_select %p297, %s298, %s299
    %p303 = pneg %p297
    %p304 = scmp.eq.s32.totalorder %s18, 1
    %p305 = por %p303, %p304
    %p306 = scmp.ne.s32.totalorder %s298, %s301
    %p307 = scmp.eq.s32.totalorder %s18, 0
    %p308 = por %p306, %p307
    %p309 = scmp.ne.s32.totalorder %s298, %s301
    %p310 = scmp.eq.s32.totalorder %s23, 1
    %p311 = por %p309, %p310
    %p312 = scmp.ne.s32.totalorder %s301, %s302
    %p313 = scmp.eq.s32.totalorder %s23, 0
    %p314 = por %p312, %p313
    %p315 = scmp.ne.s32.totalorder %s301, %s302
    %p316 = scmp.eq.s32.totalorder %s24, 1
    %p317 = por %p315, %p316
    %p319 = scmp.ne.s32.totalorder %s302, %s318
    %p320 = scmp.eq.s32.totalorder %s24, 0
    %p321 = por %p319, %p320
    %p322 = scmp.le.s32.totalorder 1, %s18
    %p323 = scmp.lt.s32.totalorder %s18, 3
    %p324 = pnand %p322, %p323
    %p325 = pneg %p324
    // Predicated region
    $region9: #{pointnet_feature.1} parent=5 // pred_check
      _
    $region10: #{pointnet_feature.1} parent=5 // pred_check_branch
      %327 = sbr.rel (%p324) target = $region12
    $region11: #{pointnet_feature.1} parent=5 // pred_region
      %s328 = ssub.s32 %s18, 1
      // Predicated region
      $region13: #{pointnet_feature.1} parent=11 // pred_check
        %p329 = pneg %p88
      $region14: #{pointnet_feature.1} parent=11 // pred_check_branch
        %331 = sbr.rel (%p329) target = $region16
      $region15: #{pointnet_feature.1} parent=11 // pred_region
        _
      $region16: #{pointnet_feature.1} parent=11 // pred_fallthru
        _
      // Predicated region
      $region17: #{pointnet_feature.1} parent=11 // pred_check
        %p332 = pneg %p109
      $region18: #{pointnet_feature.1} parent=11 // pred_check_branch
        %334 = sbr.rel (%p332) target = $region20
      $region19: #{pointnet_feature.1} parent=11 // pred_region
        _
      $region20: #{pointnet_feature.1} parent=11 // pred_fallthru
        _
      // Predicated region
      $region21: #{pointnet_feature.1} parent=11 // pred_check
        %p335 = pneg %p130
      $region22: #{pointnet_feature.1} parent=11 // pred_check_branch
        %337 = sbr.rel (%p335) target = $region24
      $region23: #{pointnet_feature.1} parent=11 // pred_region
        _
      $region24: #{pointnet_feature.1} parent=11 // pred_fallthru
        _
      // Predicated region
      $region25: #{pointnet_feature.1} parent=11 // pred_check
        %p338 = pneg %p151
      $region26: #{pointnet_feature.1} parent=11 // pred_check_branch
        %340 = sbr.rel (%p338) target = $region28
      $region27: #{pointnet_feature.1} parent=11 // pred_region
        _
      $region28: #{pointnet_feature.1} parent=11 // pred_fallthru
        _
      // Predicated region
      $region29: #{pointnet_feature.1} parent=11 // pred_check
        %p341 = pneg %p172
      $region30: #{pointnet_feature.1} parent=11 // pred_check_branch
        %343 = sbr.rel (%p341) target = $region32
      $region31: #{pointnet_feature.1} parent=11 // pred_region
        _
      $region32: #{pointnet_feature.1} parent=11 // pred_fallthru
        _
      // Predicated region
      $region33: #{pointnet_feature.1} parent=11 // pred_check
        %p344 = pneg %p193
      $region34: #{pointnet_feature.1} parent=11 // pred_check_branch
        %346 = sbr.rel (%p344) target = $region36
      $region35: #{pointnet_feature.1} parent=11 // pred_region
        _
      $region36: #{pointnet_feature.1} parent=11 // pred_fallthru
        _
      // Predicated region
      $region37: #{pointnet_feature.1} parent=11 // pred_check
        %p347 = pneg %p214
      $region38: #{pointnet_feature.1} parent=11 // pred_check_branch
        %349 = sbr.rel (%p347) target = $region40
      $region39: #{pointnet_feature.1} parent=11 // pred_region
        _
      $region40: #{pointnet_feature.1} parent=11 // pred_fallthru
        _
      // Predicated region
      $region41: #{pointnet_feature.1} parent=11 // pred_check
        %p350 = pneg %p235
      $region42: #{pointnet_feature.1} parent=11 // pred_check_branch
        %352 = sbr.rel (%p350) target = $region44
      $region43: #{pointnet_feature.1} parent=11 // pred_region
        _
      $region44: #{pointnet_feature.1} parent=11 // pred_fallthru
        _
      // Predicated region
      $region45: #{pointnet_feature.1} parent=11 // pred_check
        %p353 = pneg %p256
      $region46: #{pointnet_feature.1} parent=11 // pred_check_branch
        %355 = sbr.rel (%p353) target = $region48
      $region47: #{pointnet_feature.1} parent=11 // pred_region
        _
      $region48: #{pointnet_feature.1} parent=11 // pred_fallthru
        _
    $region12: #{pointnet_feature.1} parent=5 // pred_fallthru
      _
    %p356 = scmp.lt.s32.totalorder %s18, 2
    // Predicated region
    $region49: #{pointnet_feature.1} parent=5 // pred_check
      %p357 = pneg %p356
    $region50: #{pointnet_feature.1} parent=5 // pred_check_branch
      %359 = sbr.rel (%p357) target = $region52
    $region51: #{pointnet_feature.1} parent=5 // pred_region
      // Predicated region
      $region53: #{pointnet_feature.1} parent=51 // pred_check
        %p360 = pneg %p61
      $region54: #{pointnet_feature.1} parent=51 // pred_check_branch
        %362 = sbr.rel (%p360) target = $region56
      $region55: #{pointnet_feature.1} parent=51 // pred_region
        %s363 = sadd.s32 %s26, %s27
        %p364 = scmp.lt.s32.totalorder %s25, 1
        %s365 = scalar_select %p364, %s25, 1
        %p366 = scmp.lt.s32.totalorder %s363, 0
        %s367 = scalar_select %p366, %s363, 0
        %s368 = sadd.s32 %s367, %s365
        %s369 = smul.addr %s368, 4
        %s370 = scalar_lea.vmem %s0, %s369
        %s371 = sadd.s32 %s26, %s27
      $region56: #{pointnet_feature.1} parent=51 // pred_fallthru
        _
    $region52: #{pointnet_feature.1} parent=5 // pred_fallthru
      _
    %p372 = scmp.le.s32.totalorder 1, %s18
    %p373 = scmp.lt.s32.totalorder %s18, 3
    %p374 = pnand %p372, %p373
    %p375 = pneg %p374
    // Predicated region
    $region57: #{pointnet_feature.1} parent=5 // pred_check
      _
    $region58: #{pointnet_feature.1} parent=5 // pred_check_branch
      %377 = sbr.rel (%p374) target = $region60
    $region59: #{pointnet_feature.1} parent=5 // pred_region
      %s378 = ssub.s32 %s18, 1
      %s379 = sadd.s32 %s29, %s30
      %p380 = scmp.lt.s32.totalorder %s28, 1
      %s381 = scalar_select %p380, %s28, 1
      %p382 = scmp.lt.s32.totalorder %s379, 0
      %s383 = scalar_select %p382, %s379, 0
      %s384 = sadd.s32 %s383, %s381
      %s385 = smul.addr %s384, 4
      %s386 = scalar_lea.vmem %s0, %s385
      %p387 = pneg %p67
      %p388 = pneg %p64
      %p389 = pneg %p88
      %p390 = pneg %p85
      %p391 = pneg %p109
      %p392 = pneg %p106
      %p393 = pneg %p130
      %p394 = pneg %p127
      %p395 = pneg %p151
      %p396 = pneg %p148
      %p397 = pneg %p172
      %p398 = pneg %p169
      %p399 = pneg %p193
      %p400 = pneg %p190
      %p401 = pneg %p214
      %p402 = pneg %p211
      %p403 = pneg %p235
      %p404 = pneg %p232
      %p405 = pneg %p256
      %p406 = pneg %p253
      %p407 = pneg %p286
      %p408 = pneg %p283
      %s409 = sadd.s32 %s29, %s30
      %p410 = scmp.lt.s32.totalorder %s28, 1
      %s411 = scalar_select %p410, %s28, 1
      %p412 = scmp.lt.s32.totalorder %s409, 0
      %s413 = scalar_select %p412, %s409, 0
      %s414 = smul.addr %s411, 8
      %s415 = sadd.s32 %s413, %s414
      %s416 = smul.addr %s415, 8
      %s417 = scalar_lea.vmem %s10, %s416
      %p418 = pneg %p314
      %p419 = pneg %p311
      %p420 = scmp.lt.s32.totalorder %s28, 1
      %s421 = scalar_select %p420, %s28, 1
      %p422 = scmp.lt.s32.totalorder %s29, 0
      %s423 = scalar_select %p422, %s29, 0
      %s424 = smul.addr %s423, 128
      %s425 = smul.addr %s421, 128
      %s426 = sadd.s32 %s424, %s425
      %s427 = smul.addr %s426, 8
      %s428 = scalar_lea.vmem %s11, %s427
      %s429 = sadd.s32 %s29, %s30
      %p430 = scmp.lt.s32.totalorder %s28, 1
      %s431 = scalar_select %p430, %s28, 1
      %p432 = scmp.lt.s32.totalorder %s429, 0
      %s433 = scalar_select %p432, %s429, 0
      %s434 = sadd.s32 %s433, %s431
      %s435 = smul.addr %s434, 4
      %s436 = scalar_lea.vmem %s0, %s435
      %s437 = sadd.s32 %s29, %s30
      %s438 = sadd.s32 %s29, %s30
      %p439 = scmp.lt.s32.totalorder %s28, 1
      %s440 = scalar_select %p439, %s28, 1
      %p441 = scmp.lt.s32.totalorder %s438, 0
      %s442 = scalar_select %p441, %s438, 0
      %s443 = smul.addr %s440, 8
      %s444 = sadd.s32 %s442, %s443
      %s445 = smul.addr %s444, 8
      %s446 = scalar_lea.vmem %s10, %s445
      %s447 = sadd.s32 %s29, %s30
      %p448 = scmp.lt.s32.totalorder %s28, 1
      %s449 = scalar_select %p448, %s28, 1
      %p450 = scmp.lt.s32.totalorder %s29, 0
      %s451 = scalar_select %p450, %s29, 0
      %s452 = smul.addr %s451, 128
      %s453 = smul.addr %s449, 128
      %s454 = sadd.s32 %s452, %s453
      %s455 = smul.addr %s454, 8
      %s456 = scalar_lea.vmem %s11, %s455
      %p458 = scmp.eq.s32.totalorder %s30, 0
      // Predicated region
      $region61: #{pointnet_feature.1} parent=59 // pred_check
        %p459 = pneg %p458
      $region62: #{pointnet_feature.1} parent=59 // pred_check_branch
        %461 = sbr.rel (%p459) target = $region64
      $region63: #{pointnet_feature.1} parent=59 // pred_region
        %462 = vst [vmem:[%s456] sm:$0xff] -inf
        %463 = vst [vmem:[%s456 + $0x8] sm:$0xff] -inf
        %464 = vst [vmem:[%s456 + $0x10] sm:$0xff] -inf
        %465 = vst [vmem:[%s456 + $0x18] sm:$0xff] -inf
        %466 = vst [vmem:[%s456 + $0x20] sm:$0xff] -inf
        %467 = vst [vmem:[%s456 + $0x28] sm:$0xff] -inf
        %468 = vst [vmem:[%s456 + $0x30] sm:$0xff] -inf
        %469 = vst [vmem:[%s456 + $0x38] sm:$0xff] -inf
        %470 = vst [vmem:[%s456 + $0x40] sm:$0xff] -inf
        %471 = vst [vmem:[%s456 + $0x48] sm:$0xff] -inf
        %472 = vst [vmem:[%s456 + $0x50] sm:$0xff] -inf
        %473 = vst [vmem:[%s456 + $0x58] sm:$0xff] -inf
        %474 = vst [vmem:[%s456 + $0x60] sm:$0xff] -inf
        %475 = vst [vmem:[%s456 + $0x68] sm:$0xff] -inf
        %476 = vst [vmem:[%s456 + $0x70] sm:$0xff] -inf
        %477 = vst [vmem:[%s456 + $0x78] sm:$0xff] -inf
        %478 = vst [vmem:[%s456 + $0x80] sm:$0xff] -inf
        %479 = vst [vmem:[%s456 + $0x88] sm:$0xff] -inf
        %480 = vst [vmem:[%s456 + $0x90] sm:$0xff] -inf
        %481 = vst [vmem:[%s456 + $0x98] sm:$0xff] -inf
        %482 = vst [vmem:[%s456 + $0xa0] sm:$0xff] -inf
        %483 = vst [vmem:[%s456 + $0xa8] sm:$0xff] -inf
        %484 = vst [vmem:[%s456 + $0xb0] sm:$0xff] -inf
        %485 = vst [vmem:[%s456 + $0xb8] sm:$0xff] -inf
        %486 = vst [vmem:[%s456 + $0xc0] sm:$0xff] -inf
        %487 = vst [vmem:[%s456 + $0xc8] sm:$0xff] -inf
        %488 = vst [vmem:[%s456 + $0xd0] sm:$0xff] -inf
        %489 = vst [vmem:[%s456 + $0xd8] sm:$0xff] -inf
        %490 = vst [vmem:[%s456 + $0xe0] sm:$0xff] -inf
        %491 = vst [vmem:[%s456 + $0xe8] sm:$0xff] -inf
        %492 = vst [vmem:[%s456 + $0xf0] sm:$0xff] -inf
        %493 = vst [vmem:[%s456 + $0xf8] sm:$0xff] -inf
        %494 = vst [vmem:[%s456 + $0x100] sm:$0xff] -inf
        %495 = vst [vmem:[%s456 + $0x108] sm:$0xff] -inf
        %496 = vst [vmem:[%s456 + $0x110] sm:$0xff] -inf
        %497 = vst [vmem:[%s456 + $0x118] sm:$0xff] -inf
        %498 = vst [vmem:[%s456 + $0x120] sm:$0xff] -inf
        %499 = vst [vmem:[%s456 + $0x128] sm:$0xff] -inf
        %500 = vst [vmem:[%s456 + $0x130] sm:$0xff] -inf
        %501 = vst [vmem:[%s456 + $0x138] sm:$0xff] -inf
        %502 = vst [vmem:[%s456 + $0x140] sm:$0xff] -inf
        %503 = vst [vmem:[%s456 + $0x148] sm:$0xff] -inf
        %504 = vst [vmem:[%s456 + $0x150] sm:$0xff] -inf
        %505 = vst [vmem:[%s456 + $0x158] sm:$0xff] -inf
        %506 = vst [vmem:[%s456 + $0x160] sm:$0xff] -inf
        %507 = vst [vmem:[%s456 + $0x168] sm:$0xff] -inf
        %508 = vst [vmem:[%s456 + $0x170] sm:$0xff] -inf
        %509 = vst [vmem:[%s456 + $0x178] sm:$0xff] -inf
        %510 = vst [vmem:[%s456 + $0x180] sm:$0xff] -inf
        %511 = vst [vmem:[%s456 + $0x188] sm:$0xff] -inf
        %512 = vst [vmem:[%s456 + $0x190] sm:$0xff] -inf
        %513 = vst [vmem:[%s456 + $0x198] sm:$0xff] -inf
        %514 = vst [vmem:[%s456 + $0x1a0] sm:$0xff] -inf
        %515 = vst [vmem:[%s456 + $0x1a8] sm:$0xff] -inf
        %516 = vst [vmem:[%s456 + $0x1b0] sm:$0xff] -inf
        %517 = vst [vmem:[%s456 + $0x1b8] sm:$0xff] -inf
        %518 = vst [vmem:[%s456 + $0x1c0] sm:$0xff] -inf
        %519 = vst [vmem:[%s456 + $0x1c8] sm:$0xff] -inf
        %520 = vst [vmem:[%s456 + $0x1d0] sm:$0xff] -inf
        %521 = vst [vmem:[%s456 + $0x1d8] sm:$0xff] -inf
        %522 = vst [vmem:[%s456 + $0x1e0] sm:$0xff] -inf
        %523 = vst [vmem:[%s456 + $0x1e8] sm:$0xff] -inf
        %524 = vst [vmem:[%s456 + $0x1f0] sm:$0xff] -inf
        %525 = vst [vmem:[%s456 + $0x1f8] sm:$0xff] -inf
        %526 = vst [vmem:[%s456 + $0x200] sm:$0xff] -inf
        %527 = vst [vmem:[%s456 + $0x208] sm:$0xff] -inf
        %528 = vst [vmem:[%s456 + $0x210] sm:$0xff] -inf
        %529 = vst [vmem:[%s456 + $0x218] sm:$0xff] -inf
        %530 = vst [vmem:[%s456 + $0x220] sm:$0xff] -inf
        %531 = vst [vmem:[%s456 + $0x228] sm:$0xff] -inf
        %532 = vst [vmem:[%s456 + $0x230] sm:$0xff] -inf
        %533 = vst [vmem:[%s456 + $0x238] sm:$0xff] -inf
        %534 = vst [vmem:[%s456 + $0x240] sm:$0xff] -inf
        %535 = vst [vmem:[%s456 + $0x248] sm:$0xff] -inf
        %536 = vst [vmem:[%s456 + $0x250] sm:$0xff] -inf
        %537 = vst [vmem:[%s456 + $0x258] sm:$0xff] -inf
        %538 = vst [vmem:[%s456 + $0x260] sm:$0xff] -inf
        %539 = vst [vmem:[%s456 + $0x268] sm:$0xff] -inf
        %540 = vst [vmem:[%s456 + $0x270] sm:$0xff] -inf
        %541 = vst [vmem:[%s456 + $0x278] sm:$0xff] -inf
        %542 = vst [vmem:[%s456 + $0x280] sm:$0xff] -inf
        %543 = vst [vmem:[%s456 + $0x288] sm:$0xff] -inf
        %544 = vst [vmem:[%s456 + $0x290] sm:$0xff] -inf
        %545 = vst [vmem:[%s456 + $0x298] sm:$0xff] -inf
        %546 = vst [vmem:[%s456 + $0x2a0] sm:$0xff] -inf
        %547 = vst [vmem:[%s456 + $0x2a8] sm:$0xff] -inf
        %548 = vst [vmem:[%s456 + $0x2b0] sm:$0xff] -inf
        %549 = vst [vmem:[%s456 + $0x2b8] sm:$0xff] -inf
        %550 = vst [vmem:[%s456 + $0x2c0] sm:$0xff] -inf
        %551 = vst [vmem:[%s456 + $0x2c8] sm:$0xff] -inf
        %552 = vst [vmem:[%s456 + $0x2d0] sm:$0xff] -inf
        %553 = vst [vmem:[%s456 + $0x2d8] sm:$0xff] -inf
        %554 = vst [vmem:[%s456 + $0x2e0] sm:$0xff] -inf
        %555 = vst [vmem:[%s456 + $0x2e8] sm:$0xff] -inf
        %556 = vst [vmem:[%s456 + $0x2f0] sm:$0xff] -inf
        %557 = vst [vmem:[%s456 + $0x2f8] sm:$0xff] -inf
        %558 = vst [vmem:[%s456 + $0x300] sm:$0xff] -inf
        %559 = vst [vmem:[%s456 + $0x308] sm:$0xff] -inf
        %560 = vst [vmem:[%s456 + $0x310] sm:$0xff] -inf
        %561 = vst [vmem:[%s456 + $0x318] sm:$0xff] -inf
        %562 = vst [vmem:[%s456 + $0x320] sm:$0xff] -inf
        %563 = vst [vmem:[%s456 + $0x328] sm:$0xff] -inf
        %564 = vst [vmem:[%s456 + $0x330] sm:$0xff] -inf
        %565 = vst [vmem:[%s456 + $0x338] sm:$0xff] -inf
        %566 = vst [vmem:[%s456 + $0x340] sm:$0xff] -inf
        %567 = vst [vmem:[%s456 + $0x348] sm:$0xff] -inf
        %568 = vst [vmem:[%s456 + $0x350] sm:$0xff] -inf
        %569 = vst [vmem:[%s456 + $0x358] sm:$0xff] -inf
        %570 = vst [vmem:[%s456 + $0x360] sm:$0xff] -inf
        %571 = vst [vmem:[%s456 + $0x368] sm:$0xff] -inf
        %572 = vst [vmem:[%s456 + $0x370] sm:$0xff] -inf
        %573 = vst [vmem:[%s456 + $0x378] sm:$0xff] -inf
        %574 = vst [vmem:[%s456 + $0x380] sm:$0xff] -inf
        %575 = vst [vmem:[%s456 + $0x388] sm:$0xff] -inf
        %576 = vst [vmem:[%s456 + $0x390] sm:$0xff] -inf
        %577 = vst [vmem:[%s456 + $0x398] sm:$0xff] -inf
        %578 = vst [vmem:[%s456 + $0x3a0] sm:$0xff] -inf
        %579 = vst [vmem:[%s456 + $0x3a8] sm:$0xff] -inf
        %580 = vst [vmem:[%s456 + $0x3b0] sm:$0xff] -inf
        %581 = vst [vmem:[%s456 + $0x3b8] sm:$0xff] -inf
        %582 = vst [vmem:[%s456 + $0x3c0] sm:$0xff] -inf
        %583 = vst [vmem:[%s456 + $0x3c8] sm:$0xff] -inf
        %584 = vst [vmem:[%s456 + $0x3d0] sm:$0xff] -inf
        %585 = vst [vmem:[%s456 + $0x3d8] sm:$0xff] -inf
        %586 = vst [vmem:[%s456 + $0x3e0] sm:$0xff] -inf
        %587 = vst [vmem:[%s456 + $0x3e8] sm:$0xff] -inf
        %588 = vst [vmem:[%s456 + $0x3f0] sm:$0xff] -inf
        %589 = vst [vmem:[%s456 + $0x3f8] sm:$0xff] -inf
      $region64: #{pointnet_feature.1} parent=59 // pred_fallthru
        _
      %v590 = vld [vmem:[%s436] sm:$0x7]
      %v591 = vld [vmem:[%s1] sm:$0xff]
      %v592 = vld [vmem:[%s1 + $0x8] sm:$0xff]
      %v593 = vld [vmem:[%s1 + $0x10] sm:$0xff]
      %v594 = vld [vmem:[%s1 + $0x18] sm:$0xff]
      %v595 = vld [vmem:[%s1 + $0x20] sm:$0xff]
      %v596 = vld [vmem:[%s1 + $0x28] sm:$0xff]
      %v597 = vld [vmem:[%s1 + $0x30] sm:$0xff]
      %v598 = vld [vmem:[%s1 + $0x38] sm:$0xff]
      %600 = vset.pattern.permute.xlu0 0
      %601 = vperm.xlu0 %600, %v591
      %v602 = vpop.permute.xlu0 %601
      %605 = vset.pattern.permute.xlu0 0
      %606 = vperm.xlu0 %605, %v592
      %v607 = vpop.permute.xlu0 %606
      %610 = vset.pattern.permute.xlu0 0
      %611 = vperm.xlu0 %610, %v593
      %v612 = vpop.permute.xlu0 %611
      %615 = vset.pattern.permute.xlu0 0
      %616 = vperm.xlu0 %615, %v594
      %v617 = vpop.permute.xlu0 %616
      %620 = vset.pattern.permute.xlu0 0
      %621 = vperm.xlu0 %620, %v595
      %v622 = vpop.permute.xlu0 %621
      %625 = vset.pattern.permute.xlu0 0
      %626 = vperm.xlu0 %625, %v596
      %v627 = vpop.permute.xlu0 %626
      %630 = vset.pattern.permute.xlu0 0
      %631 = vperm.xlu0 %630, %v597
      %v632 = vpop.permute.xlu0 %631
      %635 = vset.pattern.permute.xlu0 0
      %636 = vperm.xlu0 %635, %v598
      %v637 = vpop.permute.xlu0 %636
      %v639 = vperm.slane %v590, 0
      %v640 = vmul.f32 %v602, %v639
      %v641 = vmul.f32 %v607, %v639
      %v642 = vmul.f32 %v612, %v639
      %v643 = vmul.f32 %v617, %v639
      %v644 = vmul.f32 %v622, %v639
      %v645 = vmul.f32 %v627, %v639
      %v646 = vmul.f32 %v632, %v639
      %v647 = vmul.f32 %v637, %v639
      %648 = vset.pattern.permute.xlu0 1
      %649 = vperm.xlu0 %648, %v591
      %v650 = vpop.permute.xlu0 %649
      %652 = vset.pattern.permute.xlu0 1
      %653 = vperm.xlu0 %652, %v592
      %v654 = vpop.permute.xlu0 %653
      %656 = vset.pattern.permute.xlu0 1
      %657 = vperm.xlu0 %656, %v593
      %v658 = vpop.permute.xlu0 %657
      %660 = vset.pattern.permute.xlu0 1
      %661 = vperm.xlu0 %660, %v594
      %v662 = vpop.permute.xlu0 %661
      %664 = vset.pattern.permute.xlu0 1
      %665 = vperm.xlu0 %664, %v595
      %v666 = vpop.permute.xlu0 %665
      %668 = vset.pattern.permute.xlu0 1
      %669 = vperm.xlu0 %668, %v596
      %v670 = vpop.permute.xlu0 %669
      %672 = vset.pattern.permute.xlu0 1
      %673 = vperm.xlu0 %672, %v597
      %v674 = vpop.permute.xlu0 %673
      %676 = vset.pattern.permute.xlu0 1
      %677 = vperm.xlu0 %676, %v598
      %v678 = vpop.permute.xlu0 %677
      %v680 = vperm.slane %v590, 1
      %v681 = vmul.f32 %v650, %v680
      %v682 = vmul.f32 %v654, %v680
      %v683 = vmul.f32 %v658, %v680
      %v684 = vmul.f32 %v662, %v680
      %v685 = vmul.f32 %v666, %v680
      %v686 = vmul.f32 %v670, %v680
      %v687 = vmul.f32 %v674, %v680
      %v688 = vmul.f32 %v678, %v680
      %v689 = vadd.f32 %v640, %v681
      %v690 = vadd.f32 %v641, %v682
      %v691 = vadd.f32 %v642, %v683
      %v692 = vadd.f32 %v643, %v684
      %v693 = vadd.f32 %v644, %v685
      %v694 = vadd.f32 %v645, %v686
      %v695 = vadd.f32 %v646, %v687
      %v696 = vadd.f32 %v647, %v688
      %697 = vset.pattern.permute.xlu0 2
      %698 = vperm.xlu0 %697, %v591
      %v699 = vpop.permute.xlu0 %698
      %701 = vset.pattern.permute.xlu0 2
      %702 = vperm.xlu0 %701, %v592
      %v703 = vpop.permute.xlu0 %702
      %705 = vset.pattern.permute.xlu0 2
      %706 = vperm.xlu0 %705, %v593
      %v707 = vpop.permute.xlu0 %706
      %709 = vset.pattern.permute.xlu0 2
      %710 = vperm.xlu0 %709, %v594
      %v711 = vpop.permute.xlu0 %710
      %713 = vset.pattern.permute.xlu0 2
      %714 = vperm.xlu0 %713, %v595
      %v715 = vpop.permute.xlu0 %714
      %717 = vset.pattern.permute.xlu0 2
      %718 = vperm.xlu0 %717, %v596
      %v719 = vpop.permute.xlu0 %718
      %721 = vset.pattern.permute.xlu0 2
      %722 = vperm.xlu0 %721, %v597
      %v723 = vpop.permute.xlu0 %722
      %725 = vset.pattern.permute.xlu0 2
      %726 = vperm.xlu0 %725, %v598
      %v727 = vpop.permute.xlu0 %726
      %v729 = vperm.slane %v590, 2
      %v730 = vmul.f32 %v699, %v729
      %v731 = vmul.f32 %v703, %v729
      %v732 = vmul.f32 %v707, %v729
      %v733 = vmul.f32 %v711, %v729
      %v734 = vmul.f32 %v715, %v729
      %v735 = vmul.f32 %v719, %v729
      %v736 = vmul.f32 %v723, %v729
      %v737 = vmul.f32 %v727, %v729
      %v738 = vadd.f32 %v689, %v730
      %v739 = vadd.f32 %v690, %v731
      %v740 = vadd.f32 %v691, %v732
      %v741 = vadd.f32 %v692, %v733
      %v742 = vadd.f32 %v693, %v734
      %v743 = vadd.f32 %v694, %v735
      %v744 = vadd.f32 %v695, %v736
      %v745 = vadd.f32 %v696, %v737
      %v746 = vld [vmem:[%s2] sm:$0xff]
      %v747 = vld [vmem:[%s2 + $0x8] sm:$0xff]
      %v748 = vld [vmem:[%s2 + $0x10] sm:$0xff]
      %v749 = vld [vmem:[%s2 + $0x18] sm:$0xff]
      %v750 = vld [vmem:[%s2 + $0x20] sm:$0xff]
      %v751 = vld [vmem:[%s2 + $0x28] sm:$0xff]
      %v752 = vld [vmem:[%s2 + $0x30] sm:$0xff]
      %v753 = vld [vmem:[%s2 + $0x38] sm:$0xff]
      %755 = vset.pattern.permute.xlu0 0
      %756 = vperm.xlu0 %755, %v746
      %v757 = vpop.permute.xlu0 %756
      %760 = vset.pattern.permute.xlu0 0
      %761 = vperm.xlu0 %760, %v747
      %v762 = vpop.permute.xlu0 %761
      %765 = vset.pattern.permute.xlu0 0
      %766 = vperm.xlu0 %765, %v748
      %v767 = vpop.permute.xlu0 %766
      %770 = vset.pattern.permute.xlu0 0
      %771 = vperm.xlu0 %770, %v749
      %v772 = vpop.permute.xlu0 %771
      %775 = vset.pattern.permute.xlu0 0
      %776 = vperm.xlu0 %775, %v750
      %v777 = vpop.permute.xlu0 %776
      %780 = vset.pattern.permute.xlu0 0
      %781 = vperm.xlu0 %780, %v751
      %v782 = vpop.permute.xlu0 %781
      %785 = vset.pattern.permute.xlu0 0
      %786 = vperm.xlu0 %785, %v752
      %v787 = vpop.permute.xlu0 %786
      %790 = vset.pattern.permute.xlu0 0
      %791 = vperm.xlu0 %790, %v753
      %v792 = vpop.permute.xlu0 %791
      %v794 = vadd.f32 %v738, %v757
      %v795 = vadd.f32 %v739, %v762
      %v796 = vadd.f32 %v740, %v767
      %v797 = vadd.f32 %v741, %v772
      %v798 = vadd.f32 %v742, %v777
      %v799 = vadd.f32 %v743, %v782
      %v800 = vadd.f32 %v744, %v787
      %v801 = vadd.f32 %v745, %v792
      %v802 = vmax.f32 %v794, 0.0
      %v803 = vmax.f32 %v795, 0.0
      %v804 = vmax.f32 %v796, 0.0
      %v805 = vmax.f32 %v797, 0.0
      %v806 = vmax.f32 %v798, 0.0
      %v807 = vmax.f32 %v799, 0.0
      %v808 = vmax.f32 %v800, 0.0
      %v809 = vmax.f32 %v801, 0.0
      %v810 = vld [vmem:[%s3] sm:$0xf]
      %v811 = vld [vmem:[%s3 + $0x4] sm:$0xf]
      %v812 = vld [vmem:[%s3 + $0x8] sm:$0xf]
      %v813 = vld [vmem:[%s3 + $0xc] sm:$0xf]
      %v814 = vld [vmem:[%s3 + $0x10] sm:$0xf]
      %v815 = vld [vmem:[%s3 + $0x14] sm:$0xf]
      %v816 = vld [vmem:[%s3 + $0x18] sm:$0xf]
      %v817 = vld [vmem:[%s3 + $0x1c] sm:$0xf]
      %v818 = vpack.c.bf16 %v803, %v802
      %v819 = vpack.c.bf16 %v805, %v804
      %v820 = vpack.c.bf16 %v807, %v806
      %v821 = vpack.c.bf16 %v809, %v808
      %v822 = vld [vmem:[%s4] sm:$0xff]
      %v823 = vld [vmem:[%s4 + $0x8] sm:$0xff]
      %v824 = vld [vmem:[%s4 + $0x10] sm:$0xff]
      %v825 = vld [vmem:[%s4 + $0x18] sm:$0xff]
      %v826 = vld [vmem:[%s4 + $0x20] sm:$0xff]
      %v827 = vld [vmem:[%s4 + $0x28] sm:$0xff]
      %v828 = vld [vmem:[%s4 + $0x30] sm:$0xff]
      %v829 = vld [vmem:[%s4 + $0x38] sm:$0xff]
      %831 = vset.pattern.permute.xlu0 0
      %832 = vperm.xlu0 %831, %v822
      %v833 = vpop.permute.xlu0 %832
      %836 = vset.pattern.permute.xlu0 0
      %837 = vperm.xlu0 %836, %v823
      %v838 = vpop.permute.xlu0 %837
      %841 = vset.pattern.permute.xlu0 0
      %842 = vperm.xlu0 %841, %v824
      %v843 = vpop.permute.xlu0 %842
      %846 = vset.pattern.permute.xlu0 0
      %847 = vperm.xlu0 %846, %v825
      %v848 = vpop.permute.xlu0 %847
      %851 = vset.pattern.permute.xlu0 0
      %852 = vperm.xlu0 %851, %v826
      %v853 = vpop.permute.xlu0 %852
      %856 = vset.pattern.permute.xlu0 0
      %857 = vperm.xlu0 %856, %v827
      %v858 = vpop.permute.xlu0 %857
      %861 = vset.pattern.permute.xlu0 0
      %862 = vperm.xlu0 %861, %v828
      %v863 = vpop.permute.xlu0 %862
      %866 = vset.pattern.permute.xlu0 0
      %867 = vperm.xlu0 %866, %v829
      %v868 = vpop.permute.xlu0 %867
      %v878 = vunpack.c.l.b16 %v810
      %v879 = vunpack.c.l.b16 %v811
      %v880 = vunpack.c.l.b16 %v812
      %v881 = vunpack.c.l.b16 %v813
      %v882 = vunpack.c.l.b16 %v814
      %v883 = vunpack.c.l.b16 %v815
      %v884 = vunpack.c.l.b16 %v816
      %v885 = vunpack.c.l.b16 %v817
      %v886 = vpack.c.b16 %v879, %v878
      %v887 = vpack.c.b16 %v881, %v880
      %v888 = vpack.c.b16 %v883, %v882
      %v889 = vpack.c.b16 %v885, %v884
      %vm890 = vcmask 523264
      %v892 = vsel %vm890, %v886, 0
      %v895 = vsel %vm890, %v887, 0
      %v898 = vsel %vm890, %v888, 0
      %v901 = vsel %vm890, %v889, 0
      %903 = vmatpush.bf16.msra.mxu0 0
      %904 = vmatpush.bf16.msra.mxu0 0
      %905 = vmatpush.bf16.msra.mxu0 0
      %906 = vmatpush.bf16.msra.mxu0 0
      %907 = vmatpush.bf16.msra.mxu0 %v821
      %908 = vmatpush.bf16.msra.mxu0 %v820
      %909 = vmatpush.bf16.msra.mxu0 %v819
      %910 = vmatpush.bf16.msra.mxu0 %v818
      %911 = vmatmul.bf16.gmra.mxu0 %v892
      %v912 = vpop.f32.mrf.mxu0
      %v913 = vadd.f32 %v833, %v912
      %v914 = vpop.f32.mrf.mxu0
      %v915 = vadd.f32 %v838, %v914
      %916 = vmatmul.bf16.gmra.mxu0 %v895
      %v917 = vpop.f32.mrf.mxu0
      %v918 = vadd.f32 %v843, %v917
      %v919 = vpop.f32.mrf.mxu0
      %v920 = vadd.f32 %v848, %v919
      %921 = vmatmul.bf16.gmra.mxu0 %v898
      %v922 = vpop.f32.mrf.mxu0
      %v923 = vadd.f32 %v853, %v922
      %v924 = vpop.f32.mrf.mxu0
      %v925 = vadd.f32 %v858, %v924
      %926 = vmatmul.bf16.gmra.mxu0 %v901
      %v927 = vpop.f32.mrf.mxu0
      %v928 = vadd.f32 %v863, %v927
      %v929 = vpop.f32.mrf.mxu0
      %v930 = vadd.f32 %v868, %v929
      %931 = vdwg.mxu0
      %v932 = vmax.f32 %v913, 0.0
      %v933 = vmax.f32 %v915, 0.0
      %v934 = vmax.f32 %v918, 0.0
      %v935 = vmax.f32 %v920, 0.0
      %v936 = vmax.f32 %v923, 0.0
      %v937 = vmax.f32 %v925, 0.0
      %v938 = vmax.f32 %v928, 0.0
      %v939 = vmax.f32 %v930, 0.0
      %940 = vst [vmem:[%s446] sm:$0xff] %v932
      %941 = vst [vmem:[%s446 + $0x8] sm:$0xff] %v933
      %942 = vst [vmem:[%s446 + $0x10] sm:$0xff] %v934
      %943 = vst [vmem:[%s446 + $0x18] sm:$0xff] %v935
      %944 = vst [vmem:[%s446 + $0x20] sm:$0xff] %v936
      %945 = vst [vmem:[%s446 + $0x28] sm:$0xff] %v937
      %946 = vst [vmem:[%s446 + $0x30] sm:$0xff] %v938
      %947 = vst [vmem:[%s446 + $0x38] sm:$0xff] %v939
      %v948 = vld [vmem:[%s5] sm:$0xf]
      %v949 = vld [vmem:[%s5 + $0x4] sm:$0xf]
      %v950 = vld [vmem:[%s5 + $0x8] sm:$0xf]
      %v951 = vld [vmem:[%s5 + $0xc] sm:$0xf]
      %v952 = vld [vmem:[%s5 + $0x10] sm:$0xf]
      %v953 = vld [vmem:[%s5 + $0x14] sm:$0xf]
      %v954 = vld [vmem:[%s5 + $0x18] sm:$0xf]
      %v955 = vld [vmem:[%s5 + $0x1c] sm:$0xf]
      %v956 = vpack.c.bf16 %v933, %v932
      %v957 = vpack.c.bf16 %v935, %v934
      %v958 = vpack.c.bf16 %v937, %v936
      %v959 = vpack.c.bf16 %v939, %v938
      %v960 = vld [vmem:[%s6] sm:$0xff]
      %v961 = vld [vmem:[%s6 + $0x8] sm:$0xff]
      %v962 = vld [vmem:[%s6 + $0x10] sm:$0xff]
      %v963 = vld [vmem:[%s6 + $0x18] sm:$0xff]
      %v964 = vld [vmem:[%s6 + $0x20] sm:$0xff]
      %v965 = vld [vmem:[%s6 + $0x28] sm:$0xff]
      %v966 = vld [vmem:[%s6 + $0x30] sm:$0xff]
      %v967 = vld [vmem:[%s6 + $0x38] sm:$0xff]
      %969 = vset.pattern.permute.xlu0 0
      %970 = vperm.xlu0 %969, %v960
      %v971 = vpop.permute.xlu0 %970
      %974 = vset.pattern.permute.xlu0 0
      %975 = vperm.xlu0 %974, %v961
      %v976 = vpop.permute.xlu0 %975
      %979 = vset.pattern.permute.xlu0 0
      %980 = vperm.xlu0 %979, %v962
      %v981 = vpop.permute.xlu0 %980
      %984 = vset.pattern.permute.xlu0 0
      %985 = vperm.xlu0 %984, %v963
      %v986 = vpop.permute.xlu0 %985
      %989 = vset.pattern.permute.xlu0 0
      %990 = vperm.xlu0 %989, %v964
      %v991 = vpop.permute.xlu0 %990
      %994 = vset.pattern.permute.xlu0 0
      %995 = vperm.xlu0 %994, %v965
      %v996 = vpop.permute.xlu0 %995
      %999 = vset.pattern.permute.xlu0 0
      %1000 = vperm.xlu0 %999, %v966
      %v1001 = vpop.permute.xlu0 %1000
      %1004 = vset.pattern.permute.xlu0 0
      %1005 = vperm.xlu0 %1004, %v967
      %v1006 = vpop.permute.xlu0 %1005
      %v1016 = vunpack.c.l.b16 %v948
      %v1017 = vunpack.c.l.b16 %v949
      %v1018 = vunpack.c.l.b16 %v950
      %v1019 = vunpack.c.l.b16 %v951
      %v1020 = vunpack.c.l.b16 %v952
      %v1021 = vunpack.c.l.b16 %v953
      %v1022 = vunpack.c.l.b16 %v954
      %v1023 = vunpack.c.l.b16 %v955
      %v1024 = vpack.c.b16 %v1017, %v1016
      %v1025 = vpack.c.b16 %v1019, %v1018
      %v1026 = vpack.c.b16 %v1021, %v1020
      %v1027 = vpack.c.b16 %v1023, %v1022
      %v1029 = vsel %vm890, %v1024, 0
      %v1032 = vsel %vm890, %v1025, 0
      %v1035 = vsel %vm890, %v1026, 0
      %v1038 = vsel %vm890, %v1027, 0
      %1040 = vmatpush.bf16.msra.mxu0 0
      %1041 = vmatpush.bf16.msra.mxu0 0
      %1042 = vmatpush.bf16.msra.mxu0 0
      %1043 = vmatpush.bf16.msra.mxu0 0
      %1044 = vmatpush.bf16.msra.mxu0 %v959
      %1045 = vmatpush.bf16.msra.mxu0 %v958
      %1046 = vmatpush.bf16.msra.mxu0 %v957
      %1047 = vmatpush.bf16.msra.mxu0 %v956
      %1048 = vmatmul.bf16.gmra.mxu0 %v1029
      %v1049 = vpop.f32.mrf.mxu0
      %v1050 = vadd.f32 %v971, %v1049
      %v1051 = vpop.f32.mrf.mxu0
      %v1052 = vadd.f32 %v976, %v1051
      %1053 = vmatmul.bf16.gmra.mxu0 %v1032
      %v1054 = vpop.f32.mrf.mxu0
      %v1055 = vadd.f32 %v981, %v1054
      %v1056 = vpop.f32.mrf.mxu0
      %v1057 = vadd.f32 %v986, %v1056
      %1058 = vmatmul.bf16.gmra.mxu0 %v1035
      %v1059 = vpop.f32.mrf.mxu0
      %v1060 = vadd.f32 %v991, %v1059
      %v1061 = vpop.f32.mrf.mxu0
      %v1062 = vadd.f32 %v996, %v1061
      %1063 = vmatmul.bf16.gmra.mxu0 %v1038
      %v1064 = vpop.f32.mrf.mxu0
      %v1065 = vadd.f32 %v1001, %v1064
      %v1066 = vpop.f32.mrf.mxu0
      %v1067 = vadd.f32 %v1006, %v1066
      %1068 = vdwg.mxu0
      %v1069 = vmax.f32 %v1050, 0.0
      %v1070 = vmax.f32 %v1052, 0.0
      %v1071 = vmax.f32 %v1055, 0.0
      %v1072 = vmax.f32 %v1057, 0.0
      %v1073 = vmax.f32 %v1060, 0.0
      %v1074 = vmax.f32 %v1062, 0.0
      %v1075 = vmax.f32 %v1065, 0.0
      %v1076 = vmax.f32 %v1067, 0.0
      %v1077 = vld [vmem:[%s7] sm:$0xf]
      %v1078 = vld [vmem:[%s7 + $0x4] sm:$0xf]
      %v1079 = vld [vmem:[%s7 + $0x8] sm:$0xf]
      %v1080 = vld [vmem:[%s7 + $0xc] sm:$0xf]
      %v1081 = vld [vmem:[%s7 + $0x10] sm:$0xf]
      %v1082 = vld [vmem:[%s7 + $0x14] sm:$0xf]
      %v1083 = vld [vmem:[%s7 + $0x18] sm:$0xf]
      %v1084 = vld [vmem:[%s7 + $0x1c] sm:$0xf]
      %v1085 = vld [vmem:[%s7 + $0x20] sm:$0xf]
      %v1086 = vld [vmem:[%s7 + $0x24] sm:$0xf]
      %v1087 = vld [vmem:[%s7 + $0x28] sm:$0xf]
      %v1088 = vld [vmem:[%s7 + $0x2c] sm:$0xf]
      %v1089 = vld [vmem:[%s7 + $0x30] sm:$0xf]
      %v1090 = vld [vmem:[%s7 + $0x34] sm:$0xf]
      %v1091 = vld [vmem:[%s7 + $0x38] sm:$0xf]
      %v1092 = vld [vmem:[%s7 + $0x3c] sm:$0xf]
      %v1093 = vpack.c.bf16 %v1070, %v1069
      %v1094 = vpack.c.bf16 %v1072, %v1071
      %v1095 = vpack.c.bf16 %v1074, %v1073
      %v1096 = vpack.c.bf16 %v1076, %v1075
      %v1097 = vld [vmem:[%s8] sm:$0xff]
      %v1098 = vld [vmem:[%s8 + $0x8] sm:$0xff]
      %v1099 = vld [vmem:[%s8 + $0x10] sm:$0xff]
      %v1100 = vld [vmem:[%s8 + $0x18] sm:$0xff]
      %v1101 = vld [vmem:[%s8 + $0x20] sm:$0xff]
      %v1102 = vld [vmem:[%s8 + $0x28] sm:$0xff]
      %v1103 = vld [vmem:[%s8 + $0x30] sm:$0xff]
      %v1104 = vld [vmem:[%s8 + $0x38] sm:$0xff]
      %v1105 = vld [vmem:[%s8 + $0x40] sm:$0xff]
      %v1106 = vld [vmem:[%s8 + $0x48] sm:$0xff]
      %v1107 = vld [vmem:[%s8 + $0x50] sm:$0xff]
      %v1108 = vld [vmem:[%s8 + $0x58] sm:$0xff]
      %v1109 = vld [vmem:[%s8 + $0x60] sm:$0xff]
      %v1110 = vld [vmem:[%s8 + $0x68] sm:$0xff]
      %v1111 = vld [vmem:[%s8 + $0x70] sm:$0xff]
      %v1112 = vld [vmem:[%s8 + $0x78] sm:$0xff]
      %1114 = vset.pattern.permute.xlu0 0
      %1115 = vperm.xlu0 %1114, %v1097
      %v1116 = vpop.permute.xlu0 %1115
      %1119 = vset.pattern.permute.xlu0 0
      %1120 = vperm.xlu0 %1119, %v1098
      %v1121 = vpop.permute.xlu0 %1120
      %1124 = vset.pattern.permute.xlu0 0
      %1125 = vperm.xlu0 %1124, %v1099
      %v1126 = vpop.permute.xlu0 %1125
      %1129 = vset.pattern.permute.xlu0 0
      %1130 = vperm.xlu0 %1129, %v1100
      %v1131 = vpop.permute.xlu0 %1130
      %1134 = vset.pattern.permute.xlu0 0
      %1135 = vperm.xlu0 %1134, %v1101
      %v1136 = vpop.permute.xlu0 %1135
      %1139 = vset.pattern.permute.xlu0 0
      %1140 = vperm.xlu0 %1139, %v1102
      %v1141 = vpop.permute.xlu0 %1140
      %1144 = vset.pattern.permute.xlu0 0
      %1145 = vperm.xlu0 %1144, %v1103
      %v1146 = vpop.permute.xlu0 %1145
      %1149 = vset.pattern.permute.xlu0 0
      %1150 = vperm.xlu0 %1149, %v1104
      %v1151 = vpop.permute.xlu0 %1150
      %1154 = vset.pattern.permute.xlu0 0
      %1155 = vperm.xlu0 %1154, %v1105
      %v1156 = vpop.permute.xlu0 %1155
      %1159 = vset.pattern.permute.xlu0 0
      %1160 = vperm.xlu0 %1159, %v1106
      %v1161 = vpop.permute.xlu0 %1160
      %1164 = vset.pattern.permute.xlu0 0
      %1165 = vperm.xlu0 %1164, %v1107
      %v1166 = vpop.permute.xlu0 %1165
      %1169 = vset.pattern.permute.xlu0 0
      %1170 = vperm.xlu0 %1169, %v1108
      %v1171 = vpop.permute.xlu0 %1170
      %1174 = vset.pattern.permute.xlu0 0
      %1175 = vperm.xlu0 %1174, %v1109
      %v1176 = vpop.permute.xlu0 %1175
      %1179 = vset.pattern.permute.xlu0 0
      %1180 = vperm.xlu0 %1179, %v1110
      %v1181 = vpop.permute.xlu0 %1180
      %1184 = vset.pattern.permute.xlu0 0
      %1185 = vperm.xlu0 %1184, %v1111
      %v1186 = vpop.permute.xlu0 %1185
      %1189 = vset.pattern.permute.xlu0 0
      %1190 = vperm.xlu0 %1189, %v1112
      %v1191 = vpop.permute.xlu0 %1190
      %v1209 = vunpack.c.l.b16 %v1077
      %v1210 = vunpack.c.l.b16 %v1078
      %v1211 = vunpack.c.l.b16 %v1079
      %v1212 = vunpack.c.l.b16 %v1080
      %v1213 = vunpack.c.l.b16 %v1081
      %v1214 = vunpack.c.l.b16 %v1082
      %v1215 = vunpack.c.l.b16 %v1083
      %v1216 = vunpack.c.l.b16 %v1084
      %v1217 = vunpack.c.l.b16 %v1085
      %v1218 = vunpack.c.l.b16 %v1086
      %v1219 = vunpack.c.l.b16 %v1087
      %v1220 = vunpack.c.l.b16 %v1088
      %v1221 = vunpack.c.l.b16 %v1089
      %v1222 = vunpack.c.l.b16 %v1090
      %v1223 = vunpack.c.l.b16 %v1091
      %v1224 = vunpack.c.l.b16 %v1092
      %v1225 = vpack.c.b16 %v1210, %v1209
      %v1226 = vpack.c.b16 %v1212, %v1211
      %v1227 = vpack.c.b16 %v1214, %v1213
      %v1228 = vpack.c.b16 %v1216, %v1215
      %v1229 = vpack.c.b16 %v1218, %v1217
      %v1230 = vpack.c.b16 %v1220, %v1219
      %v1231 = vpack.c.b16 %v1222, %v1221
      %v1232 = vpack.c.b16 %v1224, %v1223
      %v1234 = vsel %vm890, %v1225, 0
      %v1237 = vsel %vm890, %v1226, 0
      %v1240 = vsel %vm890, %v1227, 0
      %v1243 = vsel %vm890, %v1228, 0
      %v1246 = vsel %vm890, %v1229, 0
      %v1249 = vsel %vm890, %v1230, 0
      %v1252 = vsel %vm890, %v1231, 0
      %v1255 = vsel %vm890, %v1232, 0
      %1257 = vmatpush.bf16.msra.mxu0 0
      %1258 = vmatpush.bf16.msra.mxu0 0
      %1259 = vmatpush.bf16.msra.mxu0 0
      %1260 = vmatpush.bf16.msra.mxu0 0
      %1261 = vmatpush.bf16.msra.mxu0 %v1096
      %1262 = vmatpush.bf16.msra.mxu0 %v1095
      %1263 = vmatpush.bf16.msra.mxu0 %v1094
      %1264 = vmatpush.bf16.msra.mxu0 %v1093
      %1265 = vmatmul.bf16.gmra.mxu0 %v1234
      %v1266 = vpop.f32.mrf.mxu0
      %v1267 = vadd.f32 %v1116, %v1266
      %v1268 = vpop.f32.mrf.mxu0
      %v1269 = vadd.f32 %v1121, %v1268
      %1270 = vmatmul.bf16.gmra.mxu0 %v1237
      %v1271 = vpop.f32.mrf.mxu0
      %v1272 = vadd.f32 %v1126, %v1271
      %v1273 = vpop.f32.mrf.mxu0
      %v1274 = vadd.f32 %v1131, %v1273
      %1275 = vmatmul.bf16.gmra.mxu0 %v1240
      %v1276 = vpop.f32.mrf.mxu0
      %v1277 = vadd.f32 %v1136, %v1276
      %v1278 = vpop.f32.mrf.mxu0
      %v1279 = vadd.f32 %v1141, %v1278
      %1280 = vmatmul.bf16.gmra.mxu0 %v1243
      %v1281 = vpop.f32.mrf.mxu0
      %v1282 = vadd.f32 %v1146, %v1281
      %v1283 = vpop.f32.mrf.mxu0
      %v1284 = vadd.f32 %v1151, %v1283
      %1285 = vmatmul.bf16.gmra.mxu0 %v1246
      %v1286 = vpop.f32.mrf.mxu0
      %v1287 = vadd.f32 %v1156, %v1286
      %v1288 = vpop.f32.mrf.mxu0
      %v1289 = vadd.f32 %v1161, %v1288
      %1290 = vmatmul.bf16.gmra.mxu0 %v1249
      %v1291 = vpop.f32.mrf.mxu0
      %v1292 = vadd.f32 %v1166, %v1291
      %v1293 = vpop.f32.mrf.mxu0
      %v1294 = vadd.f32 %v1171, %v1293
      %1295 = vmatmul.bf16.gmra.mxu0 %v1252
      %v1296 = vpop.f32.mrf.mxu0
      %v1297 = vadd.f32 %v1176, %v1296
      %v1298 = vpop.f32.mrf.mxu0
      %v1299 = vadd.f32 %v1181, %v1298
      %1300 = vmatmul.bf16.gmra.mxu0 %v1255
      %v1301 = vpop.f32.mrf.mxu0
      %v1302 = vadd.f32 %v1186, %v1301
      %v1303 = vpop.f32.mrf.mxu0
      %v1304 = vadd.f32 %v1191, %v1303
      %1305 = vdwg.mxu0
      %v1306 = vmax.f32 %v1267, 0.0
      %v1307 = vmax.f32 %v1269, 0.0
      %v1308 = vmax.f32 %v1272, 0.0
      %v1309 = vmax.f32 %v1274, 0.0
      %v1310 = vmax.f32 %v1277, 0.0
      %v1311 = vmax.f32 %v1279, 0.0
      %v1312 = vmax.f32 %v1282, 0.0
      %v1313 = vmax.f32 %v1284, 0.0
      %v1314 = vmax.f32 %v1287, 0.0
      %v1315 = vmax.f32 %v1289, 0.0
      %v1316 = vmax.f32 %v1292, 0.0
      %v1317 = vmax.f32 %v1294, 0.0
      %v1318 = vmax.f32 %v1297, 0.0
      %v1319 = vmax.f32 %v1299, 0.0
      %v1320 = vmax.f32 %v1302, 0.0
      %v1321 = vmax.f32 %v1304, 0.0
      %v1322 = vld [vmem:[%s9] sm:$0xf]
      %v1323 = vld [vmem:[%s9 + $0x4] sm:$0xf]
      %v1324 = vld [vmem:[%s9 + $0x8] sm:$0xf]
      %v1325 = vld [vmem:[%s9 + $0xc] sm:$0xf]
      %v1326 = vld [vmem:[%s9 + $0x10] sm:$0xf]
      %v1327 = vld [vmem:[%s9 + $0x14] sm:$0xf]
      %v1328 = vld [vmem:[%s9 + $0x18] sm:$0xf]
      %v1329 = vld [vmem:[%s9 + $0x1c] sm:$0xf]
      %v1330 = vld [vmem:[%s9 + $0x20] sm:$0xf]
      %v1331 = vld [vmem:[%s9 + $0x24] sm:$0xf]
      %v1332 = vld [vmem:[%s9 + $0x28] sm:$0xf]
      %v1333 = vld [vmem:[%s9 + $0x2c] sm:$0xf]
      %v1334 = vld [vmem:[%s9 + $0x30] sm:$0xf]
      %v1335 = vld [vmem:[%s9 + $0x34] sm:$0xf]
      %v1336 = vld [vmem:[%s9 + $0x38] sm:$0xf]
      %v1337 = vld [vmem:[%s9 + $0x3c] sm:$0xf]
      %v1338 = vld [vmem:[%s9 + $0x40] sm:$0xf]
      %v1339 = vld [vmem:[%s9 + $0x44] sm:$0xf]
      %v1340 = vld [vmem:[%s9 + $0x48] sm:$0xf]
      %v1341 = vld [vmem:[%s9 + $0x4c] sm:$0xf]
      %v1342 = vld [vmem:[%s9 + $0x50] sm:$0xf]
      %v1343 = vld [vmem:[%s9 + $0x54] sm:$0xf]
      %v1344 = vld [vmem:[%s9 + $0x58] sm:$0xf]
      %v1345 = vld [vmem:[%s9 + $0x5c] sm:$0xf]
      %v1346 = vld [vmem:[%s9 + $0x60] sm:$0xf]
      %v1347 = vld [vmem:[%s9 + $0x64] sm:$0xf]
      %v1348 = vld [vmem:[%s9 + $0x68] sm:$0xf]
      %v1349 = vld [vmem:[%s9 + $0x6c] sm:$0xf]
      %v1350 = vld [vmem:[%s9 + $0x70] sm:$0xf]
      %v1351 = vld [vmem:[%s9 + $0x74] sm:$0xf]
      %v1352 = vld [vmem:[%s9 + $0x78] sm:$0xf]
      %v1353 = vld [vmem:[%s9 + $0x7c] sm:$0xf]
      %v1354 = vld [vmem:[%s9 + $0x80] sm:$0xf]
      %v1355 = vld [vmem:[%s9 + $0x84] sm:$0xf]
      %v1356 = vld [vmem:[%s9 + $0x88] sm:$0xf]
      %v1357 = vld [vmem:[%s9 + $0x8c] sm:$0xf]
      %v1358 = vld [vmem:[%s9 + $0x90] sm:$0xf]
      %v1359 = vld [vmem:[%s9 + $0x94] sm:$0xf]
      %v1360 = vld [vmem:[%s9 + $0x98] sm:$0xf]
      %v1361 = vld [vmem:[%s9 + $0x9c] sm:$0xf]
      %v1362 = vld [vmem:[%s9 + $0xa0] sm:$0xf]
      %v1363 = vld [vmem:[%s9 + $0xa4] sm:$0xf]
      %v1364 = vld [vmem:[%s9 + $0xa8] sm:$0xf]
      %v1365 = vld [vmem:[%s9 + $0xac] sm:$0xf]
      %v1366 = vld [vmem:[%s9 + $0xb0] sm:$0xf]
      %v1367 = vld [vmem:[%s9 + $0xb4] sm:$0xf]
      %v1368 = vld [vmem:[%s9 + $0xb8] sm:$0xf]
      %v1369 = vld [vmem:[%s9 + $0xbc] sm:$0xf]
      %v1370 = vld [vmem:[%s9 + $0xc0] sm:$0xf]
      %v1371 = vld [vmem:[%s9 + $0xc4] sm:$0xf]
      %v1372 = vld [vmem:[%s9 + $0xc8] sm:$0xf]
      %v1373 = vld [vmem:[%s9 + $0xcc] sm:$0xf]
      %v1374 = vld [vmem:[%s9 + $0xd0] sm:$0xf]
      %v1375 = vld [vmem:[%s9 + $0xd4] sm:$0xf]
      %v1376 = vld [vmem:[%s9 + $0xd8] sm:$0xf]
      %v1377 = vld [vmem:[%s9 + $0xdc] sm:$0xf]
      %v1378 = vld [vmem:[%s9 + $0xe0] sm:$0xf]
      %v1379 = vld [vmem:[%s9 + $0xe4] sm:$0xf]
      %v1380 = vld [vmem:[%s9 + $0xe8] sm:$0xf]
      %v1381 = vld [vmem:[%s9 + $0xec] sm:$0xf]
      %v1382 = vld [vmem:[%s9 + $0xf0] sm:$0xf]
      %v1383 = vld [vmem:[%s9 + $0xf4] sm:$0xf]
      %v1384 = vld [vmem:[%s9 + $0xf8] sm:$0xf]
      %v1385 = vld [vmem:[%s9 + $0xfc] sm:$0xf]
      %v1386 = vld [vmem:[%s9 + $0x100] sm:$0xf]
      %v1387 = vld [vmem:[%s9 + $0x104] sm:$0xf]
      %v1388 = vld [vmem:[%s9 + $0x108] sm:$0xf]
      %v1389 = vld [vmem:[%s9 + $0x10c] sm:$0xf]
      %v1390 = vld [vmem:[%s9 + $0x110] sm:$0xf]
      %v1391 = vld [vmem:[%s9 + $0x114] sm:$0xf]
      %v1392 = vld [vmem:[%s9 + $0x118] sm:$0xf]
      %v1393 = vld [vmem:[%s9 + $0x11c] sm:$0xf]
      %v1394 = vld [vmem:[%s9 + $0x120] sm:$0xf]
      %v1395 = vld [vmem:[%s9 + $0x124] sm:$0xf]
      %v1396 = vld [vmem:[%s9 + $0x128] sm:$0xf]
      %v1397 = vld [vmem:[%s9 + $0x12c] sm:$0xf]
      %v1398 = vld [vmem:[%s9 + $0x130] sm:$0xf]
      %v1399 = vld [vmem:[%s9 + $0x134] sm:$0xf]
      %v1400 = vld [vmem:[%s9 + $0x138] sm:$0xf]
      %v1401 = vld [vmem:[%s9 + $0x13c] sm:$0xf]
      %v1402 = vld [vmem:[%s9 + $0x140] sm:$0xf]
      %v1403 = vld [vmem:[%s9 + $0x144] sm:$0xf]
      %v1404 = vld [vmem:[%s9 + $0x148] sm:$0xf]
      %v1405 = vld [vmem:[%s9 + $0x14c] sm:$0xf]
      %v1406 = vld [vmem:[%s9 + $0x150] sm:$0xf]
      %v1407 = vld [vmem:[%s9 + $0x154] sm:$0xf]
      %v1408 = vld [vmem:[%s9 + $0x158] sm:$0xf]
      %v1409 = vld [vmem:[%s9 + $0x15c] sm:$0xf]
      %v1410 = vld [vmem:[%s9 + $0x160] sm:$0xf]
      %v1411 = vld [vmem:[%s9 + $0x164] sm:$0xf]
      %v1412 = vld [vmem:[%s9 + $0x168] sm:$0xf]
      %v1413 = vld [vmem:[%s9 + $0x16c] sm:$0xf]
      %v1414 = vld [vmem:[%s9 + $0x170] sm:$0xf]
      %v1415 = vld [vmem:[%s9 + $0x174] sm:$0xf]
      %v1416 = vld [vmem:[%s9 + $0x178] sm:$0xf]
      %v1417 = vld [vmem:[%s9 + $0x17c] sm:$0xf]
      %v1418 = vld [vmem:[%s9 + $0x180] sm:$0xf]
      %v1419 = vld [vmem:[%s9 + $0x184] sm:$0xf]
      %v1420 = vld [vmem:[%s9 + $0x188] sm:$0xf]
      %v1421 = vld [vmem:[%s9 + $0x18c] sm:$0xf]
      %v1422 = vld [vmem:[%s9 + $0x190] sm:$0xf]
      %v1423 = vld [vmem:[%s9 + $0x194] sm:$0xf]
      %v1424 = vld [vmem:[%s9 + $0x198] sm:$0xf]
      %v1425 = vld [vmem:[%s9 + $0x19c] sm:$0xf]
      %v1426 = vld [vmem:[%s9 + $0x1a0] sm:$0xf]
      %v1427 = vld [vmem:[%s9 + $0x1a4] sm:$0xf]
      %v1428 = vld [vmem:[%s9 + $0x1a8] sm:$0xf]
      %v1429 = vld [vmem:[%s9 + $0x1ac] sm:$0xf]
      %v1430 = vld [vmem:[%s9 + $0x1b0] sm:$0xf]
      %v1431 = vld [vmem:[%s9 + $0x1b4] sm:$0xf]
      %v1432 = vld [vmem:[%s9 + $0x1b8] sm:$0xf]
      %v1433 = vld [vmem:[%s9 + $0x1bc] sm:$0xf]
      %v1434 = vld [vmem:[%s9 + $0x1c0] sm:$0xf]
      %v1435 = vld [vmem:[%s9 + $0x1c4] sm:$0xf]
      %v1436 = vld [vmem:[%s9 + $0x1c8] sm:$0xf]
      %v1437 = vld [vmem:[%s9 + $0x1cc] sm:$0xf]
      %v1438 = vld [vmem:[%s9 + $0x1d0] sm:$0xf]
      %v1439 = vld [vmem:[%s9 + $0x1d4] sm:$0xf]
      %v1440 = vld [vmem:[%s9 + $0x1d8] sm:$0xf]
      %v1441 = vld [vmem:[%s9 + $0x1dc] sm:$0xf]
      %v1442 = vld [vmem:[%s9 + $0x1e0] sm:$0xf]
      %v1443 = vld [vmem:[%s9 + $0x1e4] sm:$0xf]
      %v1444 = vld [vmem:[%s9 + $0x1e8] sm:$0xf]
      %v1445 = vld [vmem:[%s9 + $0x1ec] sm:$0xf]
      %v1446 = vld [vmem:[%s9 + $0x1f0] sm:$0xf]
      %v1447 = vld [vmem:[%s9 + $0x1f4] sm:$0xf]
      %v1448 = vld [vmem:[%s9 + $0x1f8] sm:$0xf]
      %v1449 = vld [vmem:[%s9 + $0x1fc] sm:$0xf]
      %v1450 = vpack.c.bf16 %v1307, %v1306
      %v1451 = vpack.c.bf16 %v1309, %v1308
      %v1452 = vpack.c.bf16 %v1311, %v1310
      %v1453 = vpack.c.bf16 %v1313, %v1312
      %v1454 = vpack.c.bf16 %v1315, %v1314
      %v1455 = vpack.c.bf16 %v1317, %v1316
      %v1456 = vpack.c.bf16 %v1319, %v1318
      %v1457 = vpack.c.bf16 %v1321, %v1320
      %v1586 = vunpack.c.l.b16 %v1322
      %v1587 = vunpack.c.l.b16 %v1323
      %v1588 = vunpack.c.l.b16 %v1324
      %v1589 = vunpack.c.l.b16 %v1325
      %v1590 = vunpack.c.l.b16 %v1326
      %v1591 = vunpack.c.l.b16 %v1327
      %v1592 = vunpack.c.l.b16 %v1328
      %v1593 = vunpack.c.l.b16 %v1329
      %v1594 = vunpack.c.l.b16 %v1330
      %v1595 = vunpack.c.l.b16 %v1331
      %v1596 = vunpack.c.l.b16 %v1332
      %v1597 = vunpack.c.l.b16 %v1333
      %v1598 = vunpack.c.l.b16 %v1334
      %v1599 = vunpack.c.l.b16 %v1335
      %v1600 = vunpack.c.l.b16 %v1336
      %v1601 = vunpack.c.l.b16 %v1337
      %v1602 = vunpack.c.l.b16 %v1338
      %v1603 = vunpack.c.l.b16 %v1339
      %v1604 = vunpack.c.l.b16 %v1340
      %v1605 = vunpack.c.l.b16 %v1341
      %v1606 = vunpack.c.l.b16 %v1342
      %v1607 = vunpack.c.l.b16 %v1343
      %v1608 = vunpack.c.l.b16 %v1344
      %v1609 = vunpack.c.l.b16 %v1345
      %v1610 = vunpack.c.l.b16 %v1346
      %v1611 = vunpack.c.l.b16 %v1347
      %v1612 = vunpack.c.l.b16 %v1348
      %v1613 = vunpack.c.l.b16 %v1349
      %v1614 = vunpack.c.l.b16 %v1350
      %v1615 = vunpack.c.l.b16 %v1351
      %v1616 = vunpack.c.l.b16 %v1352
      %v1617 = vunpack.c.l.b16 %v1353
      %v1618 = vunpack.c.l.b16 %v1354
      %v1619 = vunpack.c.l.b16 %v1355
      %v1620 = vunpack.c.l.b16 %v1356
      %v1621 = vunpack.c.l.b16 %v1357
      %v1622 = vunpack.c.l.b16 %v1358
      %v1623 = vunpack.c.l.b16 %v1359
      %v1624 = vunpack.c.l.b16 %v1360
      %v1625 = vunpack.c.l.b16 %v1361
      %v1626 = vunpack.c.l.b16 %v1362
      %v1627 = vunpack.c.l.b16 %v1363
      %v1628 = vunpack.c.l.b16 %v1364
      %v1629 = vunpack.c.l.b16 %v1365
      %v1630 = vunpack.c.l.b16 %v1366
      %v1631 = vunpack.c.l.b16 %v1367
      %v1632 = vunpack.c.l.b16 %v1368
      %v1633 = vunpack.c.l.b16 %v1369
      %v1634 = vunpack.c.l.b16 %v1370
      %v1635 = vunpack.c.l.b16 %v1371
      %v1636 = vunpack.c.l.b16 %v1372
      %v1637 = vunpack.c.l.b16 %v1373
      %v1638 = vunpack.c.l.b16 %v1374
      %v1639 = vunpack.c.l.b16 %v1375
      %v1640 = vunpack.c.l.b16 %v1376
      %v1641 = vunpack.c.l.b16 %v1377
      %v1642 = vunpack.c.l.b16 %v1378
      %v1643 = vunpack.c.l.b16 %v1379
      %v1644 = vunpack.c.l.b16 %v1380
      %v1645 = vunpack.c.l.b16 %v1381
      %v1646 = vunpack.c.l.b16 %v1382
      %v1647 = vunpack.c.l.b16 %v1383
      %v1648 = vunpack.c.l.b16 %v1384
      %v1649 = vunpack.c.l.b16 %v1385
      %v1650 = vunpack.c.l.b16 %v1386
      %v1651 = vunpack.c.l.b16 %v1387
      %v1652 = vunpack.c.l.b16 %v1388
      %v1653 = vunpack.c.l.b16 %v1389
      %v1654 = vunpack.c.l.b16 %v1390
      %v1655 = vunpack.c.l.b16 %v1391
      %v1656 = vunpack.c.l.b16 %v1392
      %v1657 = vunpack.c.l.b16 %v1393
      %v1658 = vunpack.c.l.b16 %v1394
      %v1659 = vunpack.c.l.b16 %v1395
      %v1660 = vunpack.c.l.b16 %v1396
      %v1661 = vunpack.c.l.b16 %v1397
      %v1662 = vunpack.c.l.b16 %v1398
      %v1663 = vunpack.c.l.b16 %v1399
      %v1664 = vunpack.c.l.b16 %v1400
      %v1665 = vunpack.c.l.b16 %v1401
      %v1666 = vunpack.c.l.b16 %v1402
      %v1667 = vunpack.c.l.b16 %v1403
      %v1668 = vunpack.c.l.b16 %v1404
      %v1669 = vunpack.c.l.b16 %v1405
      %v1670 = vunpack.c.l.b16 %v1406
      %v1671 = vunpack.c.l.b16 %v1407
      %v1672 = vunpack.c.l.b16 %v1408
      %v1673 = vunpack.c.l.b16 %v1409
      %v1674 = vunpack.c.l.b16 %v1410
      %v1675 = vunpack.c.l.b16 %v1411
      %v1676 = vunpack.c.l.b16 %v1412
      %v1677 = vunpack.c.l.b16 %v1413
      %v1678 = vunpack.c.l.b16 %v1414
      %v1679 = vunpack.c.l.b16 %v1415
      %v1680 = vunpack.c.l.b16 %v1416
      %v1681 = vunpack.c.l.b16 %v1417
      %v1682 = vunpack.c.l.b16 %v1418
      %v1683 = vunpack.c.l.b16 %v1419
      %v1684 = vunpack.c.l.b16 %v1420
      %v1685 = vunpack.c.l.b16 %v1421
      %v1686 = vunpack.c.l.b16 %v1422
      %v1687 = vunpack.c.l.b16 %v1423
      %v1688 = vunpack.c.l.b16 %v1424
      %v1689 = vunpack.c.l.b16 %v1425
      %v1690 = vunpack.c.l.b16 %v1426
      %v1691 = vunpack.c.l.b16 %v1427
      %v1692 = vunpack.c.l.b16 %v1428
      %v1693 = vunpack.c.l.b16 %v1429
      %v1694 = vunpack.c.l.b16 %v1430
      %v1695 = vunpack.c.l.b16 %v1431
      %v1696 = vunpack.c.l.b16 %v1432
      %v1697 = vunpack.c.l.b16 %v1433
      %v1698 = vunpack.c.l.b16 %v1434
      %v1699 = vunpack.c.l.b16 %v1435
      %v1700 = vunpack.c.l.b16 %v1436
      %v1701 = vunpack.c.l.b16 %v1437
      %v1702 = vunpack.c.l.b16 %v1438
      %v1703 = vunpack.c.l.b16 %v1439
      %v1704 = vunpack.c.l.b16 %v1440
      %v1705 = vunpack.c.l.b16 %v1441
      %v1706 = vunpack.c.l.b16 %v1442
      %v1707 = vunpack.c.l.b16 %v1443
      %v1708 = vunpack.c.l.b16 %v1444
      %v1709 = vunpack.c.l.b16 %v1445
      %v1710 = vunpack.c.l.b16 %v1446
      %v1711 = vunpack.c.l.b16 %v1447
      %v1712 = vunpack.c.l.b16 %v1448
      %v1713 = vunpack.c.l.b16 %v1449
      %v1714 = vpack.c.b16 %v1587, %v1586
      %v1715 = vpack.c.b16 %v1589, %v1588
      %v1716 = vpack.c.b16 %v1591, %v1590
      %v1717 = vpack.c.b16 %v1593, %v1592
      %v1718 = vpack.c.b16 %v1595, %v1594
      %v1719 = vpack.c.b16 %v1597, %v1596
      %v1720 = vpack.c.b16 %v1599, %v1598
      %v1721 = vpack.c.b16 %v1601, %v1600
      %v1722 = vpack.c.b16 %v1603, %v1602
      %v1723 = vpack.c.b16 %v1605, %v1604
      %v1724 = vpack.c.b16 %v1607, %v1606
      %v1725 = vpack.c.b16 %v1609, %v1608
      %v1726 = vpack.c.b16 %v1611, %v1610
      %v1727 = vpack.c.b16 %v1613, %v1612
      %v1728 = vpack.c.b16 %v1615, %v1614
      %v1729 = vpack.c.b16 %v1617, %v1616
      %v1730 = vpack.c.b16 %v1619, %v1618
      %v1731 = vpack.c.b16 %v1621, %v1620
      %v1732 = vpack.c.b16 %v1623, %v1622
      %v1733 = vpack.c.b16 %v1625, %v1624
      %v1734 = vpack.c.b16 %v1627, %v1626
      %v1735 = vpack.c.b16 %v1629, %v1628
      %v1736 = vpack.c.b16 %v1631, %v1630
      %v1737 = vpack.c.b16 %v1633, %v1632
      %v1738 = vpack.c.b16 %v1635, %v1634
      %v1739 = vpack.c.b16 %v1637, %v1636
      %v1740 = vpack.c.b16 %v1639, %v1638
      %v1741 = vpack.c.b16 %v1641, %v1640
      %v1742 = vpack.c.b16 %v1643, %v1642
      %v1743 = vpack.c.b16 %v1645, %v1644
      %v1744 = vpack.c.b16 %v1647, %v1646
      %v1745 = vpack.c.b16 %v1649, %v1648
      %v1746 = vpack.c.b16 %v1651, %v1650
      %v1747 = vpack.c.b16 %v1653, %v1652
      %v1748 = vpack.c.b16 %v1655, %v1654
      %v1749 = vpack.c.b16 %v1657, %v1656
      %v1750 = vpack.c.b16 %v1659, %v1658
      %v1751 = vpack.c.b16 %v1661, %v1660
      %v1752 = vpack.c.b16 %v1663, %v1662
      %v1753 = vpack.c.b16 %v1665, %v1664
      %v1754 = vpack.c.b16 %v1667, %v1666
      %v1755 = vpack.c.b16 %v1669, %v1668
      %v1756 = vpack.c.b16 %v1671, %v1670
      %v1757 = vpack.c.b16 %v1673, %v1672
      %v1758 = vpack.c.b16 %v1675, %v1674
      %v1759 = vpack.c.b16 %v1677, %v1676
      %v1760 = vpack.c.b16 %v1679, %v1678
      %v1761 = vpack.c.b16 %v1681, %v1680
      %v1762 = vpack.c.b16 %v1683, %v1682
      %v1763 = vpack.c.b16 %v1685, %v1684
      %v1764 = vpack.c.b16 %v1687, %v1686
      %v1765 = vpack.c.b16 %v1689, %v1688
      %v1766 = vpack.c.b16 %v1691, %v1690
      %v1767 = vpack.c.b16 %v1693, %v1692
      %v1768 = vpack.c.b16 %v1695, %v1694
      %v1769 = vpack.c.b16 %v1697, %v1696
      %v1770 = vpack.c.b16 %v1699, %v1698
      %v1771 = vpack.c.b16 %v1701, %v1700
      %v1772 = vpack.c.b16 %v1703, %v1702
      %v1773 = vpack.c.b16 %v1705, %v1704
      %v1774 = vpack.c.b16 %v1707, %v1706
      %v1775 = vpack.c.b16 %v1709, %v1708
      %v1776 = vpack.c.b16 %v1711, %v1710
      %v1777 = vpack.c.b16 %v1713, %v1712
      %1842 = vmatpush.bf16.msra.mxu0 %v1457
      %1843 = vmatpush.bf16.msra.mxu0 %v1456
      %1844 = vmatpush.bf16.msra.mxu0 %v1455
      %1845 = vmatpush.bf16.msra.mxu0 %v1454
      %1846 = vmatpush.bf16.msra.mxu0 %v1453
      %1847 = vmatpush.bf16.msra.mxu0 %v1452
      %1848 = vmatpush.bf16.msra.mxu0 %v1451
      %1849 = vmatpush.bf16.msra.mxu0 %v1450
      %1850 = vmatmul.bf16.gmra.mxu0 %v1714
      %v1851 = vpop.f32.mrf.mxu0
      %v1852 = vadd.f32 0.0, %v1851
      %v1853 = vpop.f32.mrf.mxu0
      %v1854 = vadd.f32 0.0, %v1853
      %1855 = vmatmul.bf16.gmra.mxu0 %v1715
      %v1856 = vpop.f32.mrf.mxu0
      %v1857 = vadd.f32 0.0, %v1856
      %v1858 = vpop.f32.mrf.mxu0
      %v1859 = vadd.f32 0.0, %v1858
      %1860 = vmatmul.bf16.gmra.mxu0 %v1716
      %v1861 = vpop.f32.mrf.mxu0
      %v1862 = vadd.f32 0.0, %v1861
      %v1863 = vpop.f32.mrf.mxu0
      %v1864 = vadd.f32 0.0, %v1863
      %1865 = vmatmul.bf16.gmra.mxu0 %v1717
      %v1866 = vpop.f32.mrf.mxu0
      %v1867 = vadd.f32 0.0, %v1866
      %v1868 = vpop.f32.mrf.mxu0
      %v1869 = vadd.f32 0.0, %v1868
      %1870 = vmatmul.bf16.gmra.mxu0 %v1718
      %v1871 = vpop.f32.mrf.mxu0
      %v1872 = vadd.f32 0.0, %v1871
      %v1873 = vpop.f32.mrf.mxu0
      %v1874 = vadd.f32 0.0, %v1873
      %1875 = vmatmul.bf16.gmra.mxu0 %v1719
      %v1876 = vpop.f32.mrf.mxu0
      %v1877 = vadd.f32 0.0, %v1876
      %v1878 = vpop.f32.mrf.mxu0
      %v1879 = vadd.f32 0.0, %v1878
      %1880 = vmatmul.bf16.gmra.mxu0 %v1720
      %v1881 = vpop.f32.mrf.mxu0
      %v1882 = vadd.f32 0.0, %v1881
      %v1883 = vpop.f32.mrf.mxu0
      %v1884 = vadd.f32 0.0, %v1883
      %1885 = vmatmul.bf16.gmra.mxu0 %v1721
      %v1886 = vpop.f32.mrf.mxu0
      %v1887 = vadd.f32 0.0, %v1886
      %v1888 = vpop.f32.mrf.mxu0
      %v1889 = vadd.f32 0.0, %v1888
      %1890 = vmatmul.bf16.gmra.mxu0 %v1722
      %v1891 = vpop.f32.mrf.mxu0
      %v1892 = vadd.f32 0.0, %v1891
      %v1893 = vpop.f32.mrf.mxu0
      %v1894 = vadd.f32 0.0, %v1893
      %1895 = vmatmul.bf16.gmra.mxu0 %v1723
      %v1896 = vpop.f32.mrf.mxu0
      %v1897 = vadd.f32 0.0, %v1896
      %v1898 = vpop.f32.mrf.mxu0
      %v1899 = vadd.f32 0.0, %v1898
      %1900 = vmatmul.bf16.gmra.mxu0 %v1724
      %v1901 = vpop.f32.mrf.mxu0
      %v1902 = vadd.f32 0.0, %v1901
      %v1903 = vpop.f32.mrf.mxu0
      %v1904 = vadd.f32 0.0, %v1903
      %1905 = vmatmul.bf16.gmra.mxu0 %v1725
      %v1906 = vpop.f32.mrf.mxu0
      %v1907 = vadd.f32 0.0, %v1906
      %v1908 = vpop.f32.mrf.mxu0
      %v1909 = vadd.f32 0.0, %v1908
      %1910 = vmatmul.bf16.gmra.mxu0 %v1726
      %v1911 = vpop.f32.mrf.mxu0
      %v1912 = vadd.f32 0.0, %v1911
      %v1913 = vpop.f32.mrf.mxu0
      %v1914 = vadd.f32 0.0, %v1913
      %1915 = vmatmul.bf16.gmra.mxu0 %v1727
      %v1916 = vpop.f32.mrf.mxu0
      %v1917 = vadd.f32 0.0, %v1916
      %v1918 = vpop.f32.mrf.mxu0
      %v1919 = vadd.f32 0.0, %v1918
      %1920 = vmatmul.bf16.gmra.mxu0 %v1728
      %v1921 = vpop.f32.mrf.mxu0
      %v1922 = vadd.f32 0.0, %v1921
      %v1923 = vpop.f32.mrf.mxu0
      %v1924 = vadd.f32 0.0, %v1923
      %1925 = vmatmul.bf16.gmra.mxu0 %v1729
      %v1926 = vpop.f32.mrf.mxu0
      %v1927 = vadd.f32 0.0, %v1926
      %v1928 = vpop.f32.mrf.mxu0
      %v1929 = vadd.f32 0.0, %v1928
      %1930 = vmatmul.bf16.gmra.mxu0 %v1730
      %v1931 = vpop.f32.mrf.mxu0
      %v1932 = vadd.f32 0.0, %v1931
      %v1933 = vpop.f32.mrf.mxu0
      %v1934 = vadd.f32 0.0, %v1933
      %1935 = vmatmul.bf16.gmra.mxu0 %v1731
      %v1936 = vpop.f32.mrf.mxu0
      %v1937 = vadd.f32 0.0, %v1936
      %v1938 = vpop.f32.mrf.mxu0
      %v1939 = vadd.f32 0.0, %v1938
      %1940 = vmatmul.bf16.gmra.mxu0 %v1732
      %v1941 = vpop.f32.mrf.mxu0
      %v1942 = vadd.f32 0.0, %v1941
      %v1943 = vpop.f32.mrf.mxu0
      %v1944 = vadd.f32 0.0, %v1943
      %1945 = vmatmul.bf16.gmra.mxu0 %v1733
      %v1946 = vpop.f32.mrf.mxu0
      %v1947 = vadd.f32 0.0, %v1946
      %v1948 = vpop.f32.mrf.mxu0
      %v1949 = vadd.f32 0.0, %v1948
      %1950 = vmatmul.bf16.gmra.mxu0 %v1734
      %v1951 = vpop.f32.mrf.mxu0
      %v1952 = vadd.f32 0.0, %v1951
      %v1953 = vpop.f32.mrf.mxu0
      %v1954 = vadd.f32 0.0, %v1953
      %1955 = vmatmul.bf16.gmra.mxu0 %v1735
      %v1956 = vpop.f32.mrf.mxu0
      %v1957 = vadd.f32 0.0, %v1956
      %v1958 = vpop.f32.mrf.mxu0
      %v1959 = vadd.f32 0.0, %v1958
      %1960 = vmatmul.bf16.gmra.mxu0 %v1736
      %v1961 = vpop.f32.mrf.mxu0
      %v1962 = vadd.f32 0.0, %v1961
      %v1963 = vpop.f32.mrf.mxu0
      %v1964 = vadd.f32 0.0, %v1963
      %1965 = vmatmul.bf16.gmra.mxu0 %v1737
      %v1966 = vpop.f32.mrf.mxu0
      %v1967 = vadd.f32 0.0, %v1966
      %v1968 = vpop.f32.mrf.mxu0
      %v1969 = vadd.f32 0.0, %v1968
      %1970 = vmatmul.bf16.gmra.mxu0 %v1738
      %v1971 = vpop.f32.mrf.mxu0
      %v1972 = vadd.f32 0.0, %v1971
      %v1973 = vpop.f32.mrf.mxu0
      %v1974 = vadd.f32 0.0, %v1973
      %1975 = vmatmul.bf16.gmra.mxu0 %v1739
      %v1976 = vpop.f32.mrf.mxu0
      %v1977 = vadd.f32 0.0, %v1976
      %v1978 = vpop.f32.mrf.mxu0
      %v1979 = vadd.f32 0.0, %v1978
      %1980 = vmatmul.bf16.gmra.mxu0 %v1740
      %v1981 = vpop.f32.mrf.mxu0
      %v1982 = vadd.f32 0.0, %v1981
      %v1983 = vpop.f32.mrf.mxu0
      %v1984 = vadd.f32 0.0, %v1983
      %1985 = vmatmul.bf16.gmra.mxu0 %v1741
      %v1986 = vpop.f32.mrf.mxu0
      %v1987 = vadd.f32 0.0, %v1986
      %v1988 = vpop.f32.mrf.mxu0
      %v1989 = vadd.f32 0.0, %v1988
      %1990 = vmatmul.bf16.gmra.mxu0 %v1742
      %v1991 = vpop.f32.mrf.mxu0
      %v1992 = vadd.f32 0.0, %v1991
      %v1993 = vpop.f32.mrf.mxu0
      %v1994 = vadd.f32 0.0, %v1993
      %1995 = vmatmul.bf16.gmra.mxu0 %v1743
      %v1996 = vpop.f32.mrf.mxu0
      %v1997 = vadd.f32 0.0, %v1996
      %v1998 = vpop.f32.mrf.mxu0
      %v1999 = vadd.f32 0.0, %v1998
      %2000 = vmatmul.bf16.gmra.mxu0 %v1744
      %v2001 = vpop.f32.mrf.mxu0
      %v2002 = vadd.f32 0.0, %v2001
      %v2003 = vpop.f32.mrf.mxu0
      %v2004 = vadd.f32 0.0, %v2003
      %2005 = vmatmul.bf16.gmra.mxu0 %v1745
      %v2006 = vpop.f32.mrf.mxu0
      %v2007 = vadd.f32 0.0, %v2006
      %v2008 = vpop.f32.mrf.mxu0
      %v2009 = vadd.f32 0.0, %v2008
      %2010 = vmatmul.bf16.gmra.mxu0 %v1746
      %v2011 = vpop.f32.mrf.mxu0
      %v2012 = vadd.f32 0.0, %v2011
      %v2013 = vpop.f32.mrf.mxu0
      %v2014 = vadd.f32 0.0, %v2013
      %2015 = vmatmul.bf16.gmra.mxu0 %v1747
      %v2016 = vpop.f32.mrf.mxu0
      %v2017 = vadd.f32 0.0, %v2016
      %v2018 = vpop.f32.mrf.mxu0
      %v2019 = vadd.f32 0.0, %v2018
      %2020 = vmatmul.bf16.gmra.mxu0 %v1748
      %v2021 = vpop.f32.mrf.mxu0
      %v2022 = vadd.f32 0.0, %v2021
      %v2023 = vpop.f32.mrf.mxu0
      %v2024 = vadd.f32 0.0, %v2023
      %2025 = vmatmul.bf16.gmra.mxu0 %v1749
      %v2026 = vpop.f32.mrf.mxu0
      %v2027 = vadd.f32 0.0, %v2026
      %v2028 = vpop.f32.mrf.mxu0
      %v2029 = vadd.f32 0.0, %v2028
      %2030 = vmatmul.bf16.gmra.mxu0 %v1750
      %v2031 = vpop.f32.mrf.mxu0
      %v2032 = vadd.f32 0.0, %v2031
      %v2033 = vpop.f32.mrf.mxu0
      %v2034 = vadd.f32 0.0, %v2033
      %2035 = vmatmul.bf16.gmra.mxu0 %v1751
      %v2036 = vpop.f32.mrf.mxu0
      %v2037 = vadd.f32 0.0, %v2036
      %v2038 = vpop.f32.mrf.mxu0
      %v2039 = vadd.f32 0.0, %v2038
      %2040 = vmatmul.bf16.gmra.mxu0 %v1752
      %v2041 = vpop.f32.mrf.mxu0
      %v2042 = vadd.f32 0.0, %v2041
      %v2043 = vpop.f32.mrf.mxu0
      %v2044 = vadd.f32 0.0, %v2043
      %2045 = vmatmul.bf16.gmra.mxu0 %v1753
      %v2046 = vpop.f32.mrf.mxu0
      %v2047 = vadd.f32 0.0, %v2046
      %v2048 = vpop.f32.mrf.mxu0
      %v2049 = vadd.f32 0.0, %v2048
      %2050 = vmatmul.bf16.gmra.mxu0 %v1754
      %v2051 = vpop.f32.mrf.mxu0
      %v2052 = vadd.f32 0.0, %v2051
      %v2053 = vpop.f32.mrf.mxu0
      %v2054 = vadd.f32 0.0, %v2053
      %2055 = vmatmul.bf16.gmra.mxu0 %v1755
      %v2056 = vpop.f32.mrf.mxu0
      %v2057 = vadd.f32 0.0, %v2056
      %v2058 = vpop.f32.mrf.mxu0
      %v2059 = vadd.f32 0.0, %v2058
      %2060 = vmatmul.bf16.gmra.mxu0 %v1756
      %v2061 = vpop.f32.mrf.mxu0
      %v2062 = vadd.f32 0.0, %v2061
      %v2063 = vpop.f32.mrf.mxu0
      %v2064 = vadd.f32 0.0, %v2063
      %2065 = vmatmul.bf16.gmra.mxu0 %v1757
      %v2066 = vpop.f32.mrf.mxu0
      %v2067 = vadd.f32 0.0, %v2066
      %v2068 = vpop.f32.mrf.mxu0
      %v2069 = vadd.f32 0.0, %v2068
      %2070 = vmatmul.bf16.gmra.mxu0 %v1758
      %v2071 = vpop.f32.mrf.mxu0
      %v2072 = vadd.f32 0.0, %v2071
      %v2073 = vpop.f32.mrf.mxu0
      %v2074 = vadd.f32 0.0, %v2073
      %2075 = vmatmul.bf16.gmra.mxu0 %v1759
      %v2076 = vpop.f32.mrf.mxu0
      %v2077 = vadd.f32 0.0, %v2076
      %v2078 = vpop.f32.mrf.mxu0
      %v2079 = vadd.f32 0.0, %v2078
      %2080 = vmatmul.bf16.gmra.mxu0 %v1760
      %v2081 = vpop.f32.mrf.mxu0
      %v2082 = vadd.f32 0.0, %v2081
      %v2083 = vpop.f32.mrf.mxu0
      %v2084 = vadd.f32 0.0, %v2083
      %2085 = vmatmul.bf16.gmra.mxu0 %v1761
      %v2086 = vpop.f32.mrf.mxu0
      %v2087 = vadd.f32 0.0, %v2086
      %v2088 = vpop.f32.mrf.mxu0
      %v2089 = vadd.f32 0.0, %v2088
      %2090 = vmatmul.bf16.gmra.mxu0 %v1762
      %v2091 = vpop.f32.mrf.mxu0
      %v2092 = vadd.f32 0.0, %v2091
      %v2093 = vpop.f32.mrf.mxu0
      %v2094 = vadd.f32 0.0, %v2093
      %2095 = vmatmul.bf16.gmra.mxu0 %v1763
      %v2096 = vpop.f32.mrf.mxu0
      %v2097 = vadd.f32 0.0, %v2096
      %v2098 = vpop.f32.mrf.mxu0
      %v2099 = vadd.f32 0.0, %v2098
      %2100 = vmatmul.bf16.gmra.mxu0 %v1764
      %v2101 = vpop.f32.mrf.mxu0
      %v2102 = vadd.f32 0.0, %v2101
      %v2103 = vpop.f32.mrf.mxu0
      %v2104 = vadd.f32 0.0, %v2103
      %2105 = vmatmul.bf16.gmra.mxu0 %v1765
      %v2106 = vpop.f32.mrf.mxu0
      %v2107 = vadd.f32 0.0, %v2106
      %v2108 = vpop.f32.mrf.mxu0
      %v2109 = vadd.f32 0.0, %v2108
      %2110 = vmatmul.bf16.gmra.mxu0 %v1766
      %v2111 = vpop.f32.mrf.mxu0
      %v2112 = vadd.f32 0.0, %v2111
      %v2113 = vpop.f32.mrf.mxu0
      %v2114 = vadd.f32 0.0, %v2113
      %2115 = vmatmul.bf16.gmra.mxu0 %v1767
      %v2116 = vpop.f32.mrf.mxu0
      %v2117 = vadd.f32 0.0, %v2116
      %v2118 = vpop.f32.mrf.mxu0
      %v2119 = vadd.f32 0.0, %v2118
      %2120 = vmatmul.bf16.gmra.mxu0 %v1768
      %v2121 = vpop.f32.mrf.mxu0
      %v2122 = vadd.f32 0.0, %v2121
      %v2123 = vpop.f32.mrf.mxu0
      %v2124 = vadd.f32 0.0, %v2123
      %2125 = vmatmul.bf16.gmra.mxu0 %v1769
      %v2126 = vpop.f32.mrf.mxu0
      %v2127 = vadd.f32 0.0, %v2126
      %v2128 = vpop.f32.mrf.mxu0
      %v2129 = vadd.f32 0.0, %v2128
      %2130 = vmatmul.bf16.gmra.mxu0 %v1770
      %v2131 = vpop.f32.mrf.mxu0
      %v2132 = vadd.f32 0.0, %v2131
      %v2133 = vpop.f32.mrf.mxu0
      %v2134 = vadd.f32 0.0, %v2133
      %2135 = vmatmul.bf16.gmra.mxu0 %v1771
      %v2136 = vpop.f32.mrf.mxu0
      %v2137 = vadd.f32 0.0, %v2136
      %v2138 = vpop.f32.mrf.mxu0
      %v2139 = vadd.f32 0.0, %v2138
      %2140 = vmatmul.bf16.gmra.mxu0 %v1772
      %v2141 = vpop.f32.mrf.mxu0
      %v2142 = vadd.f32 0.0, %v2141
      %v2143 = vpop.f32.mrf.mxu0
      %v2144 = vadd.f32 0.0, %v2143
      %2145 = vmatmul.bf16.gmra.mxu0 %v1773
      %v2146 = vpop.f32.mrf.mxu0
      %v2147 = vadd.f32 0.0, %v2146
      %v2148 = vpop.f32.mrf.mxu0
      %v2149 = vadd.f32 0.0, %v2148
      %2150 = vmatmul.bf16.gmra.mxu0 %v1774
      %v2151 = vpop.f32.mrf.mxu0
      %v2152 = vadd.f32 0.0, %v2151
      %v2153 = vpop.f32.mrf.mxu0
      %v2154 = vadd.f32 0.0, %v2153
      %2155 = vmatmul.bf16.gmra.mxu0 %v1775
      %v2156 = vpop.f32.mrf.mxu0
      %v2157 = vadd.f32 0.0, %v2156
      %v2158 = vpop.f32.mrf.mxu0
      %v2159 = vadd.f32 0.0, %v2158
      %2160 = vmatmul.bf16.gmra.mxu0 %v1776
      %v2161 = vpop.f32.mrf.mxu0
      %v2162 = vadd.f32 0.0, %v2161
      %v2163 = vpop.f32.mrf.mxu0
      %v2164 = vadd.f32 0.0, %v2163
      %2165 = vmatmul.bf16.gmra.mxu0 %v1777
      %v2166 = vpop.f32.mrf.mxu0
      %v2167 = vadd.f32 0.0, %v2166
      %v2168 = vpop.f32.mrf.mxu0
      %v2169 = vadd.f32 0.0, %v2168
      %2170 = vdwg.mxu0
      %s2171 = sadd.s32 %s29, %s30
      %s2172 = smul.u32 %s2171, 128
      %s2173 = sadd.s32 %s2172, 128
      %p2174 = scmp.le.s32.totalorder %s2173, 16
      // Predicated region
      $region65: #{pointnet_feature.1} parent=59 // pred_check
        %p2175 = pneg %p2174
      $region66: #{pointnet_feature.1} parent=59 // pred_check_branch
        %2177 = sbr.rel (%p2175) target = $region68
      $region67: #{pointnet_feature.1} parent=59 // pred_region
        %v2178 = vld [vmem:[%s456] sm:$0xff]
        %v2179 = vld [vmem:[%s456 + $0x8] sm:$0xff]
        %v2180 = vld [vmem:[%s456 + $0x10] sm:$0xff]
        %v2181 = vld [vmem:[%s456 + $0x18] sm:$0xff]
        %v2182 = vld [vmem:[%s456 + $0x20] sm:$0xff]
        %v2183 = vld [vmem:[%s456 + $0x28] sm:$0xff]
        %v2184 = vld [vmem:[%s456 + $0x30] sm:$0xff]
        %v2185 = vld [vmem:[%s456 + $0x38] sm:$0xff]
        %v2186 = vld [vmem:[%s456 + $0x40] sm:$0xff]
        %v2187 = vld [vmem:[%s456 + $0x48] sm:$0xff]
        %v2188 = vld [vmem:[%s456 + $0x50] sm:$0xff]
        %v2189 = vld [vmem:[%s456 + $0x58] sm:$0xff]
        %v2190 = vld [vmem:[%s456 + $0x60] sm:$0xff]
        %v2191 = vld [vmem:[%s456 + $0x68] sm:$0xff]
        %v2192 = vld [vmem:[%s456 + $0x70] sm:$0xff]
        %v2193 = vld [vmem:[%s456 + $0x78] sm:$0xff]
        %v2194 = vld [vmem:[%s456 + $0x80] sm:$0xff]
        %v2195 = vld [vmem:[%s456 + $0x88] sm:$0xff]
        %v2196 = vld [vmem:[%s456 + $0x90] sm:$0xff]
        %v2197 = vld [vmem:[%s456 + $0x98] sm:$0xff]
        %v2198 = vld [vmem:[%s456 + $0xa0] sm:$0xff]
        %v2199 = vld [vmem:[%s456 + $0xa8] sm:$0xff]
        %v2200 = vld [vmem:[%s456 + $0xb0] sm:$0xff]
        %v2201 = vld [vmem:[%s456 + $0xb8] sm:$0xff]
        %v2202 = vld [vmem:[%s456 + $0xc0] sm:$0xff]
        %v2203 = vld [vmem:[%s456 + $0xc8] sm:$0xff]
        %v2204 = vld [vmem:[%s456 + $0xd0] sm:$0xff]
        %v2205 = vld [vmem:[%s456 + $0xd8] sm:$0xff]
        %v2206 = vld [vmem:[%s456 + $0xe0] sm:$0xff]
        %v2207 = vld [vmem:[%s456 + $0xe8] sm:$0xff]
        %v2208 = vld [vmem:[%s456 + $0xf0] sm:$0xff]
        %v2209 = vld [vmem:[%s456 + $0xf8] sm:$0xff]
        %v2210 = vld [vmem:[%s456 + $0x100] sm:$0xff]
        %v2211 = vld [vmem:[%s456 + $0x108] sm:$0xff]
        %v2212 = vld [vmem:[%s456 + $0x110] sm:$0xff]
        %v2213 = vld [vmem:[%s456 + $0x118] sm:$0xff]
        %v2214 = vld [vmem:[%s456 + $0x120] sm:$0xff]
        %v2215 = vld [vmem:[%s456 + $0x128] sm:$0xff]
        %v2216 = vld [vmem:[%s456 + $0x130] sm:$0xff]
        %v2217 = vld [vmem:[%s456 + $0x138] sm:$0xff]
        %v2218 = vld [vmem:[%s456 + $0x140] sm:$0xff]
        %v2219 = vld [vmem:[%s456 + $0x148] sm:$0xff]
        %v2220 = vld [vmem:[%s456 + $0x150] sm:$0xff]
        %v2221 = vld [vmem:[%s456 + $0x158] sm:$0xff]
        %v2222 = vld [vmem:[%s456 + $0x160] sm:$0xff]
        %v2223 = vld [vmem:[%s456 + $0x168] sm:$0xff]
        %v2224 = vld [vmem:[%s456 + $0x170] sm:$0xff]
        %v2225 = vld [vmem:[%s456 + $0x178] sm:$0xff]
        %v2226 = vld [vmem:[%s456 + $0x180] sm:$0xff]
        %v2227 = vld [vmem:[%s456 + $0x188] sm:$0xff]
        %v2228 = vld [vmem:[%s456 + $0x190] sm:$0xff]
        %v2229 = vld [vmem:[%s456 + $0x198] sm:$0xff]
        %v2230 = vld [vmem:[%s456 + $0x1a0] sm:$0xff]
        %v2231 = vld [vmem:[%s456 + $0x1a8] sm:$0xff]
        %v2232 = vld [vmem:[%s456 + $0x1b0] sm:$0xff]
        %v2233 = vld [vmem:[%s456 + $0x1b8] sm:$0xff]
        %v2234 = vld [vmem:[%s456 + $0x1c0] sm:$0xff]
        %v2235 = vld [vmem:[%s456 + $0x1c8] sm:$0xff]
        %v2236 = vld [vmem:[%s456 + $0x1d0] sm:$0xff]
        %v2237 = vld [vmem:[%s456 + $0x1d8] sm:$0xff]
        %v2238 = vld [vmem:[%s456 + $0x1e0] sm:$0xff]
        %v2239 = vld [vmem:[%s456 + $0x1e8] sm:$0xff]
        %v2240 = vld [vmem:[%s456 + $0x1f0] sm:$0xff]
        %v2241 = vld [vmem:[%s456 + $0x1f8] sm:$0xff]
        %v2242 = vld [vmem:[%s456 + $0x200] sm:$0xff]
        %v2243 = vld [vmem:[%s456 + $0x208] sm:$0xff]
        %v2244 = vld [vmem:[%s456 + $0x210] sm:$0xff]
        %v2245 = vld [vmem:[%s456 + $0x218] sm:$0xff]
        %v2246 = vld [vmem:[%s456 + $0x220] sm:$0xff]
        %v2247 = vld [vmem:[%s456 + $0x228] sm:$0xff]
        %v2248 = vld [vmem:[%s456 + $0x230] sm:$0xff]
        %v2249 = vld [vmem:[%s456 + $0x238] sm:$0xff]
        %v2250 = vld [vmem:[%s456 + $0x240] sm:$0xff]
        %v2251 = vld [vmem:[%s456 + $0x248] sm:$0xff]
        %v2252 = vld [vmem:[%s456 + $0x250] sm:$0xff]
        %v2253 = vld [vmem:[%s456 + $0x258] sm:$0xff]
        %v2254 = vld [vmem:[%s456 + $0x260] sm:$0xff]
        %v2255 = vld [vmem:[%s456 + $0x268] sm:$0xff]
        %v2256 = vld [vmem:[%s456 + $0x270] sm:$0xff]
        %v2257 = vld [vmem:[%s456 + $0x278] sm:$0xff]
        %v2258 = vld [vmem:[%s456 + $0x280] sm:$0xff]
        %v2259 = vld [vmem:[%s456 + $0x288] sm:$0xff]
        %v2260 = vld [vmem:[%s456 + $0x290] sm:$0xff]
        %v2261 = vld [vmem:[%s456 + $0x298] sm:$0xff]
        %v2262 = vld [vmem:[%s456 + $0x2a0] sm:$0xff]
        %v2263 = vld [vmem:[%s456 + $0x2a8] sm:$0xff]
        %v2264 = vld [vmem:[%s456 + $0x2b0] sm:$0xff]
        %v2265 = vld [vmem:[%s456 + $0x2b8] sm:$0xff]
        %v2266 = vld [vmem:[%s456 + $0x2c0] sm:$0xff]
        %v2267 = vld [vmem:[%s456 + $0x2c8] sm:$0xff]
        %v2268 = vld [vmem:[%s456 + $0x2d0] sm:$0xff]
        %v2269 = vld [vmem:[%s456 + $0x2d8] sm:$0xff]
        %v2270 = vld [vmem:[%s456 + $0x2e0] sm:$0xff]
        %v2271 = vld [vmem:[%s456 + $0x2e8] sm:$0xff]
        %v2272 = vld [vmem:[%s456 + $0x2f0] sm:$0xff]
        %v2273 = vld [vmem:[%s456 + $0x2f8] sm:$0xff]
        %v2274 = vld [vmem:[%s456 + $0x300] sm:$0xff]
        %v2275 = vld [vmem:[%s456 + $0x308] sm:$0xff]
        %v2276 = vld [vmem:[%s456 + $0x310] sm:$0xff]
        %v2277 = vld [vmem:[%s456 + $0x318] sm:$0xff]
        %v2278 = vld [vmem:[%s456 + $0x320] sm:$0xff]
        %v2279 = vld [vmem:[%s456 + $0x328] sm:$0xff]
        %v2280 = vld [vmem:[%s456 + $0x330] sm:$0xff]
        %v2281 = vld [vmem:[%s456 + $0x338] sm:$0xff]
        %v2282 = vld [vmem:[%s456 + $0x340] sm:$0xff]
        %v2283 = vld [vmem:[%s456 + $0x348] sm:$0xff]
        %v2284 = vld [vmem:[%s456 + $0x350] sm:$0xff]
        %v2285 = vld [vmem:[%s456 + $0x358] sm:$0xff]
        %v2286 = vld [vmem:[%s456 + $0x360] sm:$0xff]
        %v2287 = vld [vmem:[%s456 + $0x368] sm:$0xff]
        %v2288 = vld [vmem:[%s456 + $0x370] sm:$0xff]
        %v2289 = vld [vmem:[%s456 + $0x378] sm:$0xff]
        %v2290 = vld [vmem:[%s456 + $0x380] sm:$0xff]
        %v2291 = vld [vmem:[%s456 + $0x388] sm:$0xff]
        %v2292 = vld [vmem:[%s456 + $0x390] sm:$0xff]
        %v2293 = vld [vmem:[%s456 + $0x398] sm:$0xff]
        %v2294 = vld [vmem:[%s456 + $0x3a0] sm:$0xff]
        %v2295 = vld [vmem:[%s456 + $0x3a8] sm:$0xff]
        %v2296 = vld [vmem:[%s456 + $0x3b0] sm:$0xff]
        %v2297 = vld [vmem:[%s456 + $0x3b8] sm:$0xff]
        %v2298 = vld [vmem:[%s456 + $0x3c0] sm:$0xff]
        %v2299 = vld [vmem:[%s456 + $0x3c8] sm:$0xff]
        %v2300 = vld [vmem:[%s456 + $0x3d0] sm:$0xff]
        %v2301 = vld [vmem:[%s456 + $0x3d8] sm:$0xff]
        %v2302 = vld [vmem:[%s456 + $0x3e0] sm:$0xff]
        %v2303 = vld [vmem:[%s456 + $0x3e8] sm:$0xff]
        %v2304 = vld [vmem:[%s456 + $0x3f0] sm:$0xff]
        %v2305 = vld [vmem:[%s456 + $0x3f8] sm:$0xff]
        %v2306 = vmax.f32 %v2178, %v1852
        %v2307 = vmax.f32 %v2179, %v1854
        %v2308 = vmax.f32 %v2180, %v1857
        %v2309 = vmax.f32 %v2181, %v1859
        %v2310 = vmax.f32 %v2182, %v1862
        %v2311 = vmax.f32 %v2183, %v1864
        %v2312 = vmax.f32 %v2184, %v1867
        %v2313 = vmax.f32 %v2185, %v1869
        %v2314 = vmax.f32 %v2186, %v1872
        %v2315 = vmax.f32 %v2187, %v1874
        %v2316 = vmax.f32 %v2188, %v1877
        %v2317 = vmax.f32 %v2189, %v1879
        %v2318 = vmax.f32 %v2190, %v1882
        %v2319 = vmax.f32 %v2191, %v1884
        %v2320 = vmax.f32 %v2192, %v1887
        %v2321 = vmax.f32 %v2193, %v1889
        %v2322 = vmax.f32 %v2194, %v1892
        %v2323 = vmax.f32 %v2195, %v1894
        %v2324 = vmax.f32 %v2196, %v1897
        %v2325 = vmax.f32 %v2197, %v1899
        %v2326 = vmax.f32 %v2198, %v1902
        %v2327 = vmax.f32 %v2199, %v1904
        %v2328 = vmax.f32 %v2200, %v1907
        %v2329 = vmax.f32 %v2201, %v1909
        %v2330 = vmax.f32 %v2202, %v1912
        %v2331 = vmax.f32 %v2203, %v1914
        %v2332 = vmax.f32 %v2204, %v1917
        %v2333 = vmax.f32 %v2205, %v1919
        %v2334 = vmax.f32 %v2206, %v1922
        %v2335 = vmax.f32 %v2207, %v1924
        %v2336 = vmax.f32 %v2208, %v1927
        %v2337 = vmax.f32 %v2209, %v1929
        %v2338 = vmax.f32 %v2210, %v1932
        %v2339 = vmax.f32 %v2211, %v1934
        %v2340 = vmax.f32 %v2212, %v1937
        %v2341 = vmax.f32 %v2213, %v1939
        %v2342 = vmax.f32 %v2214, %v1942
        %v2343 = vmax.f32 %v2215, %v1944
        %v2344 = vmax.f32 %v2216, %v1947
        %v2345 = vmax.f32 %v2217, %v1949
        %v2346 = vmax.f32 %v2218, %v1952
        %v2347 = vmax.f32 %v2219, %v1954
        %v2348 = vmax.f32 %v2220, %v1957
        %v2349 = vmax.f32 %v2221, %v1959
        %v2350 = vmax.f32 %v2222, %v1962
        %v2351 = vmax.f32 %v2223, %v1964
        %v2352 = vmax.f32 %v2224, %v1967
        %v2353 = vmax.f32 %v2225, %v1969
        %v2354 = vmax.f32 %v2226, %v1972
        %v2355 = vmax.f32 %v2227, %v1974
        %v2356 = vmax.f32 %v2228, %v1977
        %v2357 = vmax.f32 %v2229, %v1979
        %v2358 = vmax.f32 %v2230, %v1982
        %v2359 = vmax.f32 %v2231, %v1984
        %v2360 = vmax.f32 %v2232, %v1987
        %v2361 = vmax.f32 %v2233, %v1989
        %v2362 = vmax.f32 %v2234, %v1992
        %v2363 = vmax.f32 %v2235, %v1994
        %v2364 = vmax.f32 %v2236, %v1997
        %v2365 = vmax.f32 %v2237, %v1999
        %v2366 = vmax.f32 %v2238, %v2002
        %v2367 = vmax.f32 %v2239, %v2004
        %v2368 = vmax.f32 %v2240, %v2007
        %v2369 = vmax.f32 %v2241, %v2009
        %v2370 = vmax.f32 %v2242, %v2012
        %v2371 = vmax.f32 %v2243, %v2014
        %v2372 = vmax.f32 %v2244, %v2017
        %v2373 = vmax.f32 %v2245, %v2019
        %v2374 = vmax.f32 %v2246, %v2022
        %v2375 = vmax.f32 %v2247, %v2024
        %v2376 = vmax.f32 %v2248, %v2027
        %v2377 = vmax.f32 %v2249, %v2029
        %v2378 = vmax.f32 %v2250, %v2032
        %v2379 = vmax.f32 %v2251, %v2034
        %v2380 = vmax.f32 %v2252, %v2037
        %v2381 = vmax.f32 %v2253, %v2039
        %v2382 = vmax.f32 %v2254, %v2042
        %v2383 = vmax.f32 %v2255, %v2044
        %v2384 = vmax.f32 %v2256, %v2047
        %v2385 = vmax.f32 %v2257, %v2049
        %v2386 = vmax.f32 %v2258, %v2052
        %v2387 = vmax.f32 %v2259, %v2054
        %v2388 = vmax.f32 %v2260, %v2057
        %v2389 = vmax.f32 %v2261, %v2059
        %v2390 = vmax.f32 %v2262, %v2062
        %v2391 = vmax.f32 %v2263, %v2064
        %v2392 = vmax.f32 %v2264, %v2067
        %v2393 = vmax.f32 %v2265, %v2069
        %v2394 = vmax.f32 %v2266, %v2072
        %v2395 = vmax.f32 %v2267, %v2074
        %v2396 = vmax.f32 %v2268, %v2077
        %v2397 = vmax.f32 %v2269, %v2079
        %v2398 = vmax.f32 %v2270, %v2082
        %v2399 = vmax.f32 %v2271, %v2084
        %v2400 = vmax.f32 %v2272, %v2087
        %v2401 = vmax.f32 %v2273, %v2089
        %v2402 = vmax.f32 %v2274, %v2092
        %v2403 = vmax.f32 %v2275, %v2094
        %v2404 = vmax.f32 %v2276, %v2097
        %v2405 = vmax.f32 %v2277, %v2099
        %v2406 = vmax.f32 %v2278, %v2102
        %v2407 = vmax.f32 %v2279, %v2104
        %v2408 = vmax.f32 %v2280, %v2107
        %v2409 = vmax.f32 %v2281, %v2109
        %v2410 = vmax.f32 %v2282, %v2112
        %v2411 = vmax.f32 %v2283, %v2114
        %v2412 = vmax.f32 %v2284, %v2117
        %v2413 = vmax.f32 %v2285, %v2119
        %v2414 = vmax.f32 %v2286, %v2122
        %v2415 = vmax.f32 %v2287, %v2124
        %v2416 = vmax.f32 %v2288, %v2127
        %v2417 = vmax.f32 %v2289, %v2129
        %v2418 = vmax.f32 %v2290, %v2132
        %v2419 = vmax.f32 %v2291, %v2134
        %v2420 = vmax.f32 %v2292, %v2137
        %v2421 = vmax.f32 %v2293, %v2139
        %v2422 = vmax.f32 %v2294, %v2142
        %v2423 = vmax.f32 %v2295, %v2144
        %v2424 = vmax.f32 %v2296, %v2147
        %v2425 = vmax.f32 %v2297, %v2149
        %v2426 = vmax.f32 %v2298, %v2152
        %v2427 = vmax.f32 %v2299, %v2154
        %v2428 = vmax.f32 %v2300, %v2157
        %v2429 = vmax.f32 %v2301, %v2159
        %v2430 = vmax.f32 %v2302, %v2162
        %v2431 = vmax.f32 %v2303, %v2164
        %v2432 = vmax.f32 %v2304, %v2167
        %v2433 = vmax.f32 %v2305, %v2169
        %2434 = vst [vmem:[%s456] sm:$0xff] %v2306
        %2435 = vst [vmem:[%s456 + $0x8] sm:$0xff] %v2307
        %2436 = vst [vmem:[%s456 + $0x10] sm:$0xff] %v2308
        %2437 = vst [vmem:[%s456 + $0x18] sm:$0xff] %v2309
        %2438 = vst [vmem:[%s456 + $0x20] sm:$0xff] %v2310
        %2439 = vst [vmem:[%s456 + $0x28] sm:$0xff] %v2311
        %2440 = vst [vmem:[%s456 + $0x30] sm:$0xff] %v2312
        %2441 = vst [vmem:[%s456 + $0x38] sm:$0xff] %v2313
        %2442 = vst [vmem:[%s456 + $0x40] sm:$0xff] %v2314
        %2443 = vst [vmem:[%s456 + $0x48] sm:$0xff] %v2315
        %2444 = vst [vmem:[%s456 + $0x50] sm:$0xff] %v2316
        %2445 = vst [vmem:[%s456 + $0x58] sm:$0xff] %v2317
        %2446 = vst [vmem:[%s456 + $0x60] sm:$0xff] %v2318
        %2447 = vst [vmem:[%s456 + $0x68] sm:$0xff] %v2319
        %2448 = vst [vmem:[%s456 + $0x70] sm:$0xff] %v2320
        %2449 = vst [vmem:[%s456 + $0x78] sm:$0xff] %v2321
        %2450 = vst [vmem:[%s456 + $0x80] sm:$0xff] %v2322
        %2451 = vst [vmem:[%s456 + $0x88] sm:$0xff] %v2323
        %2452 = vst [vmem:[%s456 + $0x90] sm:$0xff] %v2324
        %2453 = vst [vmem:[%s456 + $0x98] sm:$0xff] %v2325
        %2454 = vst [vmem:[%s456 + $0xa0] sm:$0xff] %v2326
        %2455 = vst [vmem:[%s456 + $0xa8] sm:$0xff] %v2327
        %2456 = vst [vmem:[%s456 + $0xb0] sm:$0xff] %v2328
        %2457 = vst [vmem:[%s456 + $0xb8] sm:$0xff] %v2329
        %2458 = vst [vmem:[%s456 + $0xc0] sm:$0xff] %v2330
        %2459 = vst [vmem:[%s456 + $0xc8] sm:$0xff] %v2331
        %2460 = vst [vmem:[%s456 + $0xd0] sm:$0xff] %v2332
        %2461 = vst [vmem:[%s456 + $0xd8] sm:$0xff] %v2333
        %2462 = vst [vmem:[%s456 + $0xe0] sm:$0xff] %v2334
        %2463 = vst [vmem:[%s456 + $0xe8] sm:$0xff] %v2335
        %2464 = vst [vmem:[%s456 + $0xf0] sm:$0xff] %v2336
        %2465 = vst [vmem:[%s456 + $0xf8] sm:$0xff] %v2337
        %2466 = vst [vmem:[%s456 + $0x100] sm:$0xff] %v2338
        %2467 = vst [vmem:[%s456 + $0x108] sm:$0xff] %v2339
        %2468 = vst [vmem:[%s456 + $0x110] sm:$0xff] %v2340
        %2469 = vst [vmem:[%s456 + $0x118] sm:$0xff] %v2341
        %2470 = vst [vmem:[%s456 + $0x120] sm:$0xff] %v2342
        %2471 = vst [vmem:[%s456 + $0x128] sm:$0xff] %v2343
        %2472 = vst [vmem:[%s456 + $0x130] sm:$0xff] %v2344
        %2473 = vst [vmem:[%s456 + $0x138] sm:$0xff] %v2345
        %2474 = vst [vmem:[%s456 + $0x140] sm:$0xff] %v2346
        %2475 = vst [vmem:[%s456 + $0x148] sm:$0xff] %v2347
        %2476 = vst [vmem:[%s456 + $0x150] sm:$0xff] %v2348
        %2477 = vst [vmem:[%s456 + $0x158] sm:$0xff] %v2349
        %2478 = vst [vmem:[%s456 + $0x160] sm:$0xff] %v2350
        %2479 = vst [vmem:[%s456 + $0x168] sm:$0xff] %v2351
        %2480 = vst [vmem:[%s456 + $0x170] sm:$0xff] %v2352
        %2481 = vst [vmem:[%s456 + $0x178] sm:$0xff] %v2353
        %2482 = vst [vmem:[%s456 + $0x180] sm:$0xff] %v2354
        %2483 = vst [vmem:[%s456 + $0x188] sm:$0xff] %v2355
        %2484 = vst [vmem:[%s456 + $0x190] sm:$0xff] %v2356
        %2485 = vst [vmem:[%s456 + $0x198] sm:$0xff] %v2357
        %2486 = vst [vmem:[%s456 + $0x1a0] sm:$0xff] %v2358
        %2487 = vst [vmem:[%s456 + $0x1a8] sm:$0xff] %v2359
        %2488 = vst [vmem:[%s456 + $0x1b0] sm:$0xff] %v2360
        %2489 = vst [vmem:[%s456 + $0x1b8] sm:$0xff] %v2361
        %2490 = vst [vmem:[%s456 + $0x1c0] sm:$0xff] %v2362
        %2491 = vst [vmem:[%s456 + $0x1c8] sm:$0xff] %v2363
        %2492 = vst [vmem:[%s456 + $0x1d0] sm:$0xff] %v2364
        %2493 = vst [vmem:[%s456 + $0x1d8] sm:$0xff] %v2365
        %2494 = vst [vmem:[%s456 + $0x1e0] sm:$0xff] %v2366
        %2495 = vst [vmem:[%s456 + $0x1e8] sm:$0xff] %v2367
        %2496 = vst [vmem:[%s456 + $0x1f0] sm:$0xff] %v2368
        %2497 = vst [vmem:[%s456 + $0x1f8] sm:$0xff] %v2369
        %2498 = vst [vmem:[%s456 + $0x200] sm:$0xff] %v2370
        %2499 = vst [vmem:[%s456 + $0x208] sm:$0xff] %v2371
        %2500 = vst [vmem:[%s456 + $0x210] sm:$0xff] %v2372
        %2501 = vst [vmem:[%s456 + $0x218] sm:$0xff] %v2373
        %2502 = vst [vmem:[%s456 + $0x220] sm:$0xff] %v2374
        %2503 = vst [vmem:[%s456 + $0x228] sm:$0xff] %v2375
        %2504 = vst [vmem:[%s456 + $0x230] sm:$0xff] %v2376
        %2505 = vst [vmem:[%s456 + $0x238] sm:$0xff] %v2377
        %2506 = vst [vmem:[%s456 + $0x240] sm:$0xff] %v2378
        %2507 = vst [vmem:[%s456 + $0x248] sm:$0xff] %v2379
        %2508 = vst [vmem:[%s456 + $0x250] sm:$0xff] %v2380
        %2509 = vst [vmem:[%s456 + $0x258] sm:$0xff] %v2381
        %2510 = vst [vmem:[%s456 + $0x260] sm:$0xff] %v2382
        %2511 = vst [vmem:[%s456 + $0x268] sm:$0xff] %v2383
        %2512 = vst [vmem:[%s456 + $0x270] sm:$0xff] %v2384
        %2513 = vst [vmem:[%s456 + $0x278] sm:$0xff] %v2385
        %2514 = vst [vmem:[%s456 + $0x280] sm:$0xff] %v2386
        %2515 = vst [vmem:[%s456 + $0x288] sm:$0xff] %v2387
        %2516 = vst [vmem:[%s456 + $0x290] sm:$0xff] %v2388
        %2517 = vst [vmem:[%s456 + $0x298] sm:$0xff] %v2389
        %2518 = vst [vmem:[%s456 + $0x2a0] sm:$0xff] %v2390
        %2519 = vst [vmem:[%s456 + $0x2a8] sm:$0xff] %v2391
        %2520 = vst [vmem:[%s456 + $0x2b0] sm:$0xff] %v2392
        %2521 = vst [vmem:[%s456 + $0x2b8] sm:$0xff] %v2393
        %2522 = vst [vmem:[%s456 + $0x2c0] sm:$0xff] %v2394
        %2523 = vst [vmem:[%s456 + $0x2c8] sm:$0xff] %v2395
        %2524 = vst [vmem:[%s456 + $0x2d0] sm:$0xff] %v2396
        %2525 = vst [vmem:[%s456 + $0x2d8] sm:$0xff] %v2397
        %2526 = vst [vmem:[%s456 + $0x2e0] sm:$0xff] %v2398
        %2527 = vst [vmem:[%s456 + $0x2e8] sm:$0xff] %v2399
        %2528 = vst [vmem:[%s456 + $0x2f0] sm:$0xff] %v2400
        %2529 = vst [vmem:[%s456 + $0x2f8] sm:$0xff] %v2401
        %2530 = vst [vmem:[%s456 + $0x300] sm:$0xff] %v2402
        %2531 = vst [vmem:[%s456 + $0x308] sm:$0xff] %v2403
        %2532 = vst [vmem:[%s456 + $0x310] sm:$0xff] %v2404
        %2533 = vst [vmem:[%s456 + $0x318] sm:$0xff] %v2405
        %2534 = vst [vmem:[%s456 + $0x320] sm:$0xff] %v2406
        %2535 = vst [vmem:[%s456 + $0x328] sm:$0xff] %v2407
        %2536 = vst [vmem:[%s456 + $0x330] sm:$0xff] %v2408
        %2537 = vst [vmem:[%s456 + $0x338] sm:$0xff] %v2409
        %2538 = vst [vmem:[%s456 + $0x340] sm:$0xff] %v2410
        %2539 = vst [vmem:[%s456 + $0x348] sm:$0xff] %v2411
        %2540 = vst [vmem:[%s456 + $0x350] sm:$0xff] %v2412
        %2541 = vst [vmem:[%s456 + $0x358] sm:$0xff] %v2413
        %2542 = vst [vmem:[%s456 + $0x360] sm:$0xff] %v2414
        %2543 = vst [vmem:[%s456 + $0x368] sm:$0xff] %v2415
        %2544 = vst [vmem:[%s456 + $0x370] sm:$0xff] %v2416
        %2545 = vst [vmem:[%s456 + $0x378] sm:$0xff] %v2417
        %2546 = vst [vmem:[%s456 + $0x380] sm:$0xff] %v2418
        %2547 = vst [vmem:[%s456 + $0x388] sm:$0xff] %v2419
        %2548 = vst [vmem:[%s456 + $0x390] sm:$0xff] %v2420
        %2549 = vst [vmem:[%s456 + $0x398] sm:$0xff] %v2421
        %2550 = vst [vmem:[%s456 + $0x3a0] sm:$0xff] %v2422
        %2551 = vst [vmem:[%s456 + $0x3a8] sm:$0xff] %v2423
        %2552 = vst [vmem:[%s456 + $0x3b0] sm:$0xff] %v2424
        %2553 = vst [vmem:[%s456 + $0x3b8] sm:$0xff] %v2425
        %2554 = vst [vmem:[%s456 + $0x3c0] sm:$0xff] %v2426
        %2555 = vst [vmem:[%s456 + $0x3c8] sm:$0xff] %v2427
        %2556 = vst [vmem:[%s456 + $0x3d0] sm:$0xff] %v2428
        %2557 = vst [vmem:[%s456 + $0x3d8] sm:$0xff] %v2429
        %2558 = vst [vmem:[%s456 + $0x3e0] sm:$0xff] %v2430
        %2559 = vst [vmem:[%s456 + $0x3e8] sm:$0xff] %v2431
        %2560 = vst [vmem:[%s456 + $0x3f0] sm:$0xff] %v2432
        %2561 = vst [vmem:[%s456 + $0x3f8] sm:$0xff] %v2433
      $region68: #{pointnet_feature.1} parent=59 // pred_fallthru
        _
      %p2562 = scmp.gt.s32.totalorder %s2173, 16
      // Predicated region
      $region69: #{pointnet_feature.1} parent=59 // pred_check
        %p2563 = pneg %p2562
      $region70: #{pointnet_feature.1} parent=59 // pred_check_branch
        %2565 = sbr.rel (%p2563) target = $region72
      $region71: #{pointnet_feature.1} parent=59 // pred_region
        %v2566 = vlaneseq
        %v2567 = vand.u32 %v2566, 127
        %v2568 = vstv %s2172
        %v2569 = vadd.s32 %v2568, %v2567
        %vm2570 = vcmp.lt.s32.totalorder %v2569, 16
        %v2571 = vsel %vm2570, 1, 0
        %vm2572 = vcmp.eq.s32.totalorder %v2571, 1
        %v2573 = vsel %vm2572, %v1852, -inf
        %v2574 = vsel %vm2572, %v1854, -inf
        %v2575 = vsel %vm2572, %v1857, -inf
        %v2576 = vsel %vm2572, %v1859, -inf
        %v2577 = vsel %vm2572, %v1862, -inf
        %v2578 = vsel %vm2572, %v1864, -inf
        %v2579 = vsel %vm2572, %v1867, -inf
        %v2580 = vsel %vm2572, %v1869, -inf
        %v2581 = vsel %vm2572, %v1872, -inf
        %v2582 = vsel %vm2572, %v1874, -inf
        %v2583 = vsel %vm2572, %v1877, -inf
        %v2584 = vsel %vm2572, %v1879, -inf
        %v2585 = vsel %vm2572, %v1882, -inf
        %v2586 = vsel %vm2572, %v1884, -inf
        %v2587 = vsel %vm2572, %v1887, -inf
        %v2588 = vsel %vm2572, %v1889, -inf
        %v2589 = vsel %vm2572, %v1892, -inf
        %v2590 = vsel %vm2572, %v1894, -inf
        %v2591 = vsel %vm2572, %v1897, -inf
        %v2592 = vsel %vm2572, %v1899, -inf
        %v2593 = vsel %vm2572, %v1902, -inf
        %v2594 = vsel %vm2572, %v1904, -inf
        %v2595 = vsel %vm2572, %v1907, -inf
        %v2596 = vsel %vm2572, %v1909, -inf
        %v2597 = vsel %vm2572, %v1912, -inf
        %v2598 = vsel %vm2572, %v1914, -inf
        %v2599 = vsel %vm2572, %v1917, -inf
        %v2600 = vsel %vm2572, %v1919, -inf
        %v2601 = vsel %vm2572, %v1922, -inf
        %v2602 = vsel %vm2572, %v1924, -inf
        %v2603 = vsel %vm2572, %v1927, -inf
        %v2604 = vsel %vm2572, %v1929, -inf
        %v2605 = vsel %vm2572, %v1932, -inf
        %v2606 = vsel %vm2572, %v1934, -inf
        %v2607 = vsel %vm2572, %v1937, -inf
        %v2608 = vsel %vm2572, %v1939, -inf
        %v2609 = vsel %vm2572, %v1942, -inf
        %v2610 = vsel %vm2572, %v1944, -inf
        %v2611 = vsel %vm2572, %v1947, -inf
        %v2612 = vsel %vm2572, %v1949, -inf
        %v2613 = vsel %vm2572, %v1952, -inf
        %v2614 = vsel %vm2572, %v1954, -inf
        %v2615 = vsel %vm2572, %v1957, -inf
        %v2616 = vsel %vm2572, %v1959, -inf
        %v2617 = vsel %vm2572, %v1962, -inf
        %v2618 = vsel %vm2572, %v1964, -inf
        %v2619 = vsel %vm2572, %v1967, -inf
        %v2620 = vsel %vm2572, %v1969, -inf
        %v2621 = vsel %vm2572, %v1972, -inf
        %v2622 = vsel %vm2572, %v1974, -inf
        %v2623 = vsel %vm2572, %v1977, -inf
        %v2624 = vsel %vm2572, %v1979, -inf
        %v2625 = vsel %vm2572, %v1982, -inf
        %v2626 = vsel %vm2572, %v1984, -inf
        %v2627 = vsel %vm2572, %v1987, -inf
        %v2628 = vsel %vm2572, %v1989, -inf
        %v2629 = vsel %vm2572, %v1992, -inf
        %v2630 = vsel %vm2572, %v1994, -inf
        %v2631 = vsel %vm2572, %v1997, -inf
        %v2632 = vsel %vm2572, %v1999, -inf
        %v2633 = vsel %vm2572, %v2002, -inf
        %v2634 = vsel %vm2572, %v2004, -inf
        %v2635 = vsel %vm2572, %v2007, -inf
        %v2636 = vsel %vm2572, %v2009, -inf
        %v2637 = vsel %vm2572, %v2012, -inf
        %v2638 = vsel %vm2572, %v2014, -inf
        %v2639 = vsel %vm2572, %v2017, -inf
        %v2640 = vsel %vm2572, %v2019, -inf
        %v2641 = vsel %vm2572, %v2022, -inf
        %v2642 = vsel %vm2572, %v2024, -inf
        %v2643 = vsel %vm2572, %v2027, -inf
        %v2644 = vsel %vm2572, %v2029, -inf
        %v2645 = vsel %vm2572, %v2032, -inf
        %v2646 = vsel %vm2572, %v2034, -inf
        %v2647 = vsel %vm2572, %v2037, -inf
        %v2648 = vsel %vm2572, %v2039, -inf
        %v2649 = vsel %vm2572, %v2042, -inf
        %v2650 = vsel %vm2572, %v2044, -inf
        %v2651 = vsel %vm2572, %v2047, -inf
        %v2652 = vsel %vm2572, %v2049, -inf
        %v2653 = vsel %vm2572, %v2052, -inf
        %v2654 = vsel %vm2572, %v2054, -inf
        %v2655 = vsel %vm2572, %v2057, -inf
        %v2656 = vsel %vm2572, %v2059, -inf
        %v2657 = vsel %vm2572, %v2062, -inf
        %v2658 = vsel %vm2572, %v2064, -inf
        %v2659 = vsel %vm2572, %v2067, -inf
        %v2660 = vsel %vm2572, %v2069, -inf
        %v2661 = vsel %vm2572, %v2072, -inf
        %v2662 = vsel %vm2572, %v2074, -inf
        %v2663 = vsel %vm2572, %v2077, -inf
        %v2664 = vsel %vm2572, %v2079, -inf
        %v2665 = vsel %vm2572, %v2082, -inf
        %v2666 = vsel %vm2572, %v2084, -inf
        %v2667 = vsel %vm2572, %v2087, -inf
        %v2668 = vsel %vm2572, %v2089, -inf
        %v2669 = vsel %vm2572, %v2092, -inf
        %v2670 = vsel %vm2572, %v2094, -inf
        %v2671 = vsel %vm2572, %v2097, -inf
        %v2672 = vsel %vm2572, %v2099, -inf
        %v2673 = vsel %vm2572, %v2102, -inf
        %v2674 = vsel %vm2572, %v2104, -inf
        %v2675 = vsel %vm2572, %v2107, -inf
        %v2676 = vsel %vm2572, %v2109, -inf
        %v2677 = vsel %vm2572, %v2112, -inf
        %v2678 = vsel %vm2572, %v2114, -inf
        %v2679 = vsel %vm2572, %v2117, -inf
        %v2680 = vsel %vm2572, %v2119, -inf
        %v2681 = vsel %vm2572, %v2122, -inf
        %v2682 = vsel %vm2572, %v2124, -inf
        %v2683 = vsel %vm2572, %v2127, -inf
        %v2684 = vsel %vm2572, %v2129, -inf
        %v2685 = vsel %vm2572, %v2132, -inf
        %v2686 = vsel %vm2572, %v2134, -inf
        %v2687 = vsel %vm2572, %v2137, -inf
        %v2688 = vsel %vm2572, %v2139, -inf
        %v2689 = vsel %vm2572, %v2142, -inf
        %v2690 = vsel %vm2572, %v2144, -inf
        %v2691 = vsel %vm2572, %v2147, -inf
        %v2692 = vsel %vm2572, %v2149, -inf
        %v2693 = vsel %vm2572, %v2152, -inf
        %v2694 = vsel %vm2572, %v2154, -inf
        %v2695 = vsel %vm2572, %v2157, -inf
        %v2696 = vsel %vm2572, %v2159, -inf
        %v2697 = vsel %vm2572, %v2162, -inf
        %v2698 = vsel %vm2572, %v2164, -inf
        %v2699 = vsel %vm2572, %v2167, -inf
        %v2700 = vsel %vm2572, %v2169, -inf
        %v2701 = vld [vmem:[%s456] sm:$0xff]
        %v2702 = vld [vmem:[%s456 + $0x8] sm:$0xff]
        %v2703 = vld [vmem:[%s456 + $0x10] sm:$0xff]
        %v2704 = vld [vmem:[%s456 + $0x18] sm:$0xff]
        %v2705 = vld [vmem:[%s456 + $0x20] sm:$0xff]
        %v2706 = vld [vmem:[%s456 + $0x28] sm:$0xff]
        %v2707 = vld [vmem:[%s456 + $0x30] sm:$0xff]
        %v2708 = vld [vmem:[%s456 + $0x38] sm:$0xff]
        %v2709 = vld [vmem:[%s456 + $0x40] sm:$0xff]
        %v2710 = vld [vmem:[%s456 + $0x48] sm:$0xff]
        %v2711 = vld [vmem:[%s456 + $0x50] sm:$0xff]
        %v2712 = vld [vmem:[%s456 + $0x58] sm:$0xff]
        %v2713 = vld [vmem:[%s456 + $0x60] sm:$0xff]
        %v2714 = vld [vmem:[%s456 + $0x68] sm:$0xff]
        %v2715 = vld [vmem:[%s456 + $0x70] sm:$0xff]
        %v2716 = vld [vmem:[%s456 + $0x78] sm:$0xff]
        %v2717 = vld [vmem:[%s456 + $0x80] sm:$0xff]
        %v2718 = vld [vmem:[%s456 + $0x88] sm:$0xff]
        %v2719 = vld [vmem:[%s456 + $0x90] sm:$0xff]
        %v2720 = vld [vmem:[%s456 + $0x98] sm:$0xff]
        %v2721 = vld [vmem:[%s456 + $0xa0] sm:$0xff]
        %v2722 = vld [vmem:[%s456 + $0xa8] sm:$0xff]
        %v2723 = vld [vmem:[%s456 + $0xb0] sm:$0xff]
        %v2724 = vld [vmem:[%s456 + $0xb8] sm:$0xff]
        %v2725 = vld [vmem:[%s456 + $0xc0] sm:$0xff]
        %v2726 = vld [vmem:[%s456 + $0xc8] sm:$0xff]
        %v2727 = vld [vmem:[%s456 + $0xd0] sm:$0xff]
        %v2728 = vld [vmem:[%s456 + $0xd8] sm:$0xff]
        %v2729 = vld [vmem:[%s456 + $0xe0] sm:$0xff]
        %v2730 = vld [vmem:[%s456 + $0xe8] sm:$0xff]
        %v2731 = vld [vmem:[%s456 + $0xf0] sm:$0xff]
        %v2732 = vld [vmem:[%s456 + $0xf8] sm:$0xff]
        %v2733 = vld [vmem:[%s456 + $0x100] sm:$0xff]
        %v2734 = vld [vmem:[%s456 + $0x108] sm:$0xff]
        %v2735 = vld [vmem:[%s456 + $0x110] sm:$0xff]
        %v2736 = vld [vmem:[%s456 + $0x118] sm:$0xff]
        %v2737 = vld [vmem:[%s456 + $0x120] sm:$0xff]
        %v2738 = vld [vmem:[%s456 + $0x128] sm:$0xff]
        %v2739 = vld [vmem:[%s456 + $0x130] sm:$0xff]
        %v2740 = vld [vmem:[%s456 + $0x138] sm:$0xff]
        %v2741 = vld [vmem:[%s456 + $0x140] sm:$0xff]
        %v2742 = vld [vmem:[%s456 + $0x148] sm:$0xff]
        %v2743 = vld [vmem:[%s456 + $0x150] sm:$0xff]
        %v2744 = vld [vmem:[%s456 + $0x158] sm:$0xff]
        %v2745 = vld [vmem:[%s456 + $0x160] sm:$0xff]
        %v2746 = vld [vmem:[%s456 + $0x168] sm:$0xff]
        %v2747 = vld [vmem:[%s456 + $0x170] sm:$0xff]
        %v2748 = vld [vmem:[%s456 + $0x178] sm:$0xff]
        %v2749 = vld [vmem:[%s456 + $0x180] sm:$0xff]
        %v2750 = vld [vmem:[%s456 + $0x188] sm:$0xff]
        %v2751 = vld [vmem:[%s456 + $0x190] sm:$0xff]
        %v2752 = vld [vmem:[%s456 + $0x198] sm:$0xff]
        %v2753 = vld [vmem:[%s456 + $0x1a0] sm:$0xff]
        %v2754 = vld [vmem:[%s456 + $0x1a8] sm:$0xff]
        %v2755 = vld [vmem:[%s456 + $0x1b0] sm:$0xff]
        %v2756 = vld [vmem:[%s456 + $0x1b8] sm:$0xff]
        %v2757 = vld [vmem:[%s456 + $0x1c0] sm:$0xff]
        %v2758 = vld [vmem:[%s456 + $0x1c8] sm:$0xff]
        %v2759 = vld [vmem:[%s456 + $0x1d0] sm:$0xff]
        %v2760 = vld [vmem:[%s456 + $0x1d8] sm:$0xff]
        %v2761 = vld [vmem:[%s456 + $0x1e0] sm:$0xff]
        %v2762 = vld [vmem:[%s456 + $0x1e8] sm:$0xff]
        %v2763 = vld [vmem:[%s456 + $0x1f0] sm:$0xff]
        %v2764 = vld [vmem:[%s456 + $0x1f8] sm:$0xff]
        %v2765 = vld [vmem:[%s456 + $0x200] sm:$0xff]
        %v2766 = vld [vmem:[%s456 + $0x208] sm:$0xff]
        %v2767 = vld [vmem:[%s456 + $0x210] sm:$0xff]
        %v2768 = vld [vmem:[%s456 + $0x218] sm:$0xff]
        %v2769 = vld [vmem:[%s456 + $0x220] sm:$0xff]
        %v2770 = vld [vmem:[%s456 + $0x228] sm:$0xff]
        %v2771 = vld [vmem:[%s456 + $0x230] sm:$0xff]
        %v2772 = vld [vmem:[%s456 + $0x238] sm:$0xff]
        %v2773 = vld [vmem:[%s456 + $0x240] sm:$0xff]
        %v2774 = vld [vmem:[%s456 + $0x248] sm:$0xff]
        %v2775 = vld [vmem:[%s456 + $0x250] sm:$0xff]
        %v2776 = vld [vmem:[%s456 + $0x258] sm:$0xff]
        %v2777 = vld [vmem:[%s456 + $0x260] sm:$0xff]
        %v2778 = vld [vmem:[%s456 + $0x268] sm:$0xff]
        %v2779 = vld [vmem:[%s456 + $0x270] sm:$0xff]
        %v2780 = vld [vmem:[%s456 + $0x278] sm:$0xff]
        %v2781 = vld [vmem:[%s456 + $0x280] sm:$0xff]
        %v2782 = vld [vmem:[%s456 + $0x288] sm:$0xff]
        %v2783 = vld [vmem:[%s456 + $0x290] sm:$0xff]
        %v2784 = vld [vmem:[%s456 + $0x298] sm:$0xff]
        %v2785 = vld [vmem:[%s456 + $0x2a0] sm:$0xff]
        %v2786 = vld [vmem:[%s456 + $0x2a8] sm:$0xff]
        %v2787 = vld [vmem:[%s456 + $0x2b0] sm:$0xff]
        %v2788 = vld [vmem:[%s456 + $0x2b8] sm:$0xff]
        %v2789 = vld [vmem:[%s456 + $0x2c0] sm:$0xff]
        %v2790 = vld [vmem:[%s456 + $0x2c8] sm:$0xff]
        %v2791 = vld [vmem:[%s456 + $0x2d0] sm:$0xff]
        %v2792 = vld [vmem:[%s456 + $0x2d8] sm:$0xff]
        %v2793 = vld [vmem:[%s456 + $0x2e0] sm:$0xff]
        %v2794 = vld [vmem:[%s456 + $0x2e8] sm:$0xff]
        %v2795 = vld [vmem:[%s456 + $0x2f0] sm:$0xff]
        %v2796 = vld [vmem:[%s456 + $0x2f8] sm:$0xff]
        %v2797 = vld [vmem:[%s456 + $0x300] sm:$0xff]
        %v2798 = vld [vmem:[%s456 + $0x308] sm:$0xff]
        %v2799 = vld [vmem:[%s456 + $0x310] sm:$0xff]
        %v2800 = vld [vmem:[%s456 + $0x318] sm:$0xff]
        %v2801 = vld [vmem:[%s456 + $0x320] sm:$0xff]
        %v2802 = vld [vmem:[%s456 + $0x328] sm:$0xff]
        %v2803 = vld [vmem:[%s456 + $0x330] sm:$0xff]
        %v2804 = vld [vmem:[%s456 + $0x338] sm:$0xff]
        %v2805 = vld [vmem:[%s456 + $0x340] sm:$0xff]
        %v2806 = vld [vmem:[%s456 + $0x348] sm:$0xff]
        %v2807 = vld [vmem:[%s456 + $0x350] sm:$0xff]
        %v2808 = vld [vmem:[%s456 + $0x358] sm:$0xff]
        %v2809 = vld [vmem:[%s456 + $0x360] sm:$0xff]
        %v2810 = vld [vmem:[%s456 + $0x368] sm:$0xff]
        %v2811 = vld [vmem:[%s456 + $0x370] sm:$0xff]
        %v2812 = vld [vmem:[%s456 + $0x378] sm:$0xff]
        %v2813 = vld [vmem:[%s456 + $0x380] sm:$0xff]
        %v2814 = vld [vmem:[%s456 + $0x388] sm:$0xff]
        %v2815 = vld [vmem:[%s456 + $0x390] sm:$0xff]
        %v2816 = vld [vmem:[%s456 + $0x398] sm:$0xff]
        %v2817 = vld [vmem:[%s456 + $0x3a0] sm:$0xff]
        %v2818 = vld [vmem:[%s456 + $0x3a8] sm:$0xff]
        %v2819 = vld [vmem:[%s456 + $0x3b0] sm:$0xff]
        %v2820 = vld [vmem:[%s456 + $0x3b8] sm:$0xff]
        %v2821 = vld [vmem:[%s456 + $0x3c0] sm:$0xff]
        %v2822 = vld [vmem:[%s456 + $0x3c8] sm:$0xff]
        %v2823 = vld [vmem:[%s456 + $0x3d0] sm:$0xff]
        %v2824 = vld [vmem:[%s456 + $0x3d8] sm:$0xff]
        %v2825 = vld [vmem:[%s456 + $0x3e0] sm:$0xff]
        %v2826 = vld [vmem:[%s456 + $0x3e8] sm:$0xff]
        %v2827 = vld [vmem:[%s456 + $0x3f0] sm:$0xff]
        %v2828 = vld [vmem:[%s456 + $0x3f8] sm:$0xff]
        %v2829 = vmax.f32 %v2701, %v2573
        %v2830 = vmax.f32 %v2702, %v2574
        %v2831 = vmax.f32 %v2703, %v2575
        %v2832 = vmax.f32 %v2704, %v2576
        %v2833 = vmax.f32 %v2705, %v2577
        %v2834 = vmax.f32 %v2706, %v2578
        %v2835 = vmax.f32 %v2707, %v2579
        %v2836 = vmax.f32 %v2708, %v2580
        %v2837 = vmax.f32 %v2709, %v2581
        %v2838 = vmax.f32 %v2710, %v2582
        %v2839 = vmax.f32 %v2711, %v2583
        %v2840 = vmax.f32 %v2712, %v2584
        %v2841 = vmax.f32 %v2713, %v2585
        %v2842 = vmax.f32 %v2714, %v2586
        %v2843 = vmax.f32 %v2715, %v2587
        %v2844 = vmax.f32 %v2716, %v2588
        %v2845 = vmax.f32 %v2717, %v2589
        %v2846 = vmax.f32 %v2718, %v2590
        %v2847 = vmax.f32 %v2719, %v2591
        %v2848 = vmax.f32 %v2720, %v2592
        %v2849 = vmax.f32 %v2721, %v2593
        %v2850 = vmax.f32 %v2722, %v2594
        %v2851 = vmax.f32 %v2723, %v2595
        %v2852 = vmax.f32 %v2724, %v2596
        %v2853 = vmax.f32 %v2725, %v2597
        %v2854 = vmax.f32 %v2726, %v2598
        %v2855 = vmax.f32 %v2727, %v2599
        %v2856 = vmax.f32 %v2728, %v2600
        %v2857 = vmax.f32 %v2729, %v2601
        %v2858 = vmax.f32 %v2730, %v2602
        %v2859 = vmax.f32 %v2731, %v2603
        %v2860 = vmax.f32 %v2732, %v2604
        %v2861 = vmax.f32 %v2733, %v2605
        %v2862 = vmax.f32 %v2734, %v2606
        %v2863 = vmax.f32 %v2735, %v2607
        %v2864 = vmax.f32 %v2736, %v2608
        %v2865 = vmax.f32 %v2737, %v2609
        %v2866 = vmax.f32 %v2738, %v2610
        %v2867 = vmax.f32 %v2739, %v2611
        %v2868 = vmax.f32 %v2740, %v2612
        %v2869 = vmax.f32 %v2741, %v2613
        %v2870 = vmax.f32 %v2742, %v2614
        %v2871 = vmax.f32 %v2743, %v2615
        %v2872 = vmax.f32 %v2744, %v2616
        %v2873 = vmax.f32 %v2745, %v2617
        %v2874 = vmax.f32 %v2746, %v2618
        %v2875 = vmax.f32 %v2747, %v2619
        %v2876 = vmax.f32 %v2748, %v2620
        %v2877 = vmax.f32 %v2749, %v2621
        %v2878 = vmax.f32 %v2750, %v2622
        %v2879 = vmax.f32 %v2751, %v2623
        %v2880 = vmax.f32 %v2752, %v2624
        %v2881 = vmax.f32 %v2753, %v2625
        %v2882 = vmax.f32 %v2754, %v2626
        %v2883 = vmax.f32 %v2755, %v2627
        %v2884 = vmax.f32 %v2756, %v2628
        %v2885 = vmax.f32 %v2757, %v2629
        %v2886 = vmax.f32 %v2758, %v2630
        %v2887 = vmax.f32 %v2759, %v2631
        %v2888 = vmax.f32 %v2760, %v2632
        %v2889 = vmax.f32 %v2761, %v2633
        %v2890 = vmax.f32 %v2762, %v2634
        %v2891 = vmax.f32 %v2763, %v2635
        %v2892 = vmax.f32 %v2764, %v2636
        %v2893 = vmax.f32 %v2765, %v2637
        %v2894 = vmax.f32 %v2766, %v2638
        %v2895 = vmax.f32 %v2767, %v2639
        %v2896 = vmax.f32 %v2768, %v2640
        %v2897 = vmax.f32 %v2769, %v2641
        %v2898 = vmax.f32 %v2770, %v2642
        %v2899 = vmax.f32 %v2771, %v2643
        %v2900 = vmax.f32 %v2772, %v2644
        %v2901 = vmax.f32 %v2773, %v2645
        %v2902 = vmax.f32 %v2774, %v2646
        %v2903 = vmax.f32 %v2775, %v2647
        %v2904 = vmax.f32 %v2776, %v2648
        %v2905 = vmax.f32 %v2777, %v2649
        %v2906 = vmax.f32 %v2778, %v2650
        %v2907 = vmax.f32 %v2779, %v2651
        %v2908 = vmax.f32 %v2780, %v2652
        %v2909 = vmax.f32 %v2781, %v2653
        %v2910 = vmax.f32 %v2782, %v2654
        %v2911 = vmax.f32 %v2783, %v2655
        %v2912 = vmax.f32 %v2784, %v2656
        %v2913 = vmax.f32 %v2785, %v2657
        %v2914 = vmax.f32 %v2786, %v2658
        %v2915 = vmax.f32 %v2787, %v2659
        %v2916 = vmax.f32 %v2788, %v2660
        %v2917 = vmax.f32 %v2789, %v2661
        %v2918 = vmax.f32 %v2790, %v2662
        %v2919 = vmax.f32 %v2791, %v2663
        %v2920 = vmax.f32 %v2792, %v2664
        %v2921 = vmax.f32 %v2793, %v2665
        %v2922 = vmax.f32 %v2794, %v2666
        %v2923 = vmax.f32 %v2795, %v2667
        %v2924 = vmax.f32 %v2796, %v2668
        %v2925 = vmax.f32 %v2797, %v2669
        %v2926 = vmax.f32 %v2798, %v2670
        %v2927 = vmax.f32 %v2799, %v2671
        %v2928 = vmax.f32 %v2800, %v2672
        %v2929 = vmax.f32 %v2801, %v2673
        %v2930 = vmax.f32 %v2802, %v2674
        %v2931 = vmax.f32 %v2803, %v2675
        %v2932 = vmax.f32 %v2804, %v2676
        %v2933 = vmax.f32 %v2805, %v2677
        %v2934 = vmax.f32 %v2806, %v2678
        %v2935 = vmax.f32 %v2807, %v2679
        %v2936 = vmax.f32 %v2808, %v2680
        %v2937 = vmax.f32 %v2809, %v2681
        %v2938 = vmax.f32 %v2810, %v2682
        %v2939 = vmax.f32 %v2811, %v2683
        %v2940 = vmax.f32 %v2812, %v2684
        %v2941 = vmax.f32 %v2813, %v2685
        %v2942 = vmax.f32 %v2814, %v2686
        %v2943 = vmax.f32 %v2815, %v2687
        %v2944 = vmax.f32 %v2816, %v2688
        %v2945 = vmax.f32 %v2817, %v2689
        %v2946 = vmax.f32 %v2818, %v2690
        %v2947 = vmax.f32 %v2819, %v2691
        %v2948 = vmax.f32 %v2820, %v2692
        %v2949 = vmax.f32 %v2821, %v2693
        %v2950 = vmax.f32 %v2822, %v2694
        %v2951 = vmax.f32 %v2823, %v2695
        %v2952 = vmax.f32 %v2824, %v2696
        %v2953 = vmax.f32 %v2825, %v2697
        %v2954 = vmax.f32 %v2826, %v2698
        %v2955 = vmax.f32 %v2827, %v2699
        %v2956 = vmax.f32 %v2828, %v2700
        %2957 = vst [vmem:[%s456] sm:$0xff] %v2829
        %2958 = vst [vmem:[%s456 + $0x8] sm:$0xff] %v2830
        %2959 = vst [vmem:[%s456 + $0x10] sm:$0xff] %v2831
        %2960 = vst [vmem:[%s456 + $0x18] sm:$0xff] %v2832
        %2961 = vst [vmem:[%s456 + $0x20] sm:$0xff] %v2833
        %2962 = vst [vmem:[%s456 + $0x28] sm:$0xff] %v2834
        %2963 = vst [vmem:[%s456 + $0x30] sm:$0xff] %v2835
        %2964 = vst [vmem:[%s456 + $0x38] sm:$0xff] %v2836
        %2965 = vst [vmem:[%s456 + $0x40] sm:$0xff] %v2837
        %2966 = vst [vmem:[%s456 + $0x48] sm:$0xff] %v2838
        %2967 = vst [vmem:[%s456 + $0x50] sm:$0xff] %v2839
        %2968 = vst [vmem:[%s456 + $0x58] sm:$0xff] %v2840
        %2969 = vst [vmem:[%s456 + $0x60] sm:$0xff] %v2841
        %2970 = vst [vmem:[%s456 + $0x68] sm:$0xff] %v2842
        %2971 = vst [vmem:[%s456 + $0x70] sm:$0xff] %v2843
        %2972 = vst [vmem:[%s456 + $0x78] sm:$0xff] %v2844
        %2973 = vst [vmem:[%s456 + $0x80] sm:$0xff] %v2845
        %2974 = vst [vmem:[%s456 + $0x88] sm:$0xff] %v2846
        %2975 = vst [vmem:[%s456 + $0x90] sm:$0xff] %v2847
        %2976 = vst [vmem:[%s456 + $0x98] sm:$0xff] %v2848
        %2977 = vst [vmem:[%s456 + $0xa0] sm:$0xff] %v2849
        %2978 = vst [vmem:[%s456 + $0xa8] sm:$0xff] %v2850
        %2979 = vst [vmem:[%s456 + $0xb0] sm:$0xff] %v2851
        %2980 = vst [vmem:[%s456 + $0xb8] sm:$0xff] %v2852
        %2981 = vst [vmem:[%s456 + $0xc0] sm:$0xff] %v2853
        %2982 = vst [vmem:[%s456 + $0xc8] sm:$0xff] %v2854
        %2983 = vst [vmem:[%s456 + $0xd0] sm:$0xff] %v2855
        %2984 = vst [vmem:[%s456 + $0xd8] sm:$0xff] %v2856
        %2985 = vst [vmem:[%s456 + $0xe0] sm:$0xff] %v2857
        %2986 = vst [vmem:[%s456 + $0xe8] sm:$0xff] %v2858
        %2987 = vst [vmem:[%s456 + $0xf0] sm:$0xff] %v2859
        %2988 = vst [vmem:[%s456 + $0xf8] sm:$0xff] %v2860
        %2989 = vst [vmem:[%s456 + $0x100] sm:$0xff] %v2861
        %2990 = vst [vmem:[%s456 + $0x108] sm:$0xff] %v2862
        %2991 = vst [vmem:[%s456 + $0x110] sm:$0xff] %v2863
        %2992 = vst [vmem:[%s456 + $0x118] sm:$0xff] %v2864
        %2993 = vst [vmem:[%s456 + $0x120] sm:$0xff] %v2865
        %2994 = vst [vmem:[%s456 + $0x128] sm:$0xff] %v2866
        %2995 = vst [vmem:[%s456 + $0x130] sm:$0xff] %v2867
        %2996 = vst [vmem:[%s456 + $0x138] sm:$0xff] %v2868
        %2997 = vst [vmem:[%s456 + $0x140] sm:$0xff] %v2869
        %2998 = vst [vmem:[%s456 + $0x148] sm:$0xff] %v2870
        %2999 = vst [vmem:[%s456 + $0x150] sm:$0xff] %v2871
        %3000 = vst [vmem:[%s456 + $0x158] sm:$0xff] %v2872
        %3001 = vst [vmem:[%s456 + $0x160] sm:$0xff] %v2873
        %3002 = vst [vmem:[%s456 + $0x168] sm:$0xff] %v2874
        %3003 = vst [vmem:[%s456 + $0x170] sm:$0xff] %v2875
        %3004 = vst [vmem:[%s456 + $0x178] sm:$0xff] %v2876
        %3005 = vst [vmem:[%s456 + $0x180] sm:$0xff] %v2877
        %3006 = vst [vmem:[%s456 + $0x188] sm:$0xff] %v2878
        %3007 = vst [vmem:[%s456 + $0x190] sm:$0xff] %v2879
        %3008 = vst [vmem:[%s456 + $0x198] sm:$0xff] %v2880
        %3009 = vst [vmem:[%s456 + $0x1a0] sm:$0xff] %v2881
        %3010 = vst [vmem:[%s456 + $0x1a8] sm:$0xff] %v2882
        %3011 = vst [vmem:[%s456 + $0x1b0] sm:$0xff] %v2883
        %3012 = vst [vmem:[%s456 + $0x1b8] sm:$0xff] %v2884
        %3013 = vst [vmem:[%s456 + $0x1c0] sm:$0xff] %v2885
        %3014 = vst [vmem:[%s456 + $0x1c8] sm:$0xff] %v2886
        %3015 = vst [vmem:[%s456 + $0x1d0] sm:$0xff] %v2887
        %3016 = vst [vmem:[%s456 + $0x1d8] sm:$0xff] %v2888
        %3017 = vst [vmem:[%s456 + $0x1e0] sm:$0xff] %v2889
        %3018 = vst [vmem:[%s456 + $0x1e8] sm:$0xff] %v2890
        %3019 = vst [vmem:[%s456 + $0x1f0] sm:$0xff] %v2891
        %3020 = vst [vmem:[%s456 + $0x1f8] sm:$0xff] %v2892
        %3021 = vst [vmem:[%s456 + $0x200] sm:$0xff] %v2893
        %3022 = vst [vmem:[%s456 + $0x208] sm:$0xff] %v2894
        %3023 = vst [vmem:[%s456 + $0x210] sm:$0xff] %v2895
        %3024 = vst [vmem:[%s456 + $0x218] sm:$0xff] %v2896
        %3025 = vst [vmem:[%s456 + $0x220] sm:$0xff] %v2897
        %3026 = vst [vmem:[%s456 + $0x228] sm:$0xff] %v2898
        %3027 = vst [vmem:[%s456 + $0x230] sm:$0xff] %v2899
        %3028 = vst [vmem:[%s456 + $0x238] sm:$0xff] %v2900
        %3029 = vst [vmem:[%s456 + $0x240] sm:$0xff] %v2901
        %3030 = vst [vmem:[%s456 + $0x248] sm:$0xff] %v2902
        %3031 = vst [vmem:[%s456 + $0x250] sm:$0xff] %v2903
        %3032 = vst [vmem:[%s456 + $0x258] sm:$0xff] %v2904
        %3033 = vst [vmem:[%s456 + $0x260] sm:$0xff] %v2905
        %3034 = vst [vmem:[%s456 + $0x268] sm:$0xff] %v2906
        %3035 = vst [vmem:[%s456 + $0x270] sm:$0xff] %v2907
        %3036 = vst [vmem:[%s456 + $0x278] sm:$0xff] %v2908
        %3037 = vst [vmem:[%s456 + $0x280] sm:$0xff] %v2909
        %3038 = vst [vmem:[%s456 + $0x288] sm:$0xff] %v2910
        %3039 = vst [vmem:[%s456 + $0x290] sm:$0xff] %v2911
        %3040 = vst [vmem:[%s456 + $0x298] sm:$0xff] %v2912
        %3041 = vst [vmem:[%s456 + $0x2a0] sm:$0xff] %v2913
        %3042 = vst [vmem:[%s456 + $0x2a8] sm:$0xff] %v2914
        %3043 = vst [vmem:[%s456 + $0x2b0] sm:$0xff] %v2915
        %3044 = vst [vmem:[%s456 + $0x2b8] sm:$0xff] %v2916
        %3045 = vst [vmem:[%s456 + $0x2c0] sm:$0xff] %v2917
        %3046 = vst [vmem:[%s456 + $0x2c8] sm:$0xff] %v2918
        %3047 = vst [vmem:[%s456 + $0x2d0] sm:$0xff] %v2919
        %3048 = vst [vmem:[%s456 + $0x2d8] sm:$0xff] %v2920
        %3049 = vst [vmem:[%s456 + $0x2e0] sm:$0xff] %v2921
        %3050 = vst [vmem:[%s456 + $0x2e8] sm:$0xff] %v2922
        %3051 = vst [vmem:[%s456 + $0x2f0] sm:$0xff] %v2923
        %3052 = vst [vmem:[%s456 + $0x2f8] sm:$0xff] %v2924
        %3053 = vst [vmem:[%s456 + $0x300] sm:$0xff] %v2925
        %3054 = vst [vmem:[%s456 + $0x308] sm:$0xff] %v2926
        %3055 = vst [vmem:[%s456 + $0x310] sm:$0xff] %v2927
        %3056 = vst [vmem:[%s456 + $0x318] sm:$0xff] %v2928
        %3057 = vst [vmem:[%s456 + $0x320] sm:$0xff] %v2929
        %3058 = vst [vmem:[%s456 + $0x328] sm:$0xff] %v2930
        %3059 = vst [vmem:[%s456 + $0x330] sm:$0xff] %v2931
        %3060 = vst [vmem:[%s456 + $0x338] sm:$0xff] %v2932
        %3061 = vst [vmem:[%s456 + $0x340] sm:$0xff] %v2933
        %3062 = vst [vmem:[%s456 + $0x348] sm:$0xff] %v2934
        %3063 = vst [vmem:[%s456 + $0x350] sm:$0xff] %v2935
        %3064 = vst [vmem:[%s456 + $0x358] sm:$0xff] %v2936
        %3065 = vst [vmem:[%s456 + $0x360] sm:$0xff] %v2937
        %3066 = vst [vmem:[%s456 + $0x368] sm:$0xff] %v2938
        %3067 = vst [vmem:[%s456 + $0x370] sm:$0xff] %v2939
        %3068 = vst [vmem:[%s456 + $0x378] sm:$0xff] %v2940
        %3069 = vst [vmem:[%s456 + $0x380] sm:$0xff] %v2941
        %3070 = vst [vmem:[%s456 + $0x388] sm:$0xff] %v2942
        %3071 = vst [vmem:[%s456 + $0x390] sm:$0xff] %v2943
        %3072 = vst [vmem:[%s456 + $0x398] sm:$0xff] %v2944
        %3073 = vst [vmem:[%s456 + $0x3a0] sm:$0xff] %v2945
        %3074 = vst [vmem:[%s456 + $0x3a8] sm:$0xff] %v2946
        %3075 = vst [vmem:[%s456 + $0x3b0] sm:$0xff] %v2947
        %3076 = vst [vmem:[%s456 + $0x3b8] sm:$0xff] %v2948
        %3077 = vst [vmem:[%s456 + $0x3c0] sm:$0xff] %v2949
        %3078 = vst [vmem:[%s456 + $0x3c8] sm:$0xff] %v2950
        %3079 = vst [vmem:[%s456 + $0x3d0] sm:$0xff] %v2951
        %3080 = vst [vmem:[%s456 + $0x3d8] sm:$0xff] %v2952
        %3081 = vst [vmem:[%s456 + $0x3e0] sm:$0xff] %v2953
        %3082 = vst [vmem:[%s456 + $0x3e8] sm:$0xff] %v2954
        %3083 = vst [vmem:[%s456 + $0x3f0] sm:$0xff] %v2955
        %3084 = vst [vmem:[%s456 + $0x3f8] sm:$0xff] %v2956
      $region72: #{pointnet_feature.1} parent=59 // pred_fallthru
        _
      %s3085 = sadd.s32 %s29, %s30
      %p3086 = scmp.lt.s32.totalorder %s28, 1
      %s3087 = scalar_select %p3086, %s28, 1
      %p3088 = scmp.lt.s32.totalorder %s3085, 0
      %s3089 = scalar_select %p3088, %s3085, 0
      %s3090 = smul.addr %s3087, 8
      %s3091 = sadd.s32 %s3089, %s3090
      %s3092 = smul.addr %s3091, 8
      %s3093 = scalar_lea.vmem %s10, %s3092
      %p3094 = scmp.lt.s32.totalorder %s28, 1
      %s3095 = scalar_select %p3094, %s28, 1
      %p3096 = scmp.lt.s32.totalorder %s29, 0
      %s3097 = scalar_select %p3096, %s29, 0
      %s3098 = smul.addr %s3097, 128
      %s3099 = smul.addr %s3095, 128
      %s3100 = sadd.s32 %s3098, %s3099
      %s3101 = smul.addr %s3100, 8
      %s3102 = scalar_lea.vmem %s11, %s3101
      // Predicated region
      $region73: #{pointnet_feature.1} parent=59 // pred_check
        %p3103 = pneg %p283
      $region74: #{pointnet_feature.1} parent=59 // pred_check_branch
        %3105 = sbr.rel (%p3103) target = $region76
      $region75: #{pointnet_feature.1} parent=59 // pred_region
        %s3106 = sadd.s32 %s29, %s30
      $region76: #{pointnet_feature.1} parent=59 // pred_fallthru
        _
      // Predicated region
      $region77: #{pointnet_feature.1} parent=59 // pred_check
        %p3107 = pneg %p311
      $region78: #{pointnet_feature.1} parent=59 // pred_check_branch
        %3109 = sbr.rel (%p3107) target = $region80
      $region79: #{pointnet_feature.1} parent=59 // pred_region
        _
      $region80: #{pointnet_feature.1} parent=59 // pred_fallthru
        _
    $region60: #{pointnet_feature.1} parent=5 // pred_fallthru
      _
    %p3110 = scmp.le.s32.totalorder 2, %s18
    // Predicated region
    $region81: #{pointnet_feature.1} parent=5 // pred_check
      %p3111 = pneg %p3110
    $region82: #{pointnet_feature.1} parent=5 // pred_check_branch
      %3113 = sbr.rel (%p3111) target = $region84
    $region83: #{pointnet_feature.1} parent=5 // pred_region
      %s3114 = ssub.s32 %s18, 2
      // Predicated region
      $region85: #{pointnet_feature.1} parent=83 // pred_check
        %p3115 = pneg %p289
      $region86: #{pointnet_feature.1} parent=83 // pred_check_branch
        %3117 = sbr.rel (%p3115) target = $region88
      $region87: #{pointnet_feature.1} parent=83 // pred_region
        %s3118 = sadd.s32 %s32, %s33
        %p3119 = scmp.lt.s32.totalorder %s31, 1
        %s3120 = scalar_select %p3119, %s31, 1
        %p3121 = scmp.lt.s32.totalorder %s3118, 0
        %s3122 = scalar_select %p3121, %s3118, 0
        %s3123 = smul.addr %s3120, 8
        %s3124 = sadd.s32 %s3122, %s3123
        %s3125 = smul.addr %s3124, 8
        %s3126 = scalar_lea.vmem %s10, %s3125
      $region88: #{pointnet_feature.1} parent=83 // pred_fallthru
        _
      // Predicated region
      $region89: #{pointnet_feature.1} parent=83 // pred_check
        %p3127 = pneg %p317
      $region90: #{pointnet_feature.1} parent=83 // pred_check_branch
        %3129 = sbr.rel (%p3127) target = $region92
      $region91: #{pointnet_feature.1} parent=83 // pred_region
        %p3130 = scmp.lt.s32.totalorder %s31, 1
        %s3131 = scalar_select %p3130, %s31, 1
        %p3132 = scmp.lt.s32.totalorder %s32, 0
        %s3133 = scalar_select %p3132, %s32, 0
        %s3134 = smul.addr %s3133, 128
        %s3135 = smul.addr %s3131, 128
        %s3136 = sadd.s32 %s3134, %s3135
        %s3137 = smul.addr %s3136, 8
        %s3138 = scalar_lea.vmem %s11, %s3137
      $region92: #{pointnet_feature.1} parent=83 // pred_fallthru
        _
    $region84: #{pointnet_feature.1} parent=5 // pred_fallthru
      _
  $region6: #{pointnet_feature.1} parent=0 // loop_footer
    %s22 = sadd.s32 1, %s18
  $region7: #{pointnet_feature.1} parent=0 // loop_footer_branch
    %17 = sbr.rel target = $region3
  $region8: #{pointnet_feature.1} parent=0 // loop_exit
    _

</llo_original>
